<compile_context>
chip_gen: v6e
topology: v6e:2x2x1
jax: 0.10.0
libtpu: 0.0.40
codegen_flags: <defaults>
</compile_context>

<pallas_src>
import functools

import numpy as np

import jax
import jax.numpy as jnp
from jax.experimental import pallas as pl
from jax.experimental.pallas import tpu as pltpu


# ----------------------------------------------------------------------------
# Fused kernel: 3 GRU layers + Linear head, one invocation.
# Gate order follows PyTorch: [r, z, n], each gate in its own 128-lane block.
# ----------------------------------------------------------------------------
def gru_model_kernel(x_ref, w_ref, b_ref, lin_ref, out_ref, *,
                     T, B, W, GPAD, num_layers):
    x2d = x_ref[...]                                    # (T*B, W)

    for layer in range(num_layers):
        w_ih = w_ref[2 * layer]                         # (W, 3*GPAD)
        w_hh = w_ref[2 * layer + 1]                     # (W, 3*GPAD)
        b_ih = b_ref[2 * layer]                         # (1, 3*GPAD)
        b_hh = b_ref[2 * layer + 1]                     # (1, 3*GPAD)

        # Input-side pre-activations for ALL timesteps & gates in ONE matmul.
        gi = jnp.dot(x2d, w_ih, preferred_element_type=jnp.float32) + b_ih

        h = jnp.zeros((B, W), jnp.float32)              # padded lanes stay 0
        hs = []
        # Sequential recurrence, fully unrolled (static indices only).
        for t in range(T):
            gi_t = gi[t * B:(t + 1) * B, :]             # (B, 3*GPAD)
            # ONE fused recurrent matmul for all three gates.
            gh = jnp.dot(h, w_hh, preferred_element_type=jnp.float32) + b_hh
            # ONE sigmoid over the contiguous [r|z] 256-lane block.
            rz = jax.nn.sigmoid(gi_t[:, :2 * GPAD] + gh[:, :2 * GPAD])
            r = rz[:, :GPAD]
            z = rz[:, GPAD:2 * GPAD]
            # b_hn stays inside r*(h@W_hn + b_hn), matching PyTorch.
            n = jnp.tanh(gi_t[:, 2 * GPAD:] + r * gh[:, 2 * GPAD:])
            h = (1.0 - z) * n + z * h
            hs.append(h)

        # Layer activations assembled once, in vregs -> next layer's input.
        x2d = jnp.concatenate(hs, axis=0)               # (T*B, W)

    # Final Linear(H -> O): lin_all packs [weight ; bias] row-wise.
    lin_w = lin_ref[0:W, :]                             # (W, OPAD)
    lin_b = lin_ref[W:W + 1, :]                         # (1, OPAD)
    y = jnp.dot(x2d, lin_w, preferred_element_type=jnp.float32) + lin_b
    out_ref[...] = y.astype(out_ref.dtype)              # lane-dense store


# ----------------------------------------------------------------------------
# Wrapper: one grid-less pallas_call, everything resident in VMEM.
# ----------------------------------------------------------------------------
@functools.partial(jax.jit, static_argnames=("output_size",))
def gru_model_forward(x, w_all, b_all, lin_all, *, output_size):
    T, B, Din = x.shape
    num_layers = w_all.shape[0] // 2
    W = w_all.shape[1]
    GPAD = w_all.shape[2] // 3
    OPAD = lin_all.shape[1]
    assert Din <= W

    x2d = x.reshape(T * B, Din).astype(jnp.float32)
    x_pad = jnp.pad(x2d, ((0, 0), (0, W - Din)))        # zero lane padding

    kernel = functools.partial(gru_model_kernel, T=T, B=B, W=W, GPAD=GPAD,
                               num_layers=num_layers)
    vmem_spec = pl.BlockSpec(memory_space=pltpu.MemorySpace.VMEM)

    y = pl.pallas_call(
        kernel,
        out_shape=jax.ShapeDtypeStruct((T * B, OPAD), jnp.float32),
        in_specs=[vmem_spec] * 4,
        out_specs=vmem_spec,
    )(x_pad, w_all, b_all, lin_all)

    return y[:, :output_size].reshape(T, B, output_size)


# ----------------------------------------------------------------------------
# Parameter init (PyTorch layout) and one-time packing to the kernel layout.
# ----------------------------------------------------------------------------
def init_params(key, input_size, hidden_size, output_size, layers_size):
    bound = 1.0 / jnp.sqrt(jnp.float32(hidden_size))
    params = {"gru": []}
    for layer in range(layers_size):
        din = input_size if layer == 0 else hidden_size
        key, k1, k2, k3, k4 = jax.random.split(key, 5)
        params["gru"].append({
            "w_ih": jax.random.uniform(k1, (3 * hidden_size, din),
                                       jnp.float32, -bound, bound),
            "w_hh": jax.random.uniform(k2, (3 * hidden_size, hidden_size),
                                       jnp.float32, -bound, bound),
            "b_ih": jax.random.uniform(k3, (3 * hidden_size,),
                                       jnp.float32, -bound, bound),
            "b_hh": jax.random.uniform(k4, (3 * hidden_size,),
                                       jnp.float32, -bound, bound),
        })
    key, k1, k2 = jax.random.split(key, 3)
    params["lin_w"] = jax.random.uniform(k1, (output_size, hidden_size),
                                         jnp.float32, -bound, bound)
    params["lin_b"] = jax.random.uniform(k2, (output_size,),
                                         jnp.float32, -bound, bound)
    return params


def pack_params(params, *, gpad=128, width=128, opad=128):
    """PyTorch layout -> lane-padded, gate-blocked kernel layout (done once).

    w_all[2l]   : W_ih^T of layer l, gate g at lanes [g*gpad, g*gpad+H)
    w_all[2l+1] : W_hh^T of layer l, same gate blocking
    b_all       : matching biases; all padding is zero so padded lanes of the
                  recurrence stay exactly 0.
    lin_all     : rows [0,W) = lin_w^T (lane-padded), row W = lin_b.
    """
    L = len(params["gru"])
    H = params["gru"][0]["w_hh"].shape[1]
    assert H <= gpad and H <= width
    w_all = np.zeros((2 * L, width, 3 * gpad), np.float32)
    b_all = np.zeros((2 * L, 1, 3 * gpad), np.float32)
    for layer, lp in enumerate(params["gru"]):
        din = lp["w_ih"].shape[1]
        assert din <= width
        wih = np.asarray(lp["w_ih"]).reshape(3, H, din)
        whh = np.asarray(lp["w_hh"]).reshape(3, H, H)
        bih = np.asarray(lp["b_ih"]).reshape(3, H)
        bhh = np.asarray(lp["b_hh"]).reshape(3, H)
        for g in range(3):
            lo = g * gpad
            w_all[2 * layer, :din, lo:lo + H] = wih[g].T
            w_all[2 * layer + 1, :H, lo:lo + H] = whh[g].T
            b_all[2 * layer, 0, lo:lo + H] = bih[g]
            b_all[2 * layer + 1, 0, lo:lo + H] = bhh[g]
    O = params["lin_w"].shape[0]
    assert O <= opad
    lin_all = np.zeros((width + 1, opad), np.float32)
    lin_all[:H, :O] = np.asarray(params["lin_w"]).T
    lin_all[width, :O] = np.asarray(params["lin_b"])
    return {"w_all": jnp.asarray(w_all),
            "b_all": jnp.asarray(b_all),
            "lin_all": jnp.asarray(lin_all)}


# ----------------------------------------------------------------------------
# Pure-JAX reference (lax.scan, PyTorch-layout params) for validation.
# ----------------------------------------------------------------------------
def gru_model_reference(x, params, hidden_size):
    h_seq = x
    for lp in params["gru"]:
        B = h_seq.shape[1]
        H = hidden_size

        def step(h, x_t, lp=lp, H=H):
            gi = x_t @ lp["w_ih"].T + lp["b_ih"]
            gh = h @ lp["w_hh"].T + lp["b_hh"]
            i_r, i_z, i_n = gi[:, :H], gi[:, H:2 * H], gi[:, 2 * H:]
            h_r, h_z, h_n = gh[:, :H], gh[:, H:2 * H], gh[:, 2 * H:]
            r = jax.nn.sigmoid(i_r + h_r)
            z = jax.nn.sigmoid(i_z + h_z)
            n = jnp.tanh(i_n + r * h_n)
            h_new = (1.0 - z) * n + z * h
            return h_new, h_new

        h0 = jnp.zeros((B, H), jnp.float32)
        _, h_seq = jax.lax.scan(step, h0, h_seq)
    return h_seq @ params["lin_w"].T + params["lin_b"]


if __name__ == "__main__":
    hidden_size = 20
    input_size = 10
    output_size = 1
    layers_size = 3
    seq_len = 8
    batch = 2

    key = jax.random.PRNGKey(0)
    key, pkey, xkey = jax.random.split(key, 3)
    params = init_params(pkey, input_size, hidden_size, output_size, layers_size)
    packed = pack_params(params)
    x = jax.random.normal(xkey, (seq_len, batch, input_size), jnp.float32)

    y = gru_model_forward(x, packed["w_all"], packed["b_all"],
                          packed["lin_all"], output_size=output_size)
    y = jax.block_until_ready(y)

    assert y.shape == (seq_len, batch, output_size), y.shape

    y_ref = gru_model_reference(x, params, hidden_size)
    assert jnp.allclose(y, y_ref, atol=1e-5, rtol=1e-5), (
        float(jnp.max(jnp.abs(y - y_ref))))

    print("KERNEL_OK")
</pallas_src>

<mosaic_0001>
module attributes {stable_mosaic.version = 11 : i64} {
  func.func @gru_model_kernel(%arg0: memref<16x128xf32, #tpu.memory_space<vmem>>, %arg1: memref<6x128x384xf32, #tpu.memory_space<vmem>>, %arg2: memref<6x1x384xf32, #tpu.memory_space<vmem>>, %arg3: memref<129x128xf32, #tpu.memory_space<vmem>>, %arg4: memref<16x128xf32, #tpu.memory_space<vmem>>) attributes {dimension_semantics = [], scalar_prefetch = 0 : i64, scratch_operands = 0 : i64, tpu.core_type = #tpu.core_type<tc>} {
    %c0 = arith.constant 0 : index
    %c0_0 = arith.constant 0 : index
    %0 = vector.load %arg0[%c0, %c0_0] : memref<16x128xf32, #tpu.memory_space<vmem>>, vector<16x128xf32>
    %c0_1 = arith.constant 0 : index
    %c0_2 = arith.constant 0 : index
    %c0_3 = arith.constant 0 : index
    %1 = vector.load %arg1[%c0_1, %c0_2, %c0_3] : memref<6x128x384xf32, #tpu.memory_space<vmem>>, vector<1x128x384xf32>
    %2 = vector.shape_cast %1 : vector<1x128x384xf32> to vector<128x384xf32>
    %c1 = arith.constant 1 : index
    %c0_4 = arith.constant 0 : index
    %c0_5 = arith.constant 0 : index
    %3 = vector.load %arg1[%c1, %c0_4, %c0_5] : memref<6x128x384xf32, #tpu.memory_space<vmem>>, vector<1x128x384xf32>
    %4 = vector.shape_cast %3 : vector<1x128x384xf32> to vector<128x384xf32>
    %c0_6 = arith.constant 0 : index
    %c0_7 = arith.constant 0 : index
    %c0_8 = arith.constant 0 : index
    %5 = vector.load %arg2[%c0_6, %c0_7, %c0_8] : memref<6x1x384xf32, #tpu.memory_space<vmem>>, vector<1x1x384xf32>
    %6 = vector.shape_cast %5 : vector<1x1x384xf32> to vector<1x384xf32>
    %c1_9 = arith.constant 1 : index
    %c0_10 = arith.constant 0 : index
    %c0_11 = arith.constant 0 : index
    %7 = vector.load %arg2[%c1_9, %c0_10, %c0_11] : memref<6x1x384xf32, #tpu.memory_space<vmem>>, vector<1x1x384xf32>
    %8 = vector.shape_cast %7 : vector<1x1x384xf32> to vector<1x384xf32>
    %cst = arith.constant dense<0.000000e+00> : vector<16x384xf32>
    %9 = tpu.matmul %0, %2, %cst {dimension_numbers = #tpu.dot_dimension_numbers<[1], [0], [0], [1], [0, 0, 1, 1], [], []>} : vector<16x128xf32>, vector<128x384xf32>, vector<16x384xf32> -> vector<16x384xf32>
    %10 = vector.broadcast %6 : vector<1x384xf32> to vector<16x384xf32>
    %11 = arith.addf %9, %10 : vector<16x384xf32>
    %cst_12 = arith.constant 0.000000e+00 : f32
    %12 = vector.broadcast %cst_12 : f32 to vector<2x128xf32>
    %13 = vector.extract_strided_slice %11 {offsets = [0, 0], sizes = [2, 384], strides = [1, 1]} : vector<16x384xf32> to vector<2x384xf32>
    %cst_13 = arith.constant dense<0.000000e+00> : vector<2x384xf32>
    %14 = tpu.matmul %12, %4, %cst_13 {dimension_numbers = #tpu.dot_dimension_numbers<[1], [0], [0], [1], [0, 0, 1, 1], [], []>} : vector<2x128xf32>, vector<128x384xf32>, vector<2x384xf32> -> vector<2x384xf32>
    %15 = vector.broadcast %8 : vector<1x384xf32> to vector<2x384xf32>
    %16 = arith.addf %14, %15 : vector<2x384xf32>
    %17 = vector.extract_strided_slice %13 {offsets = [0, 0], sizes = [2, 256], strides = [1, 1]} : vector<2x384xf32> to vector<2x256xf32>
    %18 = vector.extract_strided_slice %16 {offsets = [0, 0], sizes = [2, 256], strides = [1, 1]} : vector<2x384xf32> to vector<2x256xf32>
    %19 = arith.addf %17, %18 : vector<2x256xf32>
    %20 = arith.negf %19 : vector<2x256xf32>
    %21 = math.exp %20 : vector<2x256xf32>
    %cst_14 = arith.constant 1.000000e+00 : f32
    %22 = vector.broadcast %cst_14 : f32 to vector<2x256xf32>
    %23 = arith.addf %22, %21 : vector<2x256xf32>
    %24 = arith.divf %22, %23 : vector<2x256xf32>
    %25 = vector.extract_strided_slice %24 {offsets = [0, 0], sizes = [2, 128], strides = [1, 1]} : vector<2x256xf32> to vector<2x128xf32>
    %26 = vector.extract_strided_slice %24 {offsets = [0, 128], sizes = [2, 128], strides = [1, 1]} : vector<2x256xf32> to vector<2x128xf32>
    %27 = vector.extract_strided_slice %13 {offsets = [0, 256], sizes = [2, 128], strides = [1, 1]} : vector<2x384xf32> to vector<2x128xf32>
    %28 = vector.extract_strided_slice %16 {offsets = [0, 256], sizes = [2, 128], strides = [1, 1]} : vector<2x384xf32> to vector<2x128xf32>
    %29 = arith.mulf %25, %28 : vector<2x128xf32>
    %30 = arith.addf %27, %29 : vector<2x128xf32>
    %31 = math.tanh %30 : vector<2x128xf32>
    %cst_15 = arith.constant 1.000000e+00 : f32
    %32 = vector.broadcast %cst_15 : f32 to vector<2x128xf32>
    %33 = arith.subf %32, %26 : vector<2x128xf32>
    %34 = arith.mulf %33, %31 : vector<2x128xf32>
    %35 = arith.mulf %26, %12 : vector<2x128xf32>
    %36 = arith.addf %34, %35 : vector<2x128xf32>
    %37 = vector.extract_strided_slice %11 {offsets = [2, 0], sizes = [2, 384], strides = [1, 1]} : vector<16x384xf32> to vector<2x384xf32>
    %cst_16 = arith.constant dense<0.000000e+00> : vector<2x384xf32>
    %38 = tpu.matmul %36, %4, %cst_16 {dimension_numbers = #tpu.dot_dimension_numbers<[1], [0], [0], [1], [0, 0, 1, 1], [], []>} : vector<2x128xf32>, vector<128x384xf32>, vector<2x384xf32> -> vector<2x384xf32>
    %39 = vector.broadcast %8 : vector<1x384xf32> to vector<2x384xf32>
    %40 = arith.addf %38, %39 : vector<2x384xf32>
    %41 = vector.extract_strided_slice %37 {offsets = [0, 0], sizes = [2, 256], strides = [1, 1]} : vector<2x384xf32> to vector<2x256xf32>
    %42 = vector.extract_strided_slice %40 {offsets = [0, 0], sizes = [2, 256], strides = [1, 1]} : vector<2x384xf32> to vector<2x256xf32>
    %43 = arith.addf %41, %42 : vector<2x256xf32>
    %44 = arith.negf %43 : vector<2x256xf32>
    %45 = math.exp %44 : vector<2x256xf32>
    %cst_17 = arith.constant 1.000000e+00 : f32
    %46 = vector.broadcast %cst_17 : f32 to vector<2x256xf32>
    %47 = arith.addf %46, %45 : vector<2x256xf32>
    %48 = arith.divf %46, %47 : vector<2x256xf32>
    %49 = vector.extract_strided_slice %48 {offsets = [0, 0], sizes = [2, 128], strides = [1, 1]} : vector<2x256xf32> to vector<2x128xf32>
    %50 = vector.extract_strided_slice %48 {offsets = [0, 128], sizes = [2, 128], strides = [1, 1]} : vector<2x256xf32> to vector<2x128xf32>
    %51 = vector.extract_strided_slice %37 {offsets = [0, 256], sizes = [2, 128], strides = [1, 1]} : vector<2x384xf32> to vector<2x128xf32>
    %52 = vector.extract_strided_slice %40 {offsets = [0, 256], sizes = [2, 128], strides = [1, 1]} : vector<2x384xf32> to vector<2x128xf32>
    %53 = arith.mulf %49, %52 : vector<2x128xf32>
    %54 = arith.addf %51, %53 : vector<2x128xf32>
    %55 = math.tanh %54 : vector<2x128xf32>
    %cst_18 = arith.constant 1.000000e+00 : f32
    %56 = vector.broadcast %cst_18 : f32 to vector<2x128xf32>
    %57 = arith.subf %56, %50 : vector<2x128xf32>
    %58 = arith.mulf %57, %55 : vector<2x128xf32>
    %59 = arith.mulf %50, %36 : vector<2x128xf32>
    %60 = arith.addf %58, %59 : vector<2x128xf32>
    %61 = vector.extract_strided_slice %11 {offsets = [4, 0], sizes = [2, 384], strides = [1, 1]} : vector<16x384xf32> to vector<2x384xf32>
    %cst_19 = arith.constant dense<0.000000e+00> : vector<2x384xf32>
    %62 = tpu.matmul %60, %4, %cst_19 {dimension_numbers = #tpu.dot_dimension_numbers<[1], [0], [0], [1], [0, 0, 1, 1], [], []>} : vector<2x128xf32>, vector<128x384xf32>, vector<2x384xf32> -> vector<2x384xf32>
    %63 = vector.broadcast %8 : vector<1x384xf32> to vector<2x384xf32>
    %64 = arith.addf %62, %63 : vector<2x384xf32>
    %65 = vector.extract_strided_slice %61 {offsets = [0, 0], sizes = [2, 256], strides = [1, 1]} : vector<2x384xf32> to vector<2x256xf32>
    %66 = vector.extract_strided_slice %64 {offsets = [0, 0], sizes = [2, 256], strides = [1, 1]} : vector<2x384xf32> to vector<2x256xf32>
    %67 = arith.addf %65, %66 : vector<2x256xf32>
    %68 = arith.negf %67 : vector<2x256xf32>
    %69 = math.exp %68 : vector<2x256xf32>
    %cst_20 = arith.constant 1.000000e+00 : f32
    %70 = vector.broadcast %cst_20 : f32 to vector<2x256xf32>
    %71 = arith.addf %70, %69 : vector<2x256xf32>
    %72 = arith.divf %70, %71 : vector<2x256xf32>
    %73 = vector.extract_strided_slice %72 {offsets = [0, 0], sizes = [2, 128], strides = [1, 1]} : vector<2x256xf32> to vector<2x128xf32>
    %74 = vector.extract_strided_slice %72 {offsets = [0, 128], sizes = [2, 128], strides = [1, 1]} : vector<2x256xf32> to vector<2x128xf32>
    %75 = vector.extract_strided_slice %61 {offsets = [0, 256], sizes = [2, 128], strides = [1, 1]} : vector<2x384xf32> to vector<2x128xf32>
    %76 = vector.extract_strided_slice %64 {offsets = [0, 256], sizes = [2, 128], strides = [1, 1]} : vector<2x384xf32> to vector<2x128xf32>
    %77 = arith.mulf %73, %76 : vector<2x128xf32>
    %78 = arith.addf %75, %77 : vector<2x128xf32>
    %79 = math.tanh %78 : vector<2x128xf32>
    %cst_21 = arith.constant 1.000000e+00 : f32
    %80 = vector.broadcast %cst_21 : f32 to vector<2x128xf32>
    %81 = arith.subf %80, %74 : vector<2x128xf32>
    %82 = arith.mulf %81, %79 : vector<2x128xf32>
    %83 = arith.mulf %74, %60 : vector<2x128xf32>
    %84 = arith.addf %82, %83 : vector<2x128xf32>
    %85 = vector.extract_strided_slice %11 {offsets = [6, 0], sizes = [2, 384], strides = [1, 1]} : vector<16x384xf32> to vector<2x384xf32>
    %cst_22 = arith.constant dense<0.000000e+00> : vector<2x384xf32>
    %86 = tpu.matmul %84, %4, %cst_22 {dimension_numbers = #tpu.dot_dimension_numbers<[1], [0], [0], [1], [0, 0, 1, 1], [], []>} : vector<2x128xf32>, vector<128x384xf32>, vector<2x384xf32> -> vector<2x384xf32>
    %87 = vector.broadcast %8 : vector<1x384xf32> to vector<2x384xf32>
    %88 = arith.addf %86, %87 : vector<2x384xf32>
    %89 = vector.extract_strided_slice %85 {offsets = [0, 0], sizes = [2, 256], strides = [1, 1]} : vector<2x384xf32> to vector<2x256xf32>
    %90 = vector.extract_strided_slice %88 {offsets = [0, 0], sizes = [2, 256], strides = [1, 1]} : vector<2x384xf32> to vector<2x256xf32>
    %91 = arith.addf %89, %90 : vector<2x256xf32>
    %92 = arith.negf %91 : vector<2x256xf32>
    %93 = math.exp %92 : vector<2x256xf32>
    %cst_23 = arith.constant 1.000000e+00 : f32
    %94 = vector.broadcast %cst_23 : f32 to vector<2x256xf32>
    %95 = arith.addf %94, %93 : vector<2x256xf32>
    %96 = arith.divf %94, %95 : vector<2x256xf32>
    %97 = vector.extract_strided_slice %96 {offsets = [0, 0], sizes = [2, 128], strides = [1, 1]} : vector<2x256xf32> to vector<2x128xf32>
    %98 = vector.extract_strided_slice %96 {offsets = [0, 128], sizes = [2, 128], strides = [1, 1]} : vector<2x256xf32> to vector<2x128xf32>
    %99 = vector.extract_strided_slice %85 {offsets = [0, 256], sizes = [2, 128], strides = [1, 1]} : vector<2x384xf32> to vector<2x128xf32>
    %100 = vector.extract_strided_slice %88 {offsets = [0, 256], sizes = [2, 128], strides = [1, 1]} : vector<2x384xf32> to vector<2x128xf32>
    %101 = arith.mulf %97, %100 : vector<2x128xf32>
    %102 = arith.addf %99, %101 : vector<2x128xf32>
    %103 = math.tanh %102 : vector<2x128xf32>
    %cst_24 = arith.constant 1.000000e+00 : f32
    %104 = vector.broadcast %cst_24 : f32 to vector<2x128xf32>
    %105 = arith.subf %104, %98 : vector<2x128xf32>
    %106 = arith.mulf %105, %103 : vector<2x128xf32>
    %107 = arith.mulf %98, %84 : vector<2x128xf32>
    %108 = arith.addf %106, %107 : vector<2x128xf32>
    %109 = vector.extract_strided_slice %11 {offsets = [8, 0], sizes = [2, 384], strides = [1, 1]} : vector<16x384xf32> to vector<2x384xf32>
    %cst_25 = arith.constant dense<0.000000e+00> : vector<2x384xf32>
    %110 = tpu.matmul %108, %4, %cst_25 {dimension_numbers = #tpu.dot_dimension_numbers<[1], [0], [0], [1], [0, 0, 1, 1], [], []>} : vector<2x128xf32>, vector<128x384xf32>, vector<2x384xf32> -> vector<2x384xf32>
    %111 = vector.broadcast %8 : vector<1x384xf32> to vector<2x384xf32>
    %112 = arith.addf %110, %111 : vector<2x384xf32>
    %113 = vector.extract_strided_slice %109 {offsets = [0, 0], sizes = [2, 256], strides = [1, 1]} : vector<2x384xf32> to vector<2x256xf32>
    %114 = vector.extract_strided_slice %112 {offsets = [0, 0], sizes = [2, 256], strides = [1, 1]} : vector<2x384xf32> to vector<2x256xf32>
    %115 = arith.addf %113, %114 : vector<2x256xf32>
    %116 = arith.negf %115 : vector<2x256xf32>
    %117 = math.exp %116 : vector<2x256xf32>
    %cst_26 = arith.constant 1.000000e+00 : f32
    %118 = vector.broadcast %cst_26 : f32 to vector<2x256xf32>
    %119 = arith.addf %118, %117 : vector<2x256xf32>
    %120 = arith.divf %118, %119 : vector<2x256xf32>
    %121 = vector.extract_strided_slice %120 {offsets = [0, 0], sizes = [2, 128], strides = [1, 1]} : vector<2x256xf32> to vector<2x128xf32>
    %122 = vector.extract_strided_slice %120 {offsets = [0, 128], sizes = [2, 128], strides = [1, 1]} : vector<2x256xf32> to vector<2x128xf32>
    %123 = vector.extract_strided_slice %109 {offsets = [0, 256], sizes = [2, 128], strides = [1, 1]} : vector<2x384xf32> to vector<2x128xf32>
    %124 = vector.extract_strided_slice %112 {offsets = [0, 256], sizes = [2, 128], strides = [1, 1]} : vector<2x384xf32> to vector<2x128xf32>
    %125 = arith.mulf %121, %124 : vector<2x128xf32>
    %126 = arith.addf %123, %125 : vector<2x128xf32>
    %127 = math.tanh %126 : vector<2x128xf32>
    %cst_27 = arith.constant 1.000000e+00 : f32
    %128 = vector.broadcast %cst_27 : f32 to vector<2x128xf32>
    %129 = arith.subf %128, %122 : vector<2x128xf32>
    %130 = arith.mulf %129, %127 : vector<2x128xf32>
    %131 = arith.mulf %122, %108 : vector<2x128xf32>
    %132 = arith.addf %130, %131 : vector<2x128xf32>
    %133 = vector.extract_strided_slice %11 {offsets = [10, 0], sizes = [2, 384], strides = [1, 1]} : vector<16x384xf32> to vector<2x384xf32>
    %cst_28 = arith.constant dense<0.000000e+00> : vector<2x384xf32>
    %134 = tpu.matmul %132, %4, %cst_28 {dimension_numbers = #tpu.dot_dimension_numbers<[1], [0], [0], [1], [0, 0, 1, 1], [], []>} : vector<2x128xf32>, vector<128x384xf32>, vector<2x384xf32> -> vector<2x384xf32>
    %135 = vector.broadcast %8 : vector<1x384xf32> to vector<2x384xf32>
    %136 = arith.addf %134, %135 : vector<2x384xf32>
    %137 = vector.extract_strided_slice %133 {offsets = [0, 0], sizes = [2, 256], strides = [1, 1]} : vector<2x384xf32> to vector<2x256xf32>
    %138 = vector.extract_strided_slice %136 {offsets = [0, 0], sizes = [2, 256], strides = [1, 1]} : vector<2x384xf32> to vector<2x256xf32>
    %139 = arith.addf %137, %138 : vector<2x256xf32>
    %140 = arith.negf %139 : vector<2x256xf32>
    %141 = math.exp %140 : vector<2x256xf32>
    %cst_29 = arith.constant 1.000000e+00 : f32
    %142 = vector.broadcast %cst_29 : f32 to vector<2x256xf32>
    %143 = arith.addf %142, %141 : vector<2x256xf32>
    %144 = arith.divf %142, %143 : vector<2x256xf32>
    %145 = vector.extract_strided_slice %144 {offsets = [0, 0], sizes = [2, 128], strides = [1, 1]} : vector<2x256xf32> to vector<2x128xf32>
    %146 = vector.extract_strided_slice %144 {offsets = [0, 128], sizes = [2, 128], strides = [1, 1]} : vector<2x256xf32> to vector<2x128xf32>
    %147 = vector.extract_strided_slice %133 {offsets = [0, 256], sizes = [2, 128], strides = [1, 1]} : vector<2x384xf32> to vector<2x128xf32>
    %148 = vector.extract_strided_slice %136 {offsets = [0, 256], sizes = [2, 128], strides = [1, 1]} : vector<2x384xf32> to vector<2x128xf32>
    %149 = arith.mulf %145, %148 : vector<2x128xf32>
    %150 = arith.addf %147, %149 : vector<2x128xf32>
    %151 = math.tanh %150 : vector<2x128xf32>
    %cst_30 = arith.constant 1.000000e+00 : f32
    %152 = vector.broadcast %cst_30 : f32 to vector<2x128xf32>
    %153 = arith.subf %152, %146 : vector<2x128xf32>
    %154 = arith.mulf %153, %151 : vector<2x128xf32>
    %155 = arith.mulf %146, %132 : vector<2x128xf32>
    %156 = arith.addf %154, %155 : vector<2x128xf32>
    %157 = vector.extract_strided_slice %11 {offsets = [12, 0], sizes = [2, 384], strides = [1, 1]} : vector<16x384xf32> to vector<2x384xf32>
    %cst_31 = arith.constant dense<0.000000e+00> : vector<2x384xf32>
    %158 = tpu.matmul %156, %4, %cst_31 {dimension_numbers = #tpu.dot_dimension_numbers<[1], [0], [0], [1], [0, 0, 1, 1], [], []>} : vector<2x128xf32>, vector<128x384xf32>, vector<2x384xf32> -> vector<2x384xf32>
    %159 = vector.broadcast %8 : vector<1x384xf32> to vector<2x384xf32>
    %160 = arith.addf %158, %159 : vector<2x384xf32>
    %161 = vector.extract_strided_slice %157 {offsets = [0, 0], sizes = [2, 256], strides = [1, 1]} : vector<2x384xf32> to vector<2x256xf32>
    %162 = vector.extract_strided_slice %160 {offsets = [0, 0], sizes = [2, 256], strides = [1, 1]} : vector<2x384xf32> to vector<2x256xf32>
    %163 = arith.addf %161, %162 : vector<2x256xf32>
    %164 = arith.negf %163 : vector<2x256xf32>
    %165 = math.exp %164 : vector<2x256xf32>
    %cst_32 = arith.constant 1.000000e+00 : f32
    %166 = vector.broadcast %cst_32 : f32 to vector<2x256xf32>
    %167 = arith.addf %166, %165 : vector<2x256xf32>
    %168 = arith.divf %166, %167 : vector<2x256xf32>
    %169 = vector.extract_strided_slice %168 {offsets = [0, 0], sizes = [2, 128], strides = [1, 1]} : vector<2x256xf32> to vector<2x128xf32>
    %170 = vector.extract_strided_slice %168 {offsets = [0, 128], sizes = [2, 128], strides = [1, 1]} : vector<2x256xf32> to vector<2x128xf32>
    %171 = vector.extract_strided_slice %157 {offsets = [0, 256], sizes = [2, 128], strides = [1, 1]} : vector<2x384xf32> to vector<2x128xf32>
    %172 = vector.extract_strided_slice %160 {offsets = [0, 256], sizes = [2, 128], strides = [1, 1]} : vector<2x384xf32> to vector<2x128xf32>
    %173 = arith.mulf %169, %172 : vector<2x128xf32>
    %174 = arith.addf %171, %173 : vector<2x128xf32>
    %175 = math.tanh %174 : vector<2x128xf32>
    %cst_33 = arith.constant 1.000000e+00 : f32
    %176 = vector.broadcast %cst_33 : f32 to vector<2x128xf32>
    %177 = arith.subf %176, %170 : vector<2x128xf32>
    %178 = arith.mulf %177, %175 : vector<2x128xf32>
    %179 = arith.mulf %170, %156 : vector<2x128xf32>
    %180 = arith.addf %178, %179 : vector<2x128xf32>
    %181 = vector.extract_strided_slice %11 {offsets = [14, 0], sizes = [2, 384], strides = [1, 1]} : vector<16x384xf32> to vector<2x384xf32>
    %cst_34 = arith.constant dense<0.000000e+00> : vector<2x384xf32>
    %182 = tpu.matmul %180, %4, %cst_34 {dimension_numbers = #tpu.dot_dimension_numbers<[1], [0], [0], [1], [0, 0, 1, 1], [], []>} : vector<2x128xf32>, vector<128x384xf32>, vector<2x384xf32> -> vector<2x384xf32>
    %183 = vector.broadcast %8 : vector<1x384xf32> to vector<2x384xf32>
    %184 = arith.addf %182, %183 : vector<2x384xf32>
    %185 = vector.extract_strided_slice %181 {offsets = [0, 0], sizes = [2, 256], strides = [1, 1]} : vector<2x384xf32> to vector<2x256xf32>
    %186 = vector.extract_strided_slice %184 {offsets = [0, 0], sizes = [2, 256], strides = [1, 1]} : vector<2x384xf32> to vector<2x256xf32>
    %187 = arith.addf %185, %186 : vector<2x256xf32>
    %188 = arith.negf %187 : vector<2x256xf32>
    %189 = math.exp %188 : vector<2x256xf32>
    %cst_35 = arith.constant 1.000000e+00 : f32
    %190 = vector.broadcast %cst_35 : f32 to vector<2x256xf32>
    %191 = arith.addf %190, %189 : vector<2x256xf32>
    %192 = arith.divf %190, %191 : vector<2x256xf32>
    %193 = vector.extract_strided_slice %192 {offsets = [0, 0], sizes = [2, 128], strides = [1, 1]} : vector<2x256xf32> to vector<2x128xf32>
    %194 = vector.extract_strided_slice %192 {offsets = [0, 128], sizes = [2, 128], strides = [1, 1]} : vector<2x256xf32> to vector<2x128xf32>
    %195 = vector.extract_strided_slice %181 {offsets = [0, 256], sizes = [2, 128], strides = [1, 1]} : vector<2x384xf32> to vector<2x128xf32>
    %196 = vector.extract_strided_slice %184 {offsets = [0, 256], sizes = [2, 128], strides = [1, 1]} : vector<2x384xf32> to vector<2x128xf32>
    %197 = arith.mulf %193, %196 : vector<2x128xf32>
    %198 = arith.addf %195, %197 : vector<2x128xf32>
    %199 = math.tanh %198 : vector<2x128xf32>
    %cst_36 = arith.constant 1.000000e+00 : f32
    %200 = vector.broadcast %cst_36 : f32 to vector<2x128xf32>
    %201 = arith.subf %200, %194 : vector<2x128xf32>
    %202 = arith.mulf %201, %199 : vector<2x128xf32>
    %203 = arith.mulf %194, %180 : vector<2x128xf32>
    %204 = arith.addf %202, %203 : vector<2x128xf32>
    %205 = tpu.concatenate %36, %60, %84, %108, %132, %156, %180, %204 in 0 : vector<2x128xf32>, vector<2x128xf32>, vector<2x128xf32>, vector<2x128xf32>, vector<2x128xf32>, vector<2x128xf32>, vector<2x128xf32>, vector<2x128xf32> -> vector<16x128xf32>
    %c2 = arith.constant 2 : index
    %c0_37 = arith.constant 0 : index
    %c0_38 = arith.constant 0 : index
    %206 = vector.load %arg1[%c2, %c0_37, %c0_38] : memref<6x128x384xf32, #tpu.memory_space<vmem>>, vector<1x128x384xf32>
    %207 = vector.shape_cast %206 : vector<1x128x384xf32> to vector<128x384xf32>
    %c3 = arith.constant 3 : index
    %c0_39 = arith.constant 0 : index
    %c0_40 = arith.constant 0 : index
    %208 = vector.load %arg1[%c3, %c0_39, %c0_40] : memref<6x128x384xf32, #tpu.memory_space<vmem>>, vector<1x128x384xf32>
    %209 = vector.shape_cast %208 : vector<1x128x384xf32> to vector<128x384xf32>
    %c2_41 = arith.constant 2 : index
    %c0_42 = arith.constant 0 : index
    %c0_43 = arith.constant 0 : index
    %210 = vector.load %arg2[%c2_41, %c0_42, %c0_43] : memref<6x1x384xf32, #tpu.memory_space<vmem>>, vector<1x1x384xf32>
    %211 = vector.shape_cast %210 : vector<1x1x384xf32> to vector<1x384xf32>
    %c3_44 = arith.constant 3 : index
    %c0_45 = arith.constant 0 : index
    %c0_46 = arith.constant 0 : index
    %212 = vector.load %arg2[%c3_44, %c0_45, %c0_46] : memref<6x1x384xf32, #tpu.memory_space<vmem>>, vector<1x1x384xf32>
    %213 = vector.shape_cast %212 : vector<1x1x384xf32> to vector<1x384xf32>
    %cst_47 = arith.constant dense<0.000000e+00> : vector<16x384xf32>
    %214 = tpu.matmul %205, %207, %cst_47 {dimension_numbers = #tpu.dot_dimension_numbers<[1], [0], [0], [1], [0, 0, 1, 1], [], []>} : vector<16x128xf32>, vector<128x384xf32>, vector<16x384xf32> -> vector<16x384xf32>
    %215 = vector.broadcast %211 : vector<1x384xf32> to vector<16x384xf32>
    %216 = arith.addf %214, %215 : vector<16x384xf32>
    %cst_48 = arith.constant 0.000000e+00 : f32
    %217 = vector.broadcast %cst_48 : f32 to vector<2x128xf32>
    %218 = vector.extract_strided_slice %216 {offsets = [0, 0], sizes = [2, 384], strides = [1, 1]} : vector<16x384xf32> to vector<2x384xf32>
    %cst_49 = arith.constant dense<0.000000e+00> : vector<2x384xf32>
    %219 = tpu.matmul %217, %209, %cst_49 {dimension_numbers = #tpu.dot_dimension_numbers<[1], [0], [0], [1], [0, 0, 1, 1], [], []>} : vector<2x128xf32>, vector<128x384xf32>, vector<2x384xf32> -> vector<2x384xf32>
    %220 = vector.broadcast %213 : vector<1x384xf32> to vector<2x384xf32>
    %221 = arith.addf %219, %220 : vector<2x384xf32>
    %222 = vector.extract_strided_slice %218 {offsets = [0, 0], sizes = [2, 256], strides = [1, 1]} : vector<2x384xf32> to vector<2x256xf32>
    %223 = vector.extract_strided_slice %221 {offsets = [0, 0], sizes = [2, 256], strides = [1, 1]} : vector<2x384xf32> to vector<2x256xf32>
    %224 = arith.addf %222, %223 : vector<2x256xf32>
    %225 = arith.negf %224 : vector<2x256xf32>
    %226 = math.exp %225 : vector<2x256xf32>
    %cst_50 = arith.constant 1.000000e+00 : f32
    %227 = vector.broadcast %cst_50 : f32 to vector<2x256xf32>
    %228 = arith.addf %227, %226 : vector<2x256xf32>
    %229 = arith.divf %227, %228 : vector<2x256xf32>
    %230 = vector.extract_strided_slice %229 {offsets = [0, 0], sizes = [2, 128], strides = [1, 1]} : vector<2x256xf32> to vector<2x128xf32>
    %231 = vector.extract_strided_slice %229 {offsets = [0, 128], sizes = [2, 128], strides = [1, 1]} : vector<2x256xf32> to vector<2x128xf32>
    %232 = vector.extract_strided_slice %218 {offsets = [0, 256], sizes = [2, 128], strides = [1, 1]} : vector<2x384xf32> to vector<2x128xf32>
    %233 = vector.extract_strided_slice %221 {offsets = [0, 256], sizes = [2, 128], strides = [1, 1]} : vector<2x384xf32> to vector<2x128xf32>
    %234 = arith.mulf %230, %233 : vector<2x128xf32>
    %235 = arith.addf %232, %234 : vector<2x128xf32>
    %236 = math.tanh %235 : vector<2x128xf32>
    %cst_51 = arith.constant 1.000000e+00 : f32
    %237 = vector.broadcast %cst_51 : f32 to vector<2x128xf32>
    %238 = arith.subf %237, %231 : vector<2x128xf32>
    %239 = arith.mulf %238, %236 : vector<2x128xf32>
    %240 = arith.mulf %231, %217 : vector<2x128xf32>
    %241 = arith.addf %239, %240 : vector<2x128xf32>
    %242 = vector.extract_strided_slice %216 {offsets = [2, 0], sizes = [2, 384], strides = [1, 1]} : vector<16x384xf32> to vector<2x384xf32>
    %cst_52 = arith.constant dense<0.000000e+00> : vector<2x384xf32>
    %243 = tpu.matmul %241, %209, %cst_52 {dimension_numbers = #tpu.dot_dimension_numbers<[1], [0], [0], [1], [0, 0, 1, 1], [], []>} : vector<2x128xf32>, vector<128x384xf32>, vector<2x384xf32> -> vector<2x384xf32>
    %244 = vector.broadcast %213 : vector<1x384xf32> to vector<2x384xf32>
    %245 = arith.addf %243, %244 : vector<2x384xf32>
    %246 = vector.extract_strided_slice %242 {offsets = [0, 0], sizes = [2, 256], strides = [1, 1]} : vector<2x384xf32> to vector<2x256xf32>
    %247 = vector.extract_strided_slice %245 {offsets = [0, 0], sizes = [2, 256], strides = [1, 1]} : vector<2x384xf32> to vector<2x256xf32>
    %248 = arith.addf %246, %247 : vector<2x256xf32>
    %249 = arith.negf %248 : vector<2x256xf32>
    %250 = math.exp %249 : vector<2x256xf32>
    %cst_53 = arith.constant 1.000000e+00 : f32
    %251 = vector.broadcast %cst_53 : f32 to vector<2x256xf32>
    %252 = arith.addf %251, %250 : vector<2x256xf32>
    %253 = arith.divf %251, %252 : vector<2x256xf32>
    %254 = vector.extract_strided_slice %253 {offsets = [0, 0], sizes = [2, 128], strides = [1, 1]} : vector<2x256xf32> to vector<2x128xf32>
    %255 = vector.extract_strided_slice %253 {offsets = [0, 128], sizes = [2, 128], strides = [1, 1]} : vector<2x256xf32> to vector<2x128xf32>
    %256 = vector.extract_strided_slice %242 {offsets = [0, 256], sizes = [2, 128], strides = [1, 1]} : vector<2x384xf32> to vector<2x128xf32>
    %257 = vector.extract_strided_slice %245 {offsets = [0, 256], sizes = [2, 128], strides = [1, 1]} : vector<2x384xf32> to vector<2x128xf32>
    %258 = arith.mulf %254, %257 : vector<2x128xf32>
    %259 = arith.addf %256, %258 : vector<2x128xf32>
    %260 = math.tanh %259 : vector<2x128xf32>
    %cst_54 = arith.constant 1.000000e+00 : f32
    %261 = vector.broadcast %cst_54 : f32 to vector<2x128xf32>
    %262 = arith.subf %261, %255 : vector<2x128xf32>
    %263 = arith.mulf %262, %260 : vector<2x128xf32>
    %264 = arith.mulf %255, %241 : vector<2x128xf32>
    %265 = arith.addf %263, %264 : vector<2x128xf32>
    %266 = vector.extract_strided_slice %216 {offsets = [4, 0], sizes = [2, 384], strides = [1, 1]} : vector<16x384xf32> to vector<2x384xf32>
    %cst_55 = arith.constant dense<0.000000e+00> : vector<2x384xf32>
    %267 = tpu.matmul %265, %209, %cst_55 {dimension_numbers = #tpu.dot_dimension_numbers<[1], [0], [0], [1], [0, 0, 1, 1], [], []>} : vector<2x128xf32>, vector<128x384xf32>, vector<2x384xf32> -> vector<2x384xf32>
    %268 = vector.broadcast %213 : vector<1x384xf32> to vector<2x384xf32>
    %269 = arith.addf %267, %268 : vector<2x384xf32>
    %270 = vector.extract_strided_slice %266 {offsets = [0, 0], sizes = [2, 256], strides = [1, 1]} : vector<2x384xf32> to vector<2x256xf32>
    %271 = vector.extract_strided_slice %269 {offsets = [0, 0], sizes = [2, 256], strides = [1, 1]} : vector<2x384xf32> to vector<2x256xf32>
    %272 = arith.addf %270, %271 : vector<2x256xf32>
    %273 = arith.negf %272 : vector<2x256xf32>
    %274 = math.exp %273 : vector<2x256xf32>
    %cst_56 = arith.constant 1.000000e+00 : f32
    %275 = vector.broadcast %cst_56 : f32 to vector<2x256xf32>
    %276 = arith.addf %275, %274 : vector<2x256xf32>
    %277 = arith.divf %275, %276 : vector<2x256xf32>
    %278 = vector.extract_strided_slice %277 {offsets = [0, 0], sizes = [2, 128], strides = [1, 1]} : vector<2x256xf32> to vector<2x128xf32>
    %279 = vector.extract_strided_slice %277 {offsets = [0, 128], sizes = [2, 128], strides = [1, 1]} : vector<2x256xf32> to vector<2x128xf32>
    %280 = vector.extract_strided_slice %266 {offsets = [0, 256], sizes = [2, 128], strides = [1, 1]} : vector<2x384xf32> to vector<2x128xf32>
    %281 = vector.extract_strided_slice %269 {offsets = [0, 256], sizes = [2, 128], strides = [1, 1]} : vector<2x384xf32> to vector<2x128xf32>
    %282 = arith.mulf %278, %281 : vector<2x128xf32>
    %283 = arith.addf %280, %282 : vector<2x128xf32>
    %284 = math.tanh %283 : vector<2x128xf32>
    %cst_57 = arith.constant 1.000000e+00 : f32
    %285 = vector.broadcast %cst_57 : f32 to vector<2x128xf32>
    %286 = arith.subf %285, %279 : vector<2x128xf32>
    %287 = arith.mulf %286, %284 : vector<2x128xf32>
    %288 = arith.mulf %279, %265 : vector<2x128xf32>
    %289 = arith.addf %287, %288 : vector<2x128xf32>
    %290 = vector.extract_strided_slice %216 {offsets = [6, 0], sizes = [2, 384], strides = [1, 1]} : vector<16x384xf32> to vector<2x384xf32>
    %cst_58 = arith.constant dense<0.000000e+00> : vector<2x384xf32>
    %291 = tpu.matmul %289, %209, %cst_58 {dimension_numbers = #tpu.dot_dimension_numbers<[1], [0], [0], [1], [0, 0, 1, 1], [], []>} : vector<2x128xf32>, vector<128x384xf32>, vector<2x384xf32> -> vector<2x384xf32>
    %292 = vector.broadcast %213 : vector<1x384xf32> to vector<2x384xf32>
    %293 = arith.addf %291, %292 : vector<2x384xf32>
    %294 = vector.extract_strided_slice %290 {offsets = [0, 0], sizes = [2, 256], strides = [1, 1]} : vector<2x384xf32> to vector<2x256xf32>
    %295 = vector.extract_strided_slice %293 {offsets = [0, 0], sizes = [2, 256], strides = [1, 1]} : vector<2x384xf32> to vector<2x256xf32>
    %296 = arith.addf %294, %295 : vector<2x256xf32>
    %297 = arith.negf %296 : vector<2x256xf32>
    %298 = math.exp %297 : vector<2x256xf32>
    %cst_59 = arith.constant 1.000000e+00 : f32
    %299 = vector.broadcast %cst_59 : f32 to vector<2x256xf32>
    %300 = arith.addf %299, %298 : vector<2x256xf32>
    %301 = arith.divf %299, %300 : vector<2x256xf32>
    %302 = vector.extract_strided_slice %301 {offsets = [0, 0], sizes = [2, 128], strides = [1, 1]} : vector<2x256xf32> to vector<2x128xf32>
    %303 = vector.extract_strided_slice %301 {offsets = [0, 128], sizes = [2, 128], strides = [1, 1]} : vector<2x256xf32> to vector<2x128xf32>
    %304 = vector.extract_strided_slice %290 {offsets = [0, 256], sizes = [2, 128], strides = [1, 1]} : vector<2x384xf32> to vector<2x128xf32>
    %305 = vector.extract_strided_slice %293 {offsets = [0, 256], sizes = [2, 128], strides = [1, 1]} : vector<2x384xf32> to vector<2x128xf32>
    %306 = arith.mulf %302, %305 : vector<2x128xf32>
    %307 = arith.addf %304, %306 : vector<2x128xf32>
    %308 = math.tanh %307 : vector<2x128xf32>
    %cst_60 = arith.constant 1.000000e+00 : f32
    %309 = vector.broadcast %cst_60 : f32 to vector<2x128xf32>
    %310 = arith.subf %309, %303 : vector<2x128xf32>
    %311 = arith.mulf %310, %308 : vector<2x128xf32>
    %312 = arith.mulf %303, %289 : vector<2x128xf32>
    %313 = arith.addf %311, %312 : vector<2x128xf32>
    %314 = vector.extract_strided_slice %216 {offsets = [8, 0], sizes = [2, 384], strides = [1, 1]} : vector<16x384xf32> to vector<2x384xf32>
    %cst_61 = arith.constant dense<0.000000e+00> : vector<2x384xf32>
    %315 = tpu.matmul %313, %209, %cst_61 {dimension_numbers = #tpu.dot_dimension_numbers<[1], [0], [0], [1], [0, 0, 1, 1], [], []>} : vector<2x128xf32>, vector<128x384xf32>, vector<2x384xf32> -> vector<2x384xf32>
    %316 = vector.broadcast %213 : vector<1x384xf32> to vector<2x384xf32>
    %317 = arith.addf %315, %316 : vector<2x384xf32>
    %318 = vector.extract_strided_slice %314 {offsets = [0, 0], sizes = [2, 256], strides = [1, 1]} : vector<2x384xf32> to vector<2x256xf32>
    %319 = vector.extract_strided_slice %317 {offsets = [0, 0], sizes = [2, 256], strides = [1, 1]} : vector<2x384xf32> to vector<2x256xf32>
    %320 = arith.addf %318, %319 : vector<2x256xf32>
    %321 = arith.negf %320 : vector<2x256xf32>
    %322 = math.exp %321 : vector<2x256xf32>
    %cst_62 = arith.constant 1.000000e+00 : f32
    %323 = vector.broadcast %cst_62 : f32 to vector<2x256xf32>
    %324 = arith.addf %323, %322 : vector<2x256xf32>
    %325 = arith.divf %323, %324 : vector<2x256xf32>
    %326 = vector.extract_strided_slice %325 {offsets = [0, 0], sizes = [2, 128], strides = [1, 1]} : vector<2x256xf32> to vector<2x128xf32>
    %327 = vector.extract_strided_slice %325 {offsets = [0, 128], sizes = [2, 128], strides = [1, 1]} : vector<2x256xf32> to vector<2x128xf32>
    %328 = vector.extract_strided_slice %314 {offsets = [0, 256], sizes = [2, 128], strides = [1, 1]} : vector<2x384xf32> to vector<2x128xf32>
    %329 = vector.extract_strided_slice %317 {offsets = [0, 256], sizes = [2, 128], strides = [1, 1]} : vector<2x384xf32> to vector<2x128xf32>
    %330 = arith.mulf %326, %329 : vector<2x128xf32>
    %331 = arith.addf %328, %330 : vector<2x128xf32>
    %332 = math.tanh %331 : vector<2x128xf32>
    %cst_63 = arith.constant 1.000000e+00 : f32
    %333 = vector.broadcast %cst_63 : f32 to vector<2x128xf32>
    %334 = arith.subf %333, %327 : vector<2x128xf32>
    %335 = arith.mulf %334, %332 : vector<2x128xf32>
    %336 = arith.mulf %327, %313 : vector<2x128xf32>
    %337 = arith.addf %335, %336 : vector<2x128xf32>
    %338 = vector.extract_strided_slice %216 {offsets = [10, 0], sizes = [2, 384], strides = [1, 1]} : vector<16x384xf32> to vector<2x384xf32>
    %cst_64 = arith.constant dense<0.000000e+00> : vector<2x384xf32>
    %339 = tpu.matmul %337, %209, %cst_64 {dimension_numbers = #tpu.dot_dimension_numbers<[1], [0], [0], [1], [0, 0, 1, 1], [], []>} : vector<2x128xf32>, vector<128x384xf32>, vector<2x384xf32> -> vector<2x384xf32>
    %340 = vector.broadcast %213 : vector<1x384xf32> to vector<2x384xf32>
    %341 = arith.addf %339, %340 : vector<2x384xf32>
    %342 = vector.extract_strided_slice %338 {offsets = [0, 0], sizes = [2, 256], strides = [1, 1]} : vector<2x384xf32> to vector<2x256xf32>
    %343 = vector.extract_strided_slice %341 {offsets = [0, 0], sizes = [2, 256], strides = [1, 1]} : vector<2x384xf32> to vector<2x256xf32>
    %344 = arith.addf %342, %343 : vector<2x256xf32>
    %345 = arith.negf %344 : vector<2x256xf32>
    %346 = math.exp %345 : vector<2x256xf32>
    %cst_65 = arith.constant 1.000000e+00 : f32
    %347 = vector.broadcast %cst_65 : f32 to vector<2x256xf32>
    %348 = arith.addf %347, %346 : vector<2x256xf32>
    %349 = arith.divf %347, %348 : vector<2x256xf32>
    %350 = vector.extract_strided_slice %349 {offsets = [0, 0], sizes = [2, 128], strides = [1, 1]} : vector<2x256xf32> to vector<2x128xf32>
    %351 = vector.extract_strided_slice %349 {offsets = [0, 128], sizes = [2, 128], strides = [1, 1]} : vector<2x256xf32> to vector<2x128xf32>
    %352 = vector.extract_strided_slice %338 {offsets = [0, 256], sizes = [2, 128], strides = [1, 1]} : vector<2x384xf32> to vector<2x128xf32>
    %353 = vector.extract_strided_slice %341 {offsets = [0, 256], sizes = [2, 128], strides = [1, 1]} : vector<2x384xf32> to vector<2x128xf32>
    %354 = arith.mulf %350, %353 : vector<2x128xf32>
    %355 = arith.addf %352, %354 : vector<2x128xf32>
    %356 = math.tanh %355 : vector<2x128xf32>
    %cst_66 = arith.constant 1.000000e+00 : f32
    %357 = vector.broadcast %cst_66 : f32 to vector<2x128xf32>
    %358 = arith.subf %357, %351 : vector<2x128xf32>
    %359 = arith.mulf %358, %356 : vector<2x128xf32>
    %360 = arith.mulf %351, %337 : vector<2x128xf32>
    %361 = arith.addf %359, %360 : vector<2x128xf32>
    %362 = vector.extract_strided_slice %216 {offsets = [12, 0], sizes = [2, 384], strides = [1, 1]} : vector<16x384xf32> to vector<2x384xf32>
    %cst_67 = arith.constant dense<0.000000e+00> : vector<2x384xf32>
    %363 = tpu.matmul %361, %209, %cst_67 {dimension_numbers = #tpu.dot_dimension_numbers<[1], [0], [0], [1], [0, 0, 1, 1], [], []>} : vector<2x128xf32>, vector<128x384xf32>, vector<2x384xf32> -> vector<2x384xf32>
    %364 = vector.broadcast %213 : vector<1x384xf32> to vector<2x384xf32>
    %365 = arith.addf %363, %364 : vector<2x384xf32>
    %366 = vector.extract_strided_slice %362 {offsets = [0, 0], sizes = [2, 256], strides = [1, 1]} : vector<2x384xf32> to vector<2x256xf32>
    %367 = vector.extract_strided_slice %365 {offsets = [0, 0], sizes = [2, 256], strides = [1, 1]} : vector<2x384xf32> to vector<2x256xf32>
    %368 = arith.addf %366, %367 : vector<2x256xf32>
    %369 = arith.negf %368 : vector<2x256xf32>
    %370 = math.exp %369 : vector<2x256xf32>
    %cst_68 = arith.constant 1.000000e+00 : f32
    %371 = vector.broadcast %cst_68 : f32 to vector<2x256xf32>
    %372 = arith.addf %371, %370 : vector<2x256xf32>
    %373 = arith.divf %371, %372 : vector<2x256xf32>
    %374 = vector.extract_strided_slice %373 {offsets = [0, 0], sizes = [2, 128], strides = [1, 1]} : vector<2x256xf32> to vector<2x128xf32>
    %375 = vector.extract_strided_slice %373 {offsets = [0, 128], sizes = [2, 128], strides = [1, 1]} : vector<2x256xf32> to vector<2x128xf32>
    %376 = vector.extract_strided_slice %362 {offsets = [0, 256], sizes = [2, 128], strides = [1, 1]} : vector<2x384xf32> to vector<2x128xf32>
    %377 = vector.extract_strided_slice %365 {offsets = [0, 256], sizes = [2, 128], strides = [1, 1]} : vector<2x384xf32> to vector<2x128xf32>
    %378 = arith.mulf %374, %377 : vector<2x128xf32>
    %379 = arith.addf %376, %378 : vector<2x128xf32>
    %380 = math.tanh %379 : vector<2x128xf32>
    %cst_69 = arith.constant 1.000000e+00 : f32
    %381 = vector.broadcast %cst_69 : f32 to vector<2x128xf32>
    %382 = arith.subf %381, %375 : vector<2x128xf32>
    %383 = arith.mulf %382, %380 : vector<2x128xf32>
    %384 = arith.mulf %375, %361 : vector<2x128xf32>
    %385 = arith.addf %383, %384 : vector<2x128xf32>
    %386 = vector.extract_strided_slice %216 {offsets = [14, 0], sizes = [2, 384], strides = [1, 1]} : vector<16x384xf32> to vector<2x384xf32>
    %cst_70 = arith.constant dense<0.000000e+00> : vector<2x384xf32>
    %387 = tpu.matmul %385, %209, %cst_70 {dimension_numbers = #tpu.dot_dimension_numbers<[1], [0], [0], [1], [0, 0, 1, 1], [], []>} : vector<2x128xf32>, vector<128x384xf32>, vector<2x384xf32> -> vector<2x384xf32>
    %388 = vector.broadcast %213 : vector<1x384xf32> to vector<2x384xf32>
    %389 = arith.addf %387, %388 : vector<2x384xf32>
    %390 = vector.extract_strided_slice %386 {offsets = [0, 0], sizes = [2, 256], strides = [1, 1]} : vector<2x384xf32> to vector<2x256xf32>
    %391 = vector.extract_strided_slice %389 {offsets = [0, 0], sizes = [2, 256], strides = [1, 1]} : vector<2x384xf32> to vector<2x256xf32>
    %392 = arith.addf %390, %391 : vector<2x256xf32>
    %393 = arith.negf %392 : vector<2x256xf32>
    %394 = math.exp %393 : vector<2x256xf32>
    %cst_71 = arith.constant 1.000000e+00 : f32
    %395 = vector.broadcast %cst_71 : f32 to vector<2x256xf32>
    %396 = arith.addf %395, %394 : vector<2x256xf32>
    %397 = arith.divf %395, %396 : vector<2x256xf32>
    %398 = vector.extract_strided_slice %397 {offsets = [0, 0], sizes = [2, 128], strides = [1, 1]} : vector<2x256xf32> to vector<2x128xf32>
    %399 = vector.extract_strided_slice %397 {offsets = [0, 128], sizes = [2, 128], strides = [1, 1]} : vector<2x256xf32> to vector<2x128xf32>
    %400 = vector.extract_strided_slice %386 {offsets = [0, 256], sizes = [2, 128], strides = [1, 1]} : vector<2x384xf32> to vector<2x128xf32>
    %401 = vector.extract_strided_slice %389 {offsets = [0, 256], sizes = [2, 128], strides = [1, 1]} : vector<2x384xf32> to vector<2x128xf32>
    %402 = arith.mulf %398, %401 : vector<2x128xf32>
    %403 = arith.addf %400, %402 : vector<2x128xf32>
    %404 = math.tanh %403 : vector<2x128xf32>
    %cst_72 = arith.constant 1.000000e+00 : f32
    %405 = vector.broadcast %cst_72 : f32 to vector<2x128xf32>
    %406 = arith.subf %405, %399 : vector<2x128xf32>
    %407 = arith.mulf %406, %404 : vector<2x128xf32>
    %408 = arith.mulf %399, %385 : vector<2x128xf32>
    %409 = arith.addf %407, %408 : vector<2x128xf32>
    %410 = tpu.concatenate %241, %265, %289, %313, %337, %361, %385, %409 in 0 : vector<2x128xf32>, vector<2x128xf32>, vector<2x128xf32>, vector<2x128xf32>, vector<2x128xf32>, vector<2x128xf32>, vector<2x128xf32>, vector<2x128xf32> -> vector<16x128xf32>
    %c4 = arith.constant 4 : index
    %c0_73 = arith.constant 0 : index
    %c0_74 = arith.constant 0 : index
    %411 = vector.load %arg1[%c4, %c0_73, %c0_74] : memref<6x128x384xf32, #tpu.memory_space<vmem>>, vector<1x128x384xf32>
    %412 = vector.shape_cast %411 : vector<1x128x384xf32> to vector<128x384xf32>
    %c5 = arith.constant 5 : index
    %c0_75 = arith.constant 0 : index
    %c0_76 = arith.constant 0 : index
    %413 = vector.load %arg1[%c5, %c0_75, %c0_76] : memref<6x128x384xf32, #tpu.memory_space<vmem>>, vector<1x128x384xf32>
    %414 = vector.shape_cast %413 : vector<1x128x384xf32> to vector<128x384xf32>
    %c4_77 = arith.constant 4 : index
    %c0_78 = arith.constant 0 : index
    %c0_79 = arith.constant 0 : index
    %415 = vector.load %arg2[%c4_77, %c0_78, %c0_79] : memref<6x1x384xf32, #tpu.memory_space<vmem>>, vector<1x1x384xf32>
    %416 = vector.shape_cast %415 : vector<1x1x384xf32> to vector<1x384xf32>
    %c5_80 = arith.constant 5 : index
    %c0_81 = arith.constant 0 : index
    %c0_82 = arith.constant 0 : index
    %417 = vector.load %arg2[%c5_80, %c0_81, %c0_82] : memref<6x1x384xf32, #tpu.memory_space<vmem>>, vector<1x1x384xf32>
    %418 = vector.shape_cast %417 : vector<1x1x384xf32> to vector<1x384xf32>
    %cst_83 = arith.constant dense<0.000000e+00> : vector<16x384xf32>
    %419 = tpu.matmul %410, %412, %cst_83 {dimension_numbers = #tpu.dot_dimension_numbers<[1], [0], [0], [1], [0, 0, 1, 1], [], []>} : vector<16x128xf32>, vector<128x384xf32>, vector<16x384xf32> -> vector<16x384xf32>
    %420 = vector.broadcast %416 : vector<1x384xf32> to vector<16x384xf32>
    %421 = arith.addf %419, %420 : vector<16x384xf32>
    %cst_84 = arith.constant 0.000000e+00 : f32
    %422 = vector.broadcast %cst_84 : f32 to vector<2x128xf32>
    %423 = vector.extract_strided_slice %421 {offsets = [0, 0], sizes = [2, 384], strides = [1, 1]} : vector<16x384xf32> to vector<2x384xf32>
    %cst_85 = arith.constant dense<0.000000e+00> : vector<2x384xf32>
    %424 = tpu.matmul %422, %414, %cst_85 {dimension_numbers = #tpu.dot_dimension_numbers<[1], [0], [0], [1], [0, 0, 1, 1], [], []>} : vector<2x128xf32>, vector<128x384xf32>, vector<2x384xf32> -> vector<2x384xf32>
    %425 = vector.broadcast %418 : vector<1x384xf32> to vector<2x384xf32>
    %426 = arith.addf %424, %425 : vector<2x384xf32>
    %427 = vector.extract_strided_slice %423 {offsets = [0, 0], sizes = [2, 256], strides = [1, 1]} : vector<2x384xf32> to vector<2x256xf32>
    %428 = vector.extract_strided_slice %426 {offsets = [0, 0], sizes = [2, 256], strides = [1, 1]} : vector<2x384xf32> to vector<2x256xf32>
    %429 = arith.addf %427, %428 : vector<2x256xf32>
    %430 = arith.negf %429 : vector<2x256xf32>
    %431 = math.exp %430 : vector<2x256xf32>
    %cst_86 = arith.constant 1.000000e+00 : f32
    %432 = vector.broadcast %cst_86 : f32 to vector<2x256xf32>
    %433 = arith.addf %432, %431 : vector<2x256xf32>
    %434 = arith.divf %432, %433 : vector<2x256xf32>
    %435 = vector.extract_strided_slice %434 {offsets = [0, 0], sizes = [2, 128], strides = [1, 1]} : vector<2x256xf32> to vector<2x128xf32>
    %436 = vector.extract_strided_slice %434 {offsets = [0, 128], sizes = [2, 128], strides = [1, 1]} : vector<2x256xf32> to vector<2x128xf32>
    %437 = vector.extract_strided_slice %423 {offsets = [0, 256], sizes = [2, 128], strides = [1, 1]} : vector<2x384xf32> to vector<2x128xf32>
    %438 = vector.extract_strided_slice %426 {offsets = [0, 256], sizes = [2, 128], strides = [1, 1]} : vector<2x384xf32> to vector<2x128xf32>
    %439 = arith.mulf %435, %438 : vector<2x128xf32>
    %440 = arith.addf %437, %439 : vector<2x128xf32>
    %441 = math.tanh %440 : vector<2x128xf32>
    %cst_87 = arith.constant 1.000000e+00 : f32
    %442 = vector.broadcast %cst_87 : f32 to vector<2x128xf32>
    %443 = arith.subf %442, %436 : vector<2x128xf32>
    %444 = arith.mulf %443, %441 : vector<2x128xf32>
    %445 = arith.mulf %436, %422 : vector<2x128xf32>
    %446 = arith.addf %444, %445 : vector<2x128xf32>
    %447 = vector.extract_strided_slice %421 {offsets = [2, 0], sizes = [2, 384], strides = [1, 1]} : vector<16x384xf32> to vector<2x384xf32>
    %cst_88 = arith.constant dense<0.000000e+00> : vector<2x384xf32>
    %448 = tpu.matmul %446, %414, %cst_88 {dimension_numbers = #tpu.dot_dimension_numbers<[1], [0], [0], [1], [0, 0, 1, 1], [], []>} : vector<2x128xf32>, vector<128x384xf32>, vector<2x384xf32> -> vector<2x384xf32>
    %449 = vector.broadcast %418 : vector<1x384xf32> to vector<2x384xf32>
    %450 = arith.addf %448, %449 : vector<2x384xf32>
    %451 = vector.extract_strided_slice %447 {offsets = [0, 0], sizes = [2, 256], strides = [1, 1]} : vector<2x384xf32> to vector<2x256xf32>
    %452 = vector.extract_strided_slice %450 {offsets = [0, 0], sizes = [2, 256], strides = [1, 1]} : vector<2x384xf32> to vector<2x256xf32>
    %453 = arith.addf %451, %452 : vector<2x256xf32>
    %454 = arith.negf %453 : vector<2x256xf32>
    %455 = math.exp %454 : vector<2x256xf32>
    %cst_89 = arith.constant 1.000000e+00 : f32
    %456 = vector.broadcast %cst_89 : f32 to vector<2x256xf32>
    %457 = arith.addf %456, %455 : vector<2x256xf32>
    %458 = arith.divf %456, %457 : vector<2x256xf32>
    %459 = vector.extract_strided_slice %458 {offsets = [0, 0], sizes = [2, 128], strides = [1, 1]} : vector<2x256xf32> to vector<2x128xf32>
    %460 = vector.extract_strided_slice %458 {offsets = [0, 128], sizes = [2, 128], strides = [1, 1]} : vector<2x256xf32> to vector<2x128xf32>
    %461 = vector.extract_strided_slice %447 {offsets = [0, 256], sizes = [2, 128], strides = [1, 1]} : vector<2x384xf32> to vector<2x128xf32>
    %462 = vector.extract_strided_slice %450 {offsets = [0, 256], sizes = [2, 128], strides = [1, 1]} : vector<2x384xf32> to vector<2x128xf32>
    %463 = arith.mulf %459, %462 : vector<2x128xf32>
    %464 = arith.addf %461, %463 : vector<2x128xf32>
    %465 = math.tanh %464 : vector<2x128xf32>
    %cst_90 = arith.constant 1.000000e+00 : f32
    %466 = vector.broadcast %cst_90 : f32 to vector<2x128xf32>
    %467 = arith.subf %466, %460 : vector<2x128xf32>
    %468 = arith.mulf %467, %465 : vector<2x128xf32>
    %469 = arith.mulf %460, %446 : vector<2x128xf32>
    %470 = arith.addf %468, %469 : vector<2x128xf32>
    %471 = vector.extract_strided_slice %421 {offsets = [4, 0], sizes = [2, 384], strides = [1, 1]} : vector<16x384xf32> to vector<2x384xf32>
    %cst_91 = arith.constant dense<0.000000e+00> : vector<2x384xf32>
    %472 = tpu.matmul %470, %414, %cst_91 {dimension_numbers = #tpu.dot_dimension_numbers<[1], [0], [0], [1], [0, 0, 1, 1], [], []>} : vector<2x128xf32>, vector<128x384xf32>, vector<2x384xf32> -> vector<2x384xf32>
    %473 = vector.broadcast %418 : vector<1x384xf32> to vector<2x384xf32>
    %474 = arith.addf %472, %473 : vector<2x384xf32>
    %475 = vector.extract_strided_slice %471 {offsets = [0, 0], sizes = [2, 256], strides = [1, 1]} : vector<2x384xf32> to vector<2x256xf32>
    %476 = vector.extract_strided_slice %474 {offsets = [0, 0], sizes = [2, 256], strides = [1, 1]} : vector<2x384xf32> to vector<2x256xf32>
    %477 = arith.addf %475, %476 : vector<2x256xf32>
    %478 = arith.negf %477 : vector<2x256xf32>
    %479 = math.exp %478 : vector<2x256xf32>
    %cst_92 = arith.constant 1.000000e+00 : f32
    %480 = vector.broadcast %cst_92 : f32 to vector<2x256xf32>
    %481 = arith.addf %480, %479 : vector<2x256xf32>
    %482 = arith.divf %480, %481 : vector<2x256xf32>
    %483 = vector.extract_strided_slice %482 {offsets = [0, 0], sizes = [2, 128], strides = [1, 1]} : vector<2x256xf32> to vector<2x128xf32>
    %484 = vector.extract_strided_slice %482 {offsets = [0, 128], sizes = [2, 128], strides = [1, 1]} : vector<2x256xf32> to vector<2x128xf32>
    %485 = vector.extract_strided_slice %471 {offsets = [0, 256], sizes = [2, 128], strides = [1, 1]} : vector<2x384xf32> to vector<2x128xf32>
    %486 = vector.extract_strided_slice %474 {offsets = [0, 256], sizes = [2, 128], strides = [1, 1]} : vector<2x384xf32> to vector<2x128xf32>
    %487 = arith.mulf %483, %486 : vector<2x128xf32>
    %488 = arith.addf %485, %487 : vector<2x128xf32>
    %489 = math.tanh %488 : vector<2x128xf32>
    %cst_93 = arith.constant 1.000000e+00 : f32
    %490 = vector.broadcast %cst_93 : f32 to vector<2x128xf32>
    %491 = arith.subf %490, %484 : vector<2x128xf32>
    %492 = arith.mulf %491, %489 : vector<2x128xf32>
    %493 = arith.mulf %484, %470 : vector<2x128xf32>
    %494 = arith.addf %492, %493 : vector<2x128xf32>
    %495 = vector.extract_strided_slice %421 {offsets = [6, 0], sizes = [2, 384], strides = [1, 1]} : vector<16x384xf32> to vector<2x384xf32>
    %cst_94 = arith.constant dense<0.000000e+00> : vector<2x384xf32>
    %496 = tpu.matmul %494, %414, %cst_94 {dimension_numbers = #tpu.dot_dimension_numbers<[1], [0], [0], [1], [0, 0, 1, 1], [], []>} : vector<2x128xf32>, vector<128x384xf32>, vector<2x384xf32> -> vector<2x384xf32>
    %497 = vector.broadcast %418 : vector<1x384xf32> to vector<2x384xf32>
    %498 = arith.addf %496, %497 : vector<2x384xf32>
    %499 = vector.extract_strided_slice %495 {offsets = [0, 0], sizes = [2, 256], strides = [1, 1]} : vector<2x384xf32> to vector<2x256xf32>
    %500 = vector.extract_strided_slice %498 {offsets = [0, 0], sizes = [2, 256], strides = [1, 1]} : vector<2x384xf32> to vector<2x256xf32>
    %501 = arith.addf %499, %500 : vector<2x256xf32>
    %502 = arith.negf %501 : vector<2x256xf32>
    %503 = math.exp %502 : vector<2x256xf32>
    %cst_95 = arith.constant 1.000000e+00 : f32
    %504 = vector.broadcast %cst_95 : f32 to vector<2x256xf32>
    %505 = arith.addf %504, %503 : vector<2x256xf32>
    %506 = arith.divf %504, %505 : vector<2x256xf32>
    %507 = vector.extract_strided_slice %506 {offsets = [0, 0], sizes = [2, 128], strides = [1, 1]} : vector<2x256xf32> to vector<2x128xf32>
    %508 = vector.extract_strided_slice %506 {offsets = [0, 128], sizes = [2, 128], strides = [1, 1]} : vector<2x256xf32> to vector<2x128xf32>
    %509 = vector.extract_strided_slice %495 {offsets = [0, 256], sizes = [2, 128], strides = [1, 1]} : vector<2x384xf32> to vector<2x128xf32>
    %510 = vector.extract_strided_slice %498 {offsets = [0, 256], sizes = [2, 128], strides = [1, 1]} : vector<2x384xf32> to vector<2x128xf32>
    %511 = arith.mulf %507, %510 : vector<2x128xf32>
    %512 = arith.addf %509, %511 : vector<2x128xf32>
    %513 = math.tanh %512 : vector<2x128xf32>
    %cst_96 = arith.constant 1.000000e+00 : f32
    %514 = vector.broadcast %cst_96 : f32 to vector<2x128xf32>
    %515 = arith.subf %514, %508 : vector<2x128xf32>
    %516 = arith.mulf %515, %513 : vector<2x128xf32>
    %517 = arith.mulf %508, %494 : vector<2x128xf32>
    %518 = arith.addf %516, %517 : vector<2x128xf32>
    %519 = vector.extract_strided_slice %421 {offsets = [8, 0], sizes = [2, 384], strides = [1, 1]} : vector<16x384xf32> to vector<2x384xf32>
    %cst_97 = arith.constant dense<0.000000e+00> : vector<2x384xf32>
    %520 = tpu.matmul %518, %414, %cst_97 {dimension_numbers = #tpu.dot_dimension_numbers<[1], [0], [0], [1], [0, 0, 1, 1], [], []>} : vector<2x128xf32>, vector<128x384xf32>, vector<2x384xf32> -> vector<2x384xf32>
    %521 = vector.broadcast %418 : vector<1x384xf32> to vector<2x384xf32>
    %522 = arith.addf %520, %521 : vector<2x384xf32>
    %523 = vector.extract_strided_slice %519 {offsets = [0, 0], sizes = [2, 256], strides = [1, 1]} : vector<2x384xf32> to vector<2x256xf32>
    %524 = vector.extract_strided_slice %522 {offsets = [0, 0], sizes = [2, 256], strides = [1, 1]} : vector<2x384xf32> to vector<2x256xf32>
    %525 = arith.addf %523, %524 : vector<2x256xf32>
    %526 = arith.negf %525 : vector<2x256xf32>
    %527 = math.exp %526 : vector<2x256xf32>
    %cst_98 = arith.constant 1.000000e+00 : f32
    %528 = vector.broadcast %cst_98 : f32 to vector<2x256xf32>
    %529 = arith.addf %528, %527 : vector<2x256xf32>
    %530 = arith.divf %528, %529 : vector<2x256xf32>
    %531 = vector.extract_strided_slice %530 {offsets = [0, 0], sizes = [2, 128], strides = [1, 1]} : vector<2x256xf32> to vector<2x128xf32>
    %532 = vector.extract_strided_slice %530 {offsets = [0, 128], sizes = [2, 128], strides = [1, 1]} : vector<2x256xf32> to vector<2x128xf32>
    %533 = vector.extract_strided_slice %519 {offsets = [0, 256], sizes = [2, 128], strides = [1, 1]} : vector<2x384xf32> to vector<2x128xf32>
    %534 = vector.extract_strided_slice %522 {offsets = [0, 256], sizes = [2, 128], strides = [1, 1]} : vector<2x384xf32> to vector<2x128xf32>
    %535 = arith.mulf %531, %534 : vector<2x128xf32>
    %536 = arith.addf %533, %535 : vector<2x128xf32>
    %537 = math.tanh %536 : vector<2x128xf32>
    %cst_99 = arith.constant 1.000000e+00 : f32
    %538 = vector.broadcast %cst_99 : f32 to vector<2x128xf32>
    %539 = arith.subf %538, %532 : vector<2x128xf32>
    %540 = arith.mulf %539, %537 : vector<2x128xf32>
    %541 = arith.mulf %532, %518 : vector<2x128xf32>
    %542 = arith.addf %540, %541 : vector<2x128xf32>
    %543 = vector.extract_strided_slice %421 {offsets = [10, 0], sizes = [2, 384], strides = [1, 1]} : vector<16x384xf32> to vector<2x384xf32>
    %cst_100 = arith.constant dense<0.000000e+00> : vector<2x384xf32>
    %544 = tpu.matmul %542, %414, %cst_100 {dimension_numbers = #tpu.dot_dimension_numbers<[1], [0], [0], [1], [0, 0, 1, 1], [], []>} : vector<2x128xf32>, vector<128x384xf32>, vector<2x384xf32> -> vector<2x384xf32>
    %545 = vector.broadcast %418 : vector<1x384xf32> to vector<2x384xf32>
    %546 = arith.addf %544, %545 : vector<2x384xf32>
    %547 = vector.extract_strided_slice %543 {offsets = [0, 0], sizes = [2, 256], strides = [1, 1]} : vector<2x384xf32> to vector<2x256xf32>
    %548 = vector.extract_strided_slice %546 {offsets = [0, 0], sizes = [2, 256], strides = [1, 1]} : vector<2x384xf32> to vector<2x256xf32>
    %549 = arith.addf %547, %548 : vector<2x256xf32>
    %550 = arith.negf %549 : vector<2x256xf32>
    %551 = math.exp %550 : vector<2x256xf32>
    %cst_101 = arith.constant 1.000000e+00 : f32
    %552 = vector.broadcast %cst_101 : f32 to vector<2x256xf32>
    %553 = arith.addf %552, %551 : vector<2x256xf32>
    %554 = arith.divf %552, %553 : vector<2x256xf32>
    %555 = vector.extract_strided_slice %554 {offsets = [0, 0], sizes = [2, 128], strides = [1, 1]} : vector<2x256xf32> to vector<2x128xf32>
    %556 = vector.extract_strided_slice %554 {offsets = [0, 128], sizes = [2, 128], strides = [1, 1]} : vector<2x256xf32> to vector<2x128xf32>
    %557 = vector.extract_strided_slice %543 {offsets = [0, 256], sizes = [2, 128], strides = [1, 1]} : vector<2x384xf32> to vector<2x128xf32>
    %558 = vector.extract_strided_slice %546 {offsets = [0, 256], sizes = [2, 128], strides = [1, 1]} : vector<2x384xf32> to vector<2x128xf32>
    %559 = arith.mulf %555, %558 : vector<2x128xf32>
    %560 = arith.addf %557, %559 : vector<2x128xf32>
    %561 = math.tanh %560 : vector<2x128xf32>
    %cst_102 = arith.constant 1.000000e+00 : f32
    %562 = vector.broadcast %cst_102 : f32 to vector<2x128xf32>
    %563 = arith.subf %562, %556 : vector<2x128xf32>
    %564 = arith.mulf %563, %561 : vector<2x128xf32>
    %565 = arith.mulf %556, %542 : vector<2x128xf32>
    %566 = arith.addf %564, %565 : vector<2x128xf32>
    %567 = vector.extract_strided_slice %421 {offsets = [12, 0], sizes = [2, 384], strides = [1, 1]} : vector<16x384xf32> to vector<2x384xf32>
    %cst_103 = arith.constant dense<0.000000e+00> : vector<2x384xf32>
    %568 = tpu.matmul %566, %414, %cst_103 {dimension_numbers = #tpu.dot_dimension_numbers<[1], [0], [0], [1], [0, 0, 1, 1], [], []>} : vector<2x128xf32>, vector<128x384xf32>, vector<2x384xf32> -> vector<2x384xf32>
    %569 = vector.broadcast %418 : vector<1x384xf32> to vector<2x384xf32>
    %570 = arith.addf %568, %569 : vector<2x384xf32>
    %571 = vector.extract_strided_slice %567 {offsets = [0, 0], sizes = [2, 256], strides = [1, 1]} : vector<2x384xf32> to vector<2x256xf32>
    %572 = vector.extract_strided_slice %570 {offsets = [0, 0], sizes = [2, 256], strides = [1, 1]} : vector<2x384xf32> to vector<2x256xf32>
    %573 = arith.addf %571, %572 : vector<2x256xf32>
    %574 = arith.negf %573 : vector<2x256xf32>
    %575 = math.exp %574 : vector<2x256xf32>
    %cst_104 = arith.constant 1.000000e+00 : f32
    %576 = vector.broadcast %cst_104 : f32 to vector<2x256xf32>
    %577 = arith.addf %576, %575 : vector<2x256xf32>
    %578 = arith.divf %576, %577 : vector<2x256xf32>
    %579 = vector.extract_strided_slice %578 {offsets = [0, 0], sizes = [2, 128], strides = [1, 1]} : vector<2x256xf32> to vector<2x128xf32>
    %580 = vector.extract_strided_slice %578 {offsets = [0, 128], sizes = [2, 128], strides = [1, 1]} : vector<2x256xf32> to vector<2x128xf32>
    %581 = vector.extract_strided_slice %567 {offsets = [0, 256], sizes = [2, 128], strides = [1, 1]} : vector<2x384xf32> to vector<2x128xf32>
    %582 = vector.extract_strided_slice %570 {offsets = [0, 256], sizes = [2, 128], strides = [1, 1]} : vector<2x384xf32> to vector<2x128xf32>
    %583 = arith.mulf %579, %582 : vector<2x128xf32>
    %584 = arith.addf %581, %583 : vector<2x128xf32>
    %585 = math.tanh %584 : vector<2x128xf32>
    %cst_105 = arith.constant 1.000000e+00 : f32
    %586 = vector.broadcast %cst_105 : f32 to vector<2x128xf32>
    %587 = arith.subf %586, %580 : vector<2x128xf32>
    %588 = arith.mulf %587, %585 : vector<2x128xf32>
    %589 = arith.mulf %580, %566 : vector<2x128xf32>
    %590 = arith.addf %588, %589 : vector<2x128xf32>
    %591 = vector.extract_strided_slice %421 {offsets = [14, 0], sizes = [2, 384], strides = [1, 1]} : vector<16x384xf32> to vector<2x384xf32>
    %cst_106 = arith.constant dense<0.000000e+00> : vector<2x384xf32>
    %592 = tpu.matmul %590, %414, %cst_106 {dimension_numbers = #tpu.dot_dimension_numbers<[1], [0], [0], [1], [0, 0, 1, 1], [], []>} : vector<2x128xf32>, vector<128x384xf32>, vector<2x384xf32> -> vector<2x384xf32>
    %593 = vector.broadcast %418 : vector<1x384xf32> to vector<2x384xf32>
    %594 = arith.addf %592, %593 : vector<2x384xf32>
    %595 = vector.extract_strided_slice %591 {offsets = [0, 0], sizes = [2, 256], strides = [1, 1]} : vector<2x384xf32> to vector<2x256xf32>
    %596 = vector.extract_strided_slice %594 {offsets = [0, 0], sizes = [2, 256], strides = [1, 1]} : vector<2x384xf32> to vector<2x256xf32>
    %597 = arith.addf %595, %596 : vector<2x256xf32>
    %598 = arith.negf %597 : vector<2x256xf32>
    %599 = math.exp %598 : vector<2x256xf32>
    %cst_107 = arith.constant 1.000000e+00 : f32
    %600 = vector.broadcast %cst_107 : f32 to vector<2x256xf32>
    %601 = arith.addf %600, %599 : vector<2x256xf32>
    %602 = arith.divf %600, %601 : vector<2x256xf32>
    %603 = vector.extract_strided_slice %602 {offsets = [0, 0], sizes = [2, 128], strides = [1, 1]} : vector<2x256xf32> to vector<2x128xf32>
    %604 = vector.extract_strided_slice %602 {offsets = [0, 128], sizes = [2, 128], strides = [1, 1]} : vector<2x256xf32> to vector<2x128xf32>
    %605 = vector.extract_strided_slice %591 {offsets = [0, 256], sizes = [2, 128], strides = [1, 1]} : vector<2x384xf32> to vector<2x128xf32>
    %606 = vector.extract_strided_slice %594 {offsets = [0, 256], sizes = [2, 128], strides = [1, 1]} : vector<2x384xf32> to vector<2x128xf32>
    %607 = arith.mulf %603, %606 : vector<2x128xf32>
    %608 = arith.addf %605, %607 : vector<2x128xf32>
    %609 = math.tanh %608 : vector<2x128xf32>
    %cst_108 = arith.constant 1.000000e+00 : f32
    %610 = vector.broadcast %cst_108 : f32 to vector<2x128xf32>
    %611 = arith.subf %610, %604 : vector<2x128xf32>
    %612 = arith.mulf %611, %609 : vector<2x128xf32>
    %613 = arith.mulf %604, %590 : vector<2x128xf32>
    %614 = arith.addf %612, %613 : vector<2x128xf32>
    %615 = tpu.concatenate %446, %470, %494, %518, %542, %566, %590, %614 in 0 : vector<2x128xf32>, vector<2x128xf32>, vector<2x128xf32>, vector<2x128xf32>, vector<2x128xf32>, vector<2x128xf32>, vector<2x128xf32>, vector<2x128xf32> -> vector<16x128xf32>
    %c0_109 = arith.constant 0 : index
    %c0_110 = arith.constant 0 : index
    %616 = vector.load %arg3[%c0_109, %c0_110] : memref<129x128xf32, #tpu.memory_space<vmem>>, vector<128x128xf32>
    %c128 = arith.constant 128 : index
    %c0_111 = arith.constant 0 : index
    %617 = vector.load %arg3[%c128, %c0_111] : memref<129x128xf32, #tpu.memory_space<vmem>>, vector<1x128xf32>
    %cst_112 = arith.constant dense<0.000000e+00> : vector<16x128xf32>
    %618 = tpu.matmul %615, %616, %cst_112 {dimension_numbers = #tpu.dot_dimension_numbers<[1], [0], [0], [1], [0, 0, 1, 1], [], []>} : vector<16x128xf32>, vector<128x128xf32>, vector<16x128xf32> -> vector<16x128xf32>
    %619 = vector.broadcast %617 : vector<1x128xf32> to vector<16x128xf32>
    %620 = arith.addf %618, %619 : vector<16x128xf32>
    %c0_113 = arith.constant 0 : index
    %c0_114 = arith.constant 0 : index
    %621 = vector.load %arg4[%c0_113, %c0_114] : memref<16x128xf32, #tpu.memory_space<vmem>>, vector<16x128xf32>
    tpu.vector_store %arg4[%c0_113, %c0_114], %620 {strides = array<i32>} : memref<16x128xf32, #tpu.memory_space<vmem>>, vector<16x128xf32>,
    return
  }
}

</mosaic_0001>

<llo_original>
// kernel: gru_model_forward.1
$region0: #{gru_model_forward.1}
  #allocation0 [shape = 'u32[]', space=smem, size = 0x4, offset = 0x4, fixed_abs, tag = 'smem constant byte address 0x4 - core index']
  #allocation1 [shape = 'u32[144,128]{1,0:T(1,128)}', space=vmem, size = 0x12000, scoped, tag = 'internal scratch']
  %s0 = inlined_call_operand.vmem [shape: f32[16,128], index: 0, kind: input, shape index: {}]
  %s1 = inlined_call_operand.hbm [shape: f32[6,128,384], index: 1, kind: input, shape index: {}]
  %s2 = inlined_call_operand.hbm [shape: f32[6,1,384], index: 2, kind: input, shape index: {}]
  %s3 = inlined_call_operand.hbm [shape: f32[129,128], index: 3, kind: input, shape index: {}]
  %s4 = inlined_call_operand.vmem [shape: f32[16,128], index: 4, kind: output, shape index: {}]
  %s5 = sld [smem:[#allocation0]]
  $region38: #{gru_model_forward.1} parent=0
    _
  %s7 = ssub.s32 1, %s5
  %s8 = scalar_select 0, %s7, %s5
  $region1: #{gru_model_forward.1} parent=0
    #allocation2 [shape = 'u8[1179648]{0}', space=vmem, size = 0x120000, scoped, tag = 'input window, operand 1, single buffered']
    #allocation3 [shape = 's32[1]{0}', space=sflag, size = 0x4, scoped, tag = 'scoped memory for gru_model_forward.1']
    #allocation4 [shape = 'u8[9216]{0}', space=vmem, size = 0x2400, scoped, tag = 'input window, operand 2, single buffered']
    #allocation5 [shape = 's32[1]{0}', space=sflag, size = 0x4, scoped, tag = 'scoped memory for gru_model_forward.1']
    #allocation6 [shape = 'u8[69632]{0}', space=vmem, size = 0x11000, scoped, tag = 'input window, operand 3, single buffered']
    %9 = vsyncpa [#allocation3], 0
    %10 = vsyncpa [#allocation5], 0
    // Predicated region
    $region2: #{gru_model_forward.1} parent=1 // pred_check
      _
    $region3: #{gru_model_forward.1} parent=1 // pred_check_branch
      %12 = sbr.rel (0) target = $region5
    $region4: #{gru_model_forward.1} parent=1 // pred_region
      _
    $region5: #{gru_model_forward.1} parent=1 // pred_fallthru
      _
    // Predicated region
    $region6: #{gru_model_forward.1} parent=1 // pred_check
      _
    $region7: #{gru_model_forward.1} parent=1 // pred_check_branch
      %14 = sbr.rel (0) target = $region9
    $region8: #{gru_model_forward.1} parent=1 // pred_region
      %s16 = ssub.s32 36864, 36864
      %17 = vsyncadd [#allocation3], %s16
      %s18 = sshll.u32 [#allocation2], 4
      %s19 = int_to_ptr.vmem [resolvable:$true] %s18
      %24 = dma.hbm_to_vmem [thread:$0]  %s1, 36864, %s19, [#allocation3], 384, 384, 24
    $region9: #{gru_model_forward.1} parent=1 // pred_fallthru
      _
    // Predicated region
    $region10: #{gru_model_forward.1} parent=1 // pred_check
      _
    $region11: #{gru_model_forward.1} parent=1 // pred_check_branch
      %26 = sbr.rel (0) target = $region13
    $region12: #{gru_model_forward.1} parent=1 // pred_region
      %s28 = ssub.s32 288, 288
      %29 = vsyncadd [#allocation5], %s28
      %s30 = sshll.u32 [#allocation4], 4
      %s31 = int_to_ptr.vmem [resolvable:$true] %s30
      %36 = dma.hbm_to_vmem [thread:$0]  %s2, 288, %s31, [#allocation5], 48, 48, 3
    $region13: #{gru_model_forward.1} parent=1 // pred_fallthru
      _
    // Predicated region
    $region14: #{gru_model_forward.1} parent=1 // pred_check
      _
    $region15: #{gru_model_forward.1} parent=1 // pred_check_branch
      %38 = sbr.rel (0) target = $region17
    $region16: #{gru_model_forward.1} parent=1 // pred_region
      %s40 = ssub.s32 2176, 2176
      %41 = vsyncadd [#allocation5], %s40
      %s42 = sshll.u32 [#allocation6], 4
      %s43 = int_to_ptr.vmem [resolvable:$true] %s42
      %48 = dma.hbm_to_vmem [thread:$0]  %s3, 2176, %s43, [#allocation5], 128, 128, 8
    $region17: #{gru_model_forward.1} parent=1 // pred_fallthru
      _
    // Predicated region
    $region18: #{gru_model_forward.1} parent=1 // pred_check
      _
    $region19: #{gru_model_forward.1} parent=1 // pred_check_branch
      %50 = sbr.rel (0) target = $region21
    $region20: #{gru_model_forward.1} parent=1 // pred_region
      %51 = dma.done [#allocation3], 36864
    $region21: #{gru_model_forward.1} parent=1 // pred_fallthru
      _
    // Predicated region
    $region22: #{gru_model_forward.1} parent=1 // pred_check
      _
    $region23: #{gru_model_forward.1} parent=1 // pred_check_branch
      %53 = sbr.rel (0) target = $region25
    $region24: #{gru_model_forward.1} parent=1 // pred_region
      %54 = dma.done [#allocation5], 288
    $region25: #{gru_model_forward.1} parent=1 // pred_fallthru
      _
    // Predicated region
    $region26: #{gru_model_forward.1} parent=1 // pred_check
      _
    $region27: #{gru_model_forward.1} parent=1 // pred_check_branch
      %56 = sbr.rel (0) target = $region29
    $region28: #{gru_model_forward.1} parent=1 // pred_region
      %57 = dma.done [#allocation5], 2176
    $region29: #{gru_model_forward.1} parent=1 // pred_fallthru
      _
    %v58 = vld [vmem:[%s0] sm:$0xff]
    %v59 = vld [vmem:[%s0 + $0x8] sm:$0xff]
    %v60 = vld [vmem:[#allocation2] sm:$0xff]
    %v61 = vld [vmem:[#allocation2 + $0x8] sm:$0xff]
    %v62 = vld [vmem:[#allocation2 + $0x10] sm:$0xff]
    %v63 = vld [vmem:[#allocation2 + $0x18] sm:$0xff]
    %v64 = vld [vmem:[#allocation2 + $0x20] sm:$0xff]
    %v65 = vld [vmem:[#allocation2 + $0x28] sm:$0xff]
    %v66 = vld [vmem:[#allocation2 + $0x30] sm:$0xff]
    %v67 = vld [vmem:[#allocation2 + $0x38] sm:$0xff]
    %v68 = vld [vmem:[#allocation2 + $0x40] sm:$0xff]
    %v69 = vld [vmem:[#allocation2 + $0x48] sm:$0xff]
    %v70 = vld [vmem:[#allocation2 + $0x50] sm:$0xff]
    %v71 = vld [vmem:[#allocation2 + $0x58] sm:$0xff]
    %v72 = vld [vmem:[#allocation2 + $0x60] sm:$0xff]
    %v73 = vld [vmem:[#allocation2 + $0x68] sm:$0xff]
    %v74 = vld [vmem:[#allocation2 + $0x70] sm:$0xff]
    %v75 = vld [vmem:[#allocation2 + $0x78] sm:$0xff]
    %v76 = vld [vmem:[#allocation2 + $0x80] sm:$0xff]
    %v77 = vld [vmem:[#allocation2 + $0x88] sm:$0xff]
    %v78 = vld [vmem:[#allocation2 + $0x90] sm:$0xff]
    %v79 = vld [vmem:[#allocation2 + $0x98] sm:$0xff]
    %v80 = vld [vmem:[#allocation2 + $0xa0] sm:$0xff]
    %v81 = vld [vmem:[#allocation2 + $0xa8] sm:$0xff]
    %v82 = vld [vmem:[#allocation2 + $0xb0] sm:$0xff]
    %v83 = vld [vmem:[#allocation2 + $0xb8] sm:$0xff]
    %v84 = vld [vmem:[#allocation2 + $0xc0] sm:$0xff]
    %v85 = vld [vmem:[#allocation2 + $0xc8] sm:$0xff]
    %v86 = vld [vmem:[#allocation2 + $0xd0] sm:$0xff]
    %v87 = vld [vmem:[#allocation2 + $0xd8] sm:$0xff]
    %v88 = vld [vmem:[#allocation2 + $0xe0] sm:$0xff]
    %v89 = vld [vmem:[#allocation2 + $0xe8] sm:$0xff]
    %v90 = vld [vmem:[#allocation2 + $0xf0] sm:$0xff]
    %v91 = vld [vmem:[#allocation2 + $0xf8] sm:$0xff]
    %v92 = vld [vmem:[#allocation2 + $0x100] sm:$0xff]
    %v93 = vld [vmem:[#allocation2 + $0x108] sm:$0xff]
    %v94 = vld [vmem:[#allocation2 + $0x110] sm:$0xff]
    %v95 = vld [vmem:[#allocation2 + $0x118] sm:$0xff]
    %v96 = vld [vmem:[#allocation2 + $0x120] sm:$0xff]
    %v97 = vld [vmem:[#allocation2 + $0x128] sm:$0xff]
    %v98 = vld [vmem:[#allocation2 + $0x130] sm:$0xff]
    %v99 = vld [vmem:[#allocation2 + $0x138] sm:$0xff]
    %v100 = vld [vmem:[#allocation2 + $0x140] sm:$0xff]
    %v101 = vld [vmem:[#allocation2 + $0x148] sm:$0xff]
    %v102 = vld [vmem:[#allocation2 + $0x150] sm:$0xff]
    %v103 = vld [vmem:[#allocation2 + $0x158] sm:$0xff]
    %v104 = vld [vmem:[#allocation2 + $0x160] sm:$0xff]
    %v105 = vld [vmem:[#allocation2 + $0x168] sm:$0xff]
    %v106 = vld [vmem:[#allocation2 + $0x170] sm:$0xff]
    %v107 = vld [vmem:[#allocation2 + $0x178] sm:$0xff]
    %s108 = scalar_lea.vmem [#allocation2], 384
    %v109 = vld [vmem:[%s108] sm:$0xff]
    %v110 = vld [vmem:[%s108 + $0x8] sm:$0xff]
    %v111 = vld [vmem:[%s108 + $0x10] sm:$0xff]
    %v112 = vld [vmem:[%s108 + $0x18] sm:$0xff]
    %v113 = vld [vmem:[%s108 + $0x20] sm:$0xff]
    %v114 = vld [vmem:[%s108 + $0x28] sm:$0xff]
    %v115 = vld [vmem:[%s108 + $0x30] sm:$0xff]
    %v116 = vld [vmem:[%s108 + $0x38] sm:$0xff]
    %v117 = vld [vmem:[%s108 + $0x40] sm:$0xff]
    %v118 = vld [vmem:[%s108 + $0x48] sm:$0xff]
    %v119 = vld [vmem:[%s108 + $0x50] sm:$0xff]
    %v120 = vld [vmem:[%s108 + $0x58] sm:$0xff]
    %v121 = vld [vmem:[%s108 + $0x60] sm:$0xff]
    %v122 = vld [vmem:[%s108 + $0x68] sm:$0xff]
    %v123 = vld [vmem:[%s108 + $0x70] sm:$0xff]
    %v124 = vld [vmem:[%s108 + $0x78] sm:$0xff]
    %v125 = vld [vmem:[%s108 + $0x80] sm:$0xff]
    %v126 = vld [vmem:[%s108 + $0x88] sm:$0xff]
    %v127 = vld [vmem:[%s108 + $0x90] sm:$0xff]
    %v128 = vld [vmem:[%s108 + $0x98] sm:$0xff]
    %v129 = vld [vmem:[%s108 + $0xa0] sm:$0xff]
    %v130 = vld [vmem:[%s108 + $0xa8] sm:$0xff]
    %v131 = vld [vmem:[%s108 + $0xb0] sm:$0xff]
    %v132 = vld [vmem:[%s108 + $0xb8] sm:$0xff]
    %v133 = vld [vmem:[%s108 + $0xc0] sm:$0xff]
    %v134 = vld [vmem:[%s108 + $0xc8] sm:$0xff]
    %v135 = vld [vmem:[%s108 + $0xd0] sm:$0xff]
    %v136 = vld [vmem:[%s108 + $0xd8] sm:$0xff]
    %v137 = vld [vmem:[%s108 + $0xe0] sm:$0xff]
    %v138 = vld [vmem:[%s108 + $0xe8] sm:$0xff]
    %v139 = vld [vmem:[%s108 + $0xf0] sm:$0xff]
    %v140 = vld [vmem:[%s108 + $0xf8] sm:$0xff]
    %v141 = vld [vmem:[%s108 + $0x100] sm:$0xff]
    %v142 = vld [vmem:[%s108 + $0x108] sm:$0xff]
    %v143 = vld [vmem:[%s108 + $0x110] sm:$0xff]
    %v144 = vld [vmem:[%s108 + $0x118] sm:$0xff]
    %v145 = vld [vmem:[%s108 + $0x120] sm:$0xff]
    %v146 = vld [vmem:[%s108 + $0x128] sm:$0xff]
    %v147 = vld [vmem:[%s108 + $0x130] sm:$0xff]
    %v148 = vld [vmem:[%s108 + $0x138] sm:$0xff]
    %v149 = vld [vmem:[%s108 + $0x140] sm:$0xff]
    %v150 = vld [vmem:[%s108 + $0x148] sm:$0xff]
    %v151 = vld [vmem:[%s108 + $0x150] sm:$0xff]
    %v152 = vld [vmem:[%s108 + $0x158] sm:$0xff]
    %v153 = vld [vmem:[%s108 + $0x160] sm:$0xff]
    %v154 = vld [vmem:[%s108 + $0x168] sm:$0xff]
    %v155 = vld [vmem:[%s108 + $0x170] sm:$0xff]
    %v156 = vld [vmem:[%s108 + $0x178] sm:$0xff]
    %v157 = vld [vmem:[#allocation4] sm:$0x7]
    %s158 = scalar_lea.vmem [#allocation4], 3
    %v159 = vld [vmem:[%s158] sm:$0x7]
    %v161 = vlaneseq
    %v162 = vshrl.u32 %v161, 7
    %v163 = vsub.s32 0, %v162
    %v164 = vrot.slane %v157, %v163
    %v165 = vlaneseq
    %v166 = vshrl.u32 %v165, 7
    %v167 = vsub.s32 1, %v166
    %v168 = vrot.slane %v157, %v167
    %v169 = vlaneseq
    %v170 = vshrl.u32 %v169, 7
    %v171 = vsub.s32 2, %v170
    %v172 = vrot.slane %v157, %v171
    %176 = vmatprep.subr.mxu0 %v106
    %177 = vmatpush1.msra.mxu0 %v105
    %178 = vmatprep.subr.mxu0 %v103
    %179 = vmatpush1.msra.mxu0 %v102
    %180 = vmatprep.subr.mxu0 %v100
    %181 = vmatpush1.msra.mxu0 %v99
    %182 = vmatprep.subr.mxu0 %v97
    %183 = vmatpush1.msra.mxu0 %v96
    %184 = vmatprep.subr.mxu0 %v94
    %185 = vmatpush1.msra.mxu0 %v93
    %186 = vmatprep.subr.mxu0 %v91
    %187 = vmatpush1.msra.mxu0 %v90
    %188 = vmatprep.subr.mxu0 %v88
    %189 = vmatpush1.msra.mxu0 %v87
    %190 = vmatprep.subr.mxu0 %v85
    %191 = vmatpush1.msra.mxu0 %v84
    %192 = vmatprep.subr.mxu0 %v82
    %193 = vmatpush1.msra.mxu0 %v81
    %194 = vmatprep.subr.mxu0 %v79
    %195 = vmatpush1.msra.mxu0 %v78
    %196 = vmatprep.subr.mxu0 %v76
    %197 = vmatpush1.msra.mxu0 %v75
    %198 = vmatprep.subr.mxu0 %v73
    %199 = vmatpush1.msra.mxu0 %v72
    %200 = vmatprep.subr.mxu0 %v70
    %201 = vmatpush1.msra.mxu0 %v69
    %202 = vmatprep.subr.mxu0 %v67
    %203 = vmatpush1.msra.mxu0 %v66
    %204 = vmatprep.subr.mxu0 %v64
    %205 = vmatpush1.msra.mxu0 %v63
    %206 = vmatprep.subr.mxu0 %v61
    %207 = vmatpush1.msra.mxu0 %v60
    %208 = vmatprep.subr.mxu0 0.0
    %209 = vmatpush2.msra.mxu0 0.0
    %210 = vmatprep.subr.mxu0 0.0
    %211 = vmatpush2.msra.mxu0 0.0
    %212 = vmatprep.subr.mxu0 0.0
    %213 = vmatpush2.msra.mxu0 0.0
    %214 = vmatprep.subr.mxu0 0.0
    %215 = vmatpush2.msra.mxu0 0.0
    %216 = vmatprep.subr.mxu0 0.0
    %217 = vmatpush2.msra.mxu0 0.0
    %218 = vmatprep.subr.mxu0 0.0
    %219 = vmatpush2.msra.mxu0 0.0
    %220 = vmatprep.subr.mxu0 0.0
    %221 = vmatpush2.msra.mxu0 0.0
    %222 = vmatprep.subr.mxu0 0.0
    %223 = vmatpush2.msra.mxu0 0.0
    %224 = vmatprep.subr.mxu0 0.0
    %225 = vmatpush2.msra.mxu0 0.0
    %226 = vmatprep.subr.mxu0 0.0
    %227 = vmatpush2.msra.mxu0 0.0
    %228 = vmatprep.subr.mxu0 0.0
    %229 = vmatpush2.msra.mxu0 0.0
    %230 = vmatprep.subr.mxu0 0.0
    %231 = vmatpush2.msra.mxu0 0.0
    %232 = vmatprep.subr.mxu0 0.0
    %233 = vmatpush2.msra.mxu0 0.0
    %234 = vmatprep.subr.mxu0 0.0
    %235 = vmatpush2.msra.mxu0 0.0
    %236 = vmatprep.subr.mxu0 0.0
    %237 = vmatpush2.msra.mxu0 0.0
    %238 = vmatprep.subr.mxu0 0.0
    %239 = vmatpush2.msra.mxu0 0.0
    %240 = vmatprep.mubr.f32.mxu0 0.0
    %241 = vmatmul.mubr.f32.gmra.mxu0 %v58
    %v242 = vpop.f32.mrf.mxu0
    %v243 = vadd.f32 %v164, %v242
    %v244 = vpop.f32.mrf.mxu0
    %v245 = vadd.f32 %v168, %v244
    %246 = vmatprep.mubr.f32.mxu0 0.0
    %247 = vmatmul.mubr.f32.gmra.mxu0 %v59
    %v248 = vpop.f32.mrf.mxu0
    %v249 = vadd.f32 %v164, %v248
    %v250 = vpop.f32.mrf.mxu0
    %v251 = vadd.f32 %v168, %v250
    %252 = vdwg.mxu0
    %253 = vmatprep.subr.mxu0 0.0
    %254 = vmatpush1.msra.mxu0 %v107
    %255 = vmatprep.subr.mxu0 0.0
    %256 = vmatpush1.msra.mxu0 %v104
    %257 = vmatprep.subr.mxu0 0.0
    %258 = vmatpush1.msra.mxu0 %v101
    %259 = vmatprep.subr.mxu0 0.0
    %260 = vmatpush1.msra.mxu0 %v98
    %261 = vmatprep.subr.mxu0 0.0
    %262 = vmatpush1.msra.mxu0 %v95
    %263 = vmatprep.subr.mxu0 0.0
    %264 = vmatpush1.msra.mxu0 %v92
    %265 = vmatprep.subr.mxu0 0.0
    %266 = vmatpush1.msra.mxu0 %v89
    %267 = vmatprep.subr.mxu0 0.0
    %268 = vmatpush1.msra.mxu0 %v86
    %269 = vmatprep.subr.mxu0 0.0
    %270 = vmatpush1.msra.mxu0 %v83
    %271 = vmatprep.subr.mxu0 0.0
    %272 = vmatpush1.msra.mxu0 %v80
    %273 = vmatprep.subr.mxu0 0.0
    %274 = vmatpush1.msra.mxu0 %v77
    %275 = vmatprep.subr.mxu0 0.0
    %276 = vmatpush1.msra.mxu0 %v74
    %277 = vmatprep.subr.mxu0 0.0
    %278 = vmatpush1.msra.mxu0 %v71
    %279 = vmatprep.subr.mxu0 0.0
    %280 = vmatpush1.msra.mxu0 %v68
    %281 = vmatprep.subr.mxu0 0.0
    %282 = vmatpush1.msra.mxu0 %v65
    %283 = vmatprep.subr.mxu0 0.0
    %284 = vmatpush1.msra.mxu0 %v62
    %285 = vmatprep.subr.mxu0 0.0
    %286 = vmatpush2.msra.mxu0 0.0
    %287 = vmatprep.subr.mxu0 0.0
    %288 = vmatpush2.msra.mxu0 0.0
    %289 = vmatprep.subr.mxu0 0.0
    %290 = vmatpush2.msra.mxu0 0.0
    %291 = vmatprep.subr.mxu0 0.0
    %292 = vmatpush2.msra.mxu0 0.0
    %293 = vmatprep.subr.mxu0 0.0
    %294 = vmatpush2.msra.mxu0 0.0
    %295 = vmatprep.subr.mxu0 0.0
    %296 = vmatpush2.msra.mxu0 0.0
    %297 = vmatprep.subr.mxu0 0.0
    %298 = vmatpush2.msra.mxu0 0.0
    %299 = vmatprep.subr.mxu0 0.0
    %300 = vmatpush2.msra.mxu0 0.0
    %301 = vmatprep.subr.mxu0 0.0
    %302 = vmatpush2.msra.mxu0 0.0
    %303 = vmatprep.subr.mxu0 0.0
    %304 = vmatpush2.msra.mxu0 0.0
    %305 = vmatprep.subr.mxu0 0.0
    %306 = vmatpush2.msra.mxu0 0.0
    %307 = vmatprep.subr.mxu0 0.0
    %308 = vmatpush2.msra.mxu0 0.0
    %309 = vmatprep.subr.mxu0 0.0
    %310 = vmatpush2.msra.mxu0 0.0
    %311 = vmatprep.subr.mxu0 0.0
    %312 = vmatpush2.msra.mxu0 0.0
    %313 = vmatprep.subr.mxu0 0.0
    %314 = vmatpush2.msra.mxu0 0.0
    %315 = vmatprep.subr.mxu0 0.0
    %316 = vmatpush2.msra.mxu0 0.0
    %317 = vmatprep.mubr.f32.mxu0 0.0
    %318 = vmatmul.mubr.f32.gmra.mxu0 %v58
    %v319 = vpop.f32.mrf.mxu0
    %v320 = vadd.f32 %v172, %v319
    %v321 = vpop.f32.mrf.mxu0
    %322 = vmatprep.mubr.f32.mxu0 0.0
    %323 = vmatmul.mubr.f32.gmra.mxu0 %v59
    %v324 = vpop.f32.mrf.mxu0
    %v325 = vadd.f32 %v172, %v324
    %v326 = vpop.f32.mrf.mxu0
    %327 = vdwg.mxu0
    %v329 = vlaneseq
    %v330 = vshrl.u32 %v329, 7
    %v331 = vsub.s32 0, %v330
    %v332 = vrot.slane %v159, %v331
    %v333 = vlaneseq
    %v334 = vshrl.u32 %v333, 7
    %v335 = vsub.s32 1, %v334
    %v336 = vrot.slane %v159, %v335
    %v337 = vlaneseq
    %v338 = vshrl.u32 %v337, 7
    %v339 = vsub.s32 2, %v338
    %v340 = vrot.slane %v159, %v339
    %344 = vmatprep.subr.mxu0 %v155
    %345 = vmatpush1.msra.mxu0 %v154
    %346 = vmatprep.subr.mxu0 %v152
    %347 = vmatpush1.msra.mxu0 %v151
    %348 = vmatprep.subr.mxu0 %v149
    %349 = vmatpush1.msra.mxu0 %v148
    %350 = vmatprep.subr.mxu0 %v146
    %351 = vmatpush1.msra.mxu0 %v145
    %352 = vmatprep.subr.mxu0 %v143
    %353 = vmatpush1.msra.mxu0 %v142
    %354 = vmatprep.subr.mxu0 %v140
    %355 = vmatpush1.msra.mxu0 %v139
    %356 = vmatprep.subr.mxu0 %v137
    %357 = vmatpush1.msra.mxu0 %v136
    %358 = vmatprep.subr.mxu0 %v134
    %359 = vmatpush1.msra.mxu0 %v133
    %360 = vmatprep.subr.mxu0 %v131
    %361 = vmatpush1.msra.mxu0 %v130
    %362 = vmatprep.subr.mxu0 %v128
    %363 = vmatpush1.msra.mxu0 %v127
    %364 = vmatprep.subr.mxu0 %v125
    %365 = vmatpush1.msra.mxu0 %v124
    %366 = vmatprep.subr.mxu0 %v122
    %367 = vmatpush1.msra.mxu0 %v121
    %368 = vmatprep.subr.mxu0 %v119
    %369 = vmatpush1.msra.mxu0 %v118
    %370 = vmatprep.subr.mxu0 %v116
    %371 = vmatpush1.msra.mxu0 %v115
    %372 = vmatprep.subr.mxu0 %v113
    %373 = vmatpush1.msra.mxu0 %v112
    %374 = vmatprep.subr.mxu0 %v110
    %375 = vmatpush1.msra.mxu0 %v109
    %376 = vmatprep.subr.mxu0 0.0
    %377 = vmatpush2.msra.mxu0 0.0
    %378 = vmatprep.subr.mxu0 0.0
    %379 = vmatpush2.msra.mxu0 0.0
    %380 = vmatprep.subr.mxu0 0.0
    %381 = vmatpush2.msra.mxu0 0.0
    %382 = vmatprep.subr.mxu0 0.0
    %383 = vmatpush2.msra.mxu0 0.0
    %384 = vmatprep.subr.mxu0 0.0
    %385 = vmatpush2.msra.mxu0 0.0
    %386 = vmatprep.subr.mxu0 0.0
    %387 = vmatpush2.msra.mxu0 0.0
    %388 = vmatprep.subr.mxu0 0.0
    %389 = vmatpush2.msra.mxu0 0.0
    %390 = vmatprep.subr.mxu0 0.0
    %391 = vmatpush2.msra.mxu0 0.0
    %392 = vmatprep.subr.mxu0 0.0
    %393 = vmatpush2.msra.mxu0 0.0
    %394 = vmatprep.subr.mxu0 0.0
    %395 = vmatpush2.msra.mxu0 0.0
    %396 = vmatprep.subr.mxu0 0.0
    %397 = vmatpush2.msra.mxu0 0.0
    %398 = vmatprep.subr.mxu0 0.0
    %399 = vmatpush2.msra.mxu0 0.0
    %400 = vmatprep.subr.mxu0 0.0
    %401 = vmatpush2.msra.mxu0 0.0
    %402 = vmatprep.subr.mxu0 0.0
    %403 = vmatpush2.msra.mxu0 0.0
    %404 = vmatprep.subr.mxu0 0.0
    %405 = vmatpush2.msra.mxu0 0.0
    %406 = vmatprep.subr.mxu0 0.0
    %407 = vmatpush2.msra.mxu0 0.0
    %408 = vmatprep.mubr.f32.mxu0 0.0
    %409 = vmatmul.mubr.f32.gmra.mxu0 0.0
    %v410 = vpop.f32.mrf.mxu0
    %v411 = vadd.f32 %v332, %v410
    %v412 = vpop.f32.mrf.mxu0
    %v413 = vadd.f32 %v336, %v412
    %414 = vdwg.mxu0
    %415 = vmatprep.subr.mxu0 0.0
    %416 = vmatpush1.msra.mxu0 %v156
    %417 = vmatprep.subr.mxu0 0.0
    %418 = vmatpush1.msra.mxu0 %v153
    %419 = vmatprep.subr.mxu0 0.0
    %420 = vmatpush1.msra.mxu0 %v150
    %421 = vmatprep.subr.mxu0 0.0
    %422 = vmatpush1.msra.mxu0 %v147
    %423 = vmatprep.subr.mxu0 0.0
    %424 = vmatpush1.msra.mxu0 %v144
    %425 = vmatprep.subr.mxu0 0.0
    %426 = vmatpush1.msra.mxu0 %v141
    %427 = vmatprep.subr.mxu0 0.0
    %428 = vmatpush1.msra.mxu0 %v138
    %429 = vmatprep.subr.mxu0 0.0
    %430 = vmatpush1.msra.mxu0 %v135
    %431 = vmatprep.subr.mxu0 0.0
    %432 = vmatpush1.msra.mxu0 %v132
    %433 = vmatprep.subr.mxu0 0.0
    %434 = vmatpush1.msra.mxu0 %v129
    %435 = vmatprep.subr.mxu0 0.0
    %436 = vmatpush1.msra.mxu0 %v126
    %437 = vmatprep.subr.mxu0 0.0
    %438 = vmatpush1.msra.mxu0 %v123
    %439 = vmatprep.subr.mxu0 0.0
    %440 = vmatpush1.msra.mxu0 %v120
    %441 = vmatprep.subr.mxu0 0.0
    %442 = vmatpush1.msra.mxu0 %v117
    %443 = vmatprep.subr.mxu0 0.0
    %444 = vmatpush1.msra.mxu0 %v114
    %445 = vmatprep.subr.mxu0 0.0
    %446 = vmatpush1.msra.mxu0 %v111
    %447 = vmatprep.subr.mxu0 0.0
    %448 = vmatpush2.msra.mxu0 0.0
    %449 = vmatprep.subr.mxu0 0.0
    %450 = vmatpush2.msra.mxu0 0.0
    %451 = vmatprep.subr.mxu0 0.0
    %452 = vmatpush2.msra.mxu0 0.0
    %453 = vmatprep.subr.mxu0 0.0
    %454 = vmatpush2.msra.mxu0 0.0
    %455 = vmatprep.subr.mxu0 0.0
    %456 = vmatpush2.msra.mxu0 0.0
    %457 = vmatprep.subr.mxu0 0.0
    %458 = vmatpush2.msra.mxu0 0.0
    %459 = vmatprep.subr.mxu0 0.0
    %460 = vmatpush2.msra.mxu0 0.0
    %461 = vmatprep.subr.mxu0 0.0
    %462 = vmatpush2.msra.mxu0 0.0
    %463 = vmatprep.subr.mxu0 0.0
    %464 = vmatpush2.msra.mxu0 0.0
    %465 = vmatprep.subr.mxu0 0.0
    %466 = vmatpush2.msra.mxu0 0.0
    %467 = vmatprep.subr.mxu0 0.0
    %468 = vmatpush2.msra.mxu0 0.0
    %469 = vmatprep.subr.mxu0 0.0
    %470 = vmatpush2.msra.mxu0 0.0
    %471 = vmatprep.subr.mxu0 0.0
    %472 = vmatpush2.msra.mxu0 0.0
    %473 = vmatprep.subr.mxu0 0.0
    %474 = vmatpush2.msra.mxu0 0.0
    %475 = vmatprep.subr.mxu0 0.0
    %476 = vmatpush2.msra.mxu0 0.0
    %477 = vmatprep.subr.mxu0 0.0
    %478 = vmatpush2.msra.mxu0 0.0
    %479 = vmatprep.mubr.f32.mxu0 0.0
    %480 = vmatmul.mubr.f32.gmra.mxu0 0.0
    %v481 = vpop.f32.mrf.mxu0
    %v482 = vadd.f32 %v340, %v481
    %v483 = vpop.f32.mrf.mxu0
    %484 = vdwg.mxu0
    %v485 = vadd.f32 %v243, %v411
    %v486 = vadd.f32 %v245, %v413
    %v487 = vxor.u32 %v485, 2147483648
    %v488 = vxor.u32 %v486, 2147483648
    %v489 = vmul.f32 %v487, 1.442695
    %v490 = vpow.pop %v489
    %v491 = vmul.f32 %v488, 1.442695
    %v492 = vpow.pop %v491
    %v493 = vadd.f32 %v490, 1.0
    %v494 = vadd.f32 %v492, 1.0
    %v495 = vrcp.pop %v493
    %v496 = vmul.f32 1.0, %v495
    %v497 = vrcp.pop %v494
    %v498 = vmul.f32 1.0, %v497
    %v499 = vmul.f32 %v496, %v482
    %v500 = vadd.f32 %v320, %v499
    %v501 = vtanh.pop %v500
    %v502 = vsub.f32 1.0, %v498
    %v503 = vmul.f32 %v502, %v501
    %v504 = vmul.f32 %v498, 0.0
    %v505 = vadd.f32 %v503, %v504
    %506 = vmatprep.subr.mxu0 %v155
    %507 = vmatpush1.msra.mxu0 %v154
    %508 = vmatprep.subr.mxu0 %v152
    %509 = vmatpush1.msra.mxu0 %v151
    %510 = vmatprep.subr.mxu0 %v149
    %511 = vmatpush1.msra.mxu0 %v148
    %512 = vmatprep.subr.mxu0 %v146
    %513 = vmatpush1.msra.mxu0 %v145
    %514 = vmatprep.subr.mxu0 %v143
    %515 = vmatpush1.msra.mxu0 %v142
    %516 = vmatprep.subr.mxu0 %v140
    %517 = vmatpush1.msra.mxu0 %v139
    %518 = vmatprep.subr.mxu0 %v137
    %519 = vmatpush1.msra.mxu0 %v136
    %520 = vmatprep.subr.mxu0 %v134
    %521 = vmatpush1.msra.mxu0 %v133
    %522 = vmatprep.subr.mxu0 %v131
    %523 = vmatpush1.msra.mxu0 %v130
    %524 = vmatprep.subr.mxu0 %v128
    %525 = vmatpush1.msra.mxu0 %v127
    %526 = vmatprep.subr.mxu0 %v125
    %527 = vmatpush1.msra.mxu0 %v124
    %528 = vmatprep.subr.mxu0 %v122
    %529 = vmatpush1.msra.mxu0 %v121
    %530 = vmatprep.subr.mxu0 %v119
    %531 = vmatpush1.msra.mxu0 %v118
    %532 = vmatprep.subr.mxu0 %v116
    %533 = vmatpush1.msra.mxu0 %v115
    %534 = vmatprep.subr.mxu0 %v113
    %535 = vmatpush1.msra.mxu0 %v112
    %536 = vmatprep.subr.mxu0 %v110
    %537 = vmatpush1.msra.mxu0 %v109
    %538 = vmatprep.subr.mxu0 0.0
    %539 = vmatpush2.msra.mxu0 0.0
    %540 = vmatprep.subr.mxu0 0.0
    %541 = vmatpush2.msra.mxu0 0.0
    %542 = vmatprep.subr.mxu0 0.0
    %543 = vmatpush2.msra.mxu0 0.0
    %544 = vmatprep.subr.mxu0 0.0
    %545 = vmatpush2.msra.mxu0 0.0
    %546 = vmatprep.subr.mxu0 0.0
    %547 = vmatpush2.msra.mxu0 0.0
    %548 = vmatprep.subr.mxu0 0.0
    %549 = vmatpush2.msra.mxu0 0.0
    %550 = vmatprep.subr.mxu0 0.0
    %551 = vmatpush2.msra.mxu0 0.0
    %552 = vmatprep.subr.mxu0 0.0
    %553 = vmatpush2.msra.mxu0 0.0
    %554 = vmatprep.subr.mxu0 0.0
    %555 = vmatpush2.msra.mxu0 0.0
    %556 = vmatprep.subr.mxu0 0.0
    %557 = vmatpush2.msra.mxu0 0.0
    %558 = vmatprep.subr.mxu0 0.0
    %559 = vmatpush2.msra.mxu0 0.0
    %560 = vmatprep.subr.mxu0 0.0
    %561 = vmatpush2.msra.mxu0 0.0
    %562 = vmatprep.subr.mxu0 0.0
    %563 = vmatpush2.msra.mxu0 0.0
    %564 = vmatprep.subr.mxu0 0.0
    %565 = vmatpush2.msra.mxu0 0.0
    %566 = vmatprep.subr.mxu0 0.0
    %567 = vmatpush2.msra.mxu0 0.0
    %568 = vmatprep.subr.mxu0 0.0
    %569 = vmatpush2.msra.mxu0 0.0
    %570 = vmatprep.mubr.f32.mxu0 0.0
    %571 = vmatmul.mubr.f32.gmra.mxu0 %v505
    %v572 = vpop.f32.mrf.mxu0
    %v573 = vadd.f32 %v332, %v572
    %v574 = vpop.f32.mrf.mxu0
    %v575 = vadd.f32 %v336, %v574
    %576 = vdwg.mxu0
    %577 = vmatprep.subr.mxu0 0.0
    %578 = vmatpush1.msra.mxu0 %v156
    %579 = vmatprep.subr.mxu0 0.0
    %580 = vmatpush1.msra.mxu0 %v153
    %581 = vmatprep.subr.mxu0 0.0
    %582 = vmatpush1.msra.mxu0 %v150
    %583 = vmatprep.subr.mxu0 0.0
    %584 = vmatpush1.msra.mxu0 %v147
    %585 = vmatprep.subr.mxu0 0.0
    %586 = vmatpush1.msra.mxu0 %v144
    %587 = vmatprep.subr.mxu0 0.0
    %588 = vmatpush1.msra.mxu0 %v141
    %589 = vmatprep.subr.mxu0 0.0
    %590 = vmatpush1.msra.mxu0 %v138
    %591 = vmatprep.subr.mxu0 0.0
    %592 = vmatpush1.msra.mxu0 %v135
    %593 = vmatprep.subr.mxu0 0.0
    %594 = vmatpush1.msra.mxu0 %v132
    %595 = vmatprep.subr.mxu0 0.0
    %596 = vmatpush1.msra.mxu0 %v129
    %597 = vmatprep.subr.mxu0 0.0
    %598 = vmatpush1.msra.mxu0 %v126
    %599 = vmatprep.subr.mxu0 0.0
    %600 = vmatpush1.msra.mxu0 %v123
    %601 = vmatprep.subr.mxu0 0.0
    %602 = vmatpush1.msra.mxu0 %v120
    %603 = vmatprep.subr.mxu0 0.0
    %604 = vmatpush1.msra.mxu0 %v117
    %605 = vmatprep.subr.mxu0 0.0
    %606 = vmatpush1.msra.mxu0 %v114
    %607 = vmatprep.subr.mxu0 0.0
    %608 = vmatpush1.msra.mxu0 %v111
    %609 = vmatprep.subr.mxu0 0.0
    %610 = vmatpush2.msra.mxu0 0.0
    %611 = vmatprep.subr.mxu0 0.0
    %612 = vmatpush2.msra.mxu0 0.0
    %613 = vmatprep.subr.mxu0 0.0
    %614 = vmatpush2.msra.mxu0 0.0
    %615 = vmatprep.subr.mxu0 0.0
    %616 = vmatpush2.msra.mxu0 0.0
    %617 = vmatprep.subr.mxu0 0.0
    %618 = vmatpush2.msra.mxu0 0.0
    %619 = vmatprep.subr.mxu0 0.0
    %620 = vmatpush2.msra.mxu0 0.0
    %621 = vmatprep.subr.mxu0 0.0
    %622 = vmatpush2.msra.mxu0 0.0
    %623 = vmatprep.subr.mxu0 0.0
    %624 = vmatpush2.msra.mxu0 0.0
    %625 = vmatprep.subr.mxu0 0.0
    %626 = vmatpush2.msra.mxu0 0.0
    %627 = vmatprep.subr.mxu0 0.0
    %628 = vmatpush2.msra.mxu0 0.0
    %629 = vmatprep.subr.mxu0 0.0
    %630 = vmatpush2.msra.mxu0 0.0
    %631 = vmatprep.subr.mxu0 0.0
    %632 = vmatpush2.msra.mxu0 0.0
    %633 = vmatprep.subr.mxu0 0.0
    %634 = vmatpush2.msra.mxu0 0.0
    %635 = vmatprep.subr.mxu0 0.0
    %636 = vmatpush2.msra.mxu0 0.0
    %637 = vmatprep.subr.mxu0 0.0
    %638 = vmatpush2.msra.mxu0 0.0
    %639 = vmatprep.subr.mxu0 0.0
    %640 = vmatpush2.msra.mxu0 0.0
    %641 = vmatprep.mubr.f32.mxu0 0.0
    %642 = vmatmul.mubr.f32.gmra.mxu0 %v505
    %v643 = vpop.f32.mrf.mxu0
    %v644 = vadd.f32 %v340, %v643
    %v645 = vpop.f32.mrf.mxu0
    %646 = vdwg.mxu0
    %v649 = vrot.slane %v573, 6
    %v650 = vrot.slane %v575, 6
    %v653 = vadd.f32 %v243, %v649
    %v654 = vadd.f32 %v245, %v650
    %v655 = vxor.u32 %v653, 2147483648
    %v656 = vxor.u32 %v654, 2147483648
    %v657 = vmul.f32 %v655, 1.442695
    %v658 = vpow.pop %v657
    %v659 = vmul.f32 %v656, 1.442695
    %v660 = vpow.pop %v659
    %v661 = vadd.f32 %v658, 1.0
    %v662 = vadd.f32 %v660, 1.0
    %v663 = vrcp.pop %v661
    %v664 = vmul.f32 1.0, %v663
    %v665 = vrcp.pop %v662
    %v666 = vmul.f32 1.0, %v665
    %v668 = vrot.slane %v644, 6
    %v670 = vmul.f32 %v664, %v668
    %v671 = vadd.f32 %v320, %v670
    %v672 = vtanh.pop %v671
    %v673 = vsub.f32 1.0, %v666
    %v674 = vmul.f32 %v673, %v672
    %v676 = vrot.slane %v505, 6
    %v678 = vmul.f32 %v666, %v676
    %v679 = vadd.f32 %v674, %v678
    %v681 = vrot.slane %v679, 2
    %683 = vmatprep.subr.mxu0 %v155
    %684 = vmatpush1.msra.mxu0 %v154
    %685 = vmatprep.subr.mxu0 %v152
    %686 = vmatpush1.msra.mxu0 %v151
    %687 = vmatprep.subr.mxu0 %v149
    %688 = vmatpush1.msra.mxu0 %v148
    %689 = vmatprep.subr.mxu0 %v146
    %690 = vmatpush1.msra.mxu0 %v145
    %691 = vmatprep.subr.mxu0 %v143
    %692 = vmatpush1.msra.mxu0 %v142
    %693 = vmatprep.subr.mxu0 %v140
    %694 = vmatpush1.msra.mxu0 %v139
    %695 = vmatprep.subr.mxu0 %v137
    %696 = vmatpush1.msra.mxu0 %v136
    %697 = vmatprep.subr.mxu0 %v134
    %698 = vmatpush1.msra.mxu0 %v133
    %699 = vmatprep.subr.mxu0 %v131
    %700 = vmatpush1.msra.mxu0 %v130
    %701 = vmatprep.subr.mxu0 %v128
    %702 = vmatpush1.msra.mxu0 %v127
    %703 = vmatprep.subr.mxu0 %v125
    %704 = vmatpush1.msra.mxu0 %v124
    %705 = vmatprep.subr.mxu0 %v122
    %706 = vmatpush1.msra.mxu0 %v121
    %707 = vmatprep.subr.mxu0 %v119
    %708 = vmatpush1.msra.mxu0 %v118
    %709 = vmatprep.subr.mxu0 %v116
    %710 = vmatpush1.msra.mxu0 %v115
    %711 = vmatprep.subr.mxu0 %v113
    %712 = vmatpush1.msra.mxu0 %v112
    %713 = vmatprep.subr.mxu0 %v110
    %714 = vmatpush1.msra.mxu0 %v109
    %715 = vmatprep.subr.mxu0 0.0
    %716 = vmatpush2.msra.mxu0 0.0
    %717 = vmatprep.subr.mxu0 0.0
    %718 = vmatpush2.msra.mxu0 0.0
    %719 = vmatprep.subr.mxu0 0.0
    %720 = vmatpush2.msra.mxu0 0.0
    %721 = vmatprep.subr.mxu0 0.0
    %722 = vmatpush2.msra.mxu0 0.0
    %723 = vmatprep.subr.mxu0 0.0
    %724 = vmatpush2.msra.mxu0 0.0
    %725 = vmatprep.subr.mxu0 0.0
    %726 = vmatpush2.msra.mxu0 0.0
    %727 = vmatprep.subr.mxu0 0.0
    %728 = vmatpush2.msra.mxu0 0.0
    %729 = vmatprep.subr.mxu0 0.0
    %730 = vmatpush2.msra.mxu0 0.0
    %731 = vmatprep.subr.mxu0 0.0
    %732 = vmatpush2.msra.mxu0 0.0
    %733 = vmatprep.subr.mxu0 0.0
    %734 = vmatpush2.msra.mxu0 0.0
    %735 = vmatprep.subr.mxu0 0.0
    %736 = vmatpush2.msra.mxu0 0.0
    %737 = vmatprep.subr.mxu0 0.0
    %738 = vmatpush2.msra.mxu0 0.0
    %739 = vmatprep.subr.mxu0 0.0
    %740 = vmatpush2.msra.mxu0 0.0
    %741 = vmatprep.subr.mxu0 0.0
    %742 = vmatpush2.msra.mxu0 0.0
    %743 = vmatprep.subr.mxu0 0.0
    %744 = vmatpush2.msra.mxu0 0.0
    %745 = vmatprep.subr.mxu0 0.0
    %746 = vmatpush2.msra.mxu0 0.0
    %747 = vmatprep.mubr.f32.mxu0 0.0
    %748 = vmatmul.mubr.f32.gmra.mxu0 %v681
    %v749 = vpop.f32.mrf.mxu0
    %v750 = vadd.f32 %v332, %v749
    %v751 = vpop.f32.mrf.mxu0
    %v752 = vadd.f32 %v336, %v751
    %753 = vdwg.mxu0
    %754 = vmatprep.subr.mxu0 0.0
    %755 = vmatpush1.msra.mxu0 %v156
    %756 = vmatprep.subr.mxu0 0.0
    %757 = vmatpush1.msra.mxu0 %v153
    %758 = vmatprep.subr.mxu0 0.0
    %759 = vmatpush1.msra.mxu0 %v150
    %760 = vmatprep.subr.mxu0 0.0
    %761 = vmatpush1.msra.mxu0 %v147
    %762 = vmatprep.subr.mxu0 0.0
    %763 = vmatpush1.msra.mxu0 %v144
    %764 = vmatprep.subr.mxu0 0.0
    %765 = vmatpush1.msra.mxu0 %v141
    %766 = vmatprep.subr.mxu0 0.0
    %767 = vmatpush1.msra.mxu0 %v138
    %768 = vmatprep.subr.mxu0 0.0
    %769 = vmatpush1.msra.mxu0 %v135
    %770 = vmatprep.subr.mxu0 0.0
    %771 = vmatpush1.msra.mxu0 %v132
    %772 = vmatprep.subr.mxu0 0.0
    %773 = vmatpush1.msra.mxu0 %v129
    %774 = vmatprep.subr.mxu0 0.0
    %775 = vmatpush1.msra.mxu0 %v126
    %776 = vmatprep.subr.mxu0 0.0
    %777 = vmatpush1.msra.mxu0 %v123
    %778 = vmatprep.subr.mxu0 0.0
    %779 = vmatpush1.msra.mxu0 %v120
    %780 = vmatprep.subr.mxu0 0.0
    %781 = vmatpush1.msra.mxu0 %v117
    %782 = vmatprep.subr.mxu0 0.0
    %783 = vmatpush1.msra.mxu0 %v114
    %784 = vmatprep.subr.mxu0 0.0
    %785 = vmatpush1.msra.mxu0 %v111
    %786 = vmatprep.subr.mxu0 0.0
    %787 = vmatpush2.msra.mxu0 0.0
    %788 = vmatprep.subr.mxu0 0.0
    %789 = vmatpush2.msra.mxu0 0.0
    %790 = vmatprep.subr.mxu0 0.0
    %791 = vmatpush2.msra.mxu0 0.0
    %792 = vmatprep.subr.mxu0 0.0
    %793 = vmatpush2.msra.mxu0 0.0
    %794 = vmatprep.subr.mxu0 0.0
    %795 = vmatpush2.msra.mxu0 0.0
    %796 = vmatprep.subr.mxu0 0.0
    %797 = vmatpush2.msra.mxu0 0.0
    %798 = vmatprep.subr.mxu0 0.0
    %799 = vmatpush2.msra.mxu0 0.0
    %800 = vmatprep.subr.mxu0 0.0
    %801 = vmatpush2.msra.mxu0 0.0
    %802 = vmatprep.subr.mxu0 0.0
    %803 = vmatpush2.msra.mxu0 0.0
    %804 = vmatprep.subr.mxu0 0.0
    %805 = vmatpush2.msra.mxu0 0.0
    %806 = vmatprep.subr.mxu0 0.0
    %807 = vmatpush2.msra.mxu0 0.0
    %808 = vmatprep.subr.mxu0 0.0
    %809 = vmatpush2.msra.mxu0 0.0
    %810 = vmatprep.subr.mxu0 0.0
    %811 = vmatpush2.msra.mxu0 0.0
    %812 = vmatprep.subr.mxu0 0.0
    %813 = vmatpush2.msra.mxu0 0.0
    %814 = vmatprep.subr.mxu0 0.0
    %815 = vmatpush2.msra.mxu0 0.0
    %816 = vmatprep.subr.mxu0 0.0
    %817 = vmatpush2.msra.mxu0 0.0
    %818 = vmatprep.mubr.f32.mxu0 0.0
    %819 = vmatmul.mubr.f32.gmra.mxu0 %v681
    %v820 = vpop.f32.mrf.mxu0
    %v821 = vadd.f32 %v340, %v820
    %v822 = vpop.f32.mrf.mxu0
    %823 = vdwg.mxu0
    %v826 = vrot.slane %v750, 4
    %v827 = vrot.slane %v752, 4
    %v830 = vadd.f32 %v243, %v826
    %v831 = vadd.f32 %v245, %v827
    %v832 = vxor.u32 %v830, 2147483648
    %v833 = vxor.u32 %v831, 2147483648
    %v834 = vmul.f32 %v832, 1.442695
    %v835 = vpow.pop %v834
    %v836 = vmul.f32 %v833, 1.442695
    %v837 = vpow.pop %v836
    %v838 = vadd.f32 %v835, 1.0
    %v839 = vadd.f32 %v837, 1.0
    %v840 = vrcp.pop %v838
    %v841 = vmul.f32 1.0, %v840
    %v842 = vrcp.pop %v839
    %v843 = vmul.f32 1.0, %v842
    %v845 = vrot.slane %v821, 4
    %v847 = vmul.f32 %v841, %v845
    %v848 = vadd.f32 %v320, %v847
    %v849 = vtanh.pop %v848
    %v850 = vsub.f32 1.0, %v843
    %v851 = vmul.f32 %v850, %v849
    %v852 = vrot.slane %v679, 6
    %v854 = vmul.f32 %v843, %v852
    %v855 = vadd.f32 %v851, %v854
    %v857 = vrot.slane %v855, 4
    %859 = vmatprep.subr.mxu0 %v155
    %860 = vmatpush1.msra.mxu0 %v154
    %861 = vmatprep.subr.mxu0 %v152
    %862 = vmatpush1.msra.mxu0 %v151
    %863 = vmatprep.subr.mxu0 %v149
    %864 = vmatpush1.msra.mxu0 %v148
    %865 = vmatprep.subr.mxu0 %v146
    %866 = vmatpush1.msra.mxu0 %v145
    %867 = vmatprep.subr.mxu0 %v143
    %868 = vmatpush1.msra.mxu0 %v142
    %869 = vmatprep.subr.mxu0 %v140
    %870 = vmatpush1.msra.mxu0 %v139
    %871 = vmatprep.subr.mxu0 %v137
    %872 = vmatpush1.msra.mxu0 %v136
    %873 = vmatprep.subr.mxu0 %v134
    %874 = vmatpush1.msra.mxu0 %v133
    %875 = vmatprep.subr.mxu0 %v131
    %876 = vmatpush1.msra.mxu0 %v130
    %877 = vmatprep.subr.mxu0 %v128
    %878 = vmatpush1.msra.mxu0 %v127
    %879 = vmatprep.subr.mxu0 %v125
    %880 = vmatpush1.msra.mxu0 %v124
    %881 = vmatprep.subr.mxu0 %v122
    %882 = vmatpush1.msra.mxu0 %v121
    %883 = vmatprep.subr.mxu0 %v119
    %884 = vmatpush1.msra.mxu0 %v118
    %885 = vmatprep.subr.mxu0 %v116
    %886 = vmatpush1.msra.mxu0 %v115
    %887 = vmatprep.subr.mxu0 %v113
    %888 = vmatpush1.msra.mxu0 %v112
    %889 = vmatprep.subr.mxu0 %v110
    %890 = vmatpush1.msra.mxu0 %v109
    %891 = vmatprep.subr.mxu0 0.0
    %892 = vmatpush2.msra.mxu0 0.0
    %893 = vmatprep.subr.mxu0 0.0
    %894 = vmatpush2.msra.mxu0 0.0
    %895 = vmatprep.subr.mxu0 0.0
    %896 = vmatpush2.msra.mxu0 0.0
    %897 = vmatprep.subr.mxu0 0.0
    %898 = vmatpush2.msra.mxu0 0.0
    %899 = vmatprep.subr.mxu0 0.0
    %900 = vmatpush2.msra.mxu0 0.0
    %901 = vmatprep.subr.mxu0 0.0
    %902 = vmatpush2.msra.mxu0 0.0
    %903 = vmatprep.subr.mxu0 0.0
    %904 = vmatpush2.msra.mxu0 0.0
    %905 = vmatprep.subr.mxu0 0.0
    %906 = vmatpush2.msra.mxu0 0.0
    %907 = vmatprep.subr.mxu0 0.0
    %908 = vmatpush2.msra.mxu0 0.0
    %909 = vmatprep.subr.mxu0 0.0
    %910 = vmatpush2.msra.mxu0 0.0
    %911 = vmatprep.subr.mxu0 0.0
    %912 = vmatpush2.msra.mxu0 0.0
    %913 = vmatprep.subr.mxu0 0.0
    %914 = vmatpush2.msra.mxu0 0.0
    %915 = vmatprep.subr.mxu0 0.0
    %916 = vmatpush2.msra.mxu0 0.0
    %917 = vmatprep.subr.mxu0 0.0
    %918 = vmatpush2.msra.mxu0 0.0
    %919 = vmatprep.subr.mxu0 0.0
    %920 = vmatpush2.msra.mxu0 0.0
    %921 = vmatprep.subr.mxu0 0.0
    %922 = vmatpush2.msra.mxu0 0.0
    %923 = vmatprep.mubr.f32.mxu0 0.0
    %924 = vmatmul.mubr.f32.gmra.mxu0 %v857
    %v925 = vpop.f32.mrf.mxu0
    %v926 = vadd.f32 %v332, %v925
    %v927 = vpop.f32.mrf.mxu0
    %v928 = vadd.f32 %v336, %v927
    %929 = vdwg.mxu0
    %930 = vmatprep.subr.mxu0 0.0
    %931 = vmatpush1.msra.mxu0 %v156
    %932 = vmatprep.subr.mxu0 0.0
    %933 = vmatpush1.msra.mxu0 %v153
    %934 = vmatprep.subr.mxu0 0.0
    %935 = vmatpush1.msra.mxu0 %v150
    %936 = vmatprep.subr.mxu0 0.0
    %937 = vmatpush1.msra.mxu0 %v147
    %938 = vmatprep.subr.mxu0 0.0
    %939 = vmatpush1.msra.mxu0 %v144
    %940 = vmatprep.subr.mxu0 0.0
    %941 = vmatpush1.msra.mxu0 %v141
    %942 = vmatprep.subr.mxu0 0.0
    %943 = vmatpush1.msra.mxu0 %v138
    %944 = vmatprep.subr.mxu0 0.0
    %945 = vmatpush1.msra.mxu0 %v135
    %946 = vmatprep.subr.mxu0 0.0
    %947 = vmatpush1.msra.mxu0 %v132
    %948 = vmatprep.subr.mxu0 0.0
    %949 = vmatpush1.msra.mxu0 %v129
    %950 = vmatprep.subr.mxu0 0.0
    %951 = vmatpush1.msra.mxu0 %v126
    %952 = vmatprep.subr.mxu0 0.0
    %953 = vmatpush1.msra.mxu0 %v123
    %954 = vmatprep.subr.mxu0 0.0
    %955 = vmatpush1.msra.mxu0 %v120
    %956 = vmatprep.subr.mxu0 0.0
    %957 = vmatpush1.msra.mxu0 %v117
    %958 = vmatprep.subr.mxu0 0.0
    %959 = vmatpush1.msra.mxu0 %v114
    %960 = vmatprep.subr.mxu0 0.0
    %961 = vmatpush1.msra.mxu0 %v111
    %962 = vmatprep.subr.mxu0 0.0
    %963 = vmatpush2.msra.mxu0 0.0
    %964 = vmatprep.subr.mxu0 0.0
    %965 = vmatpush2.msra.mxu0 0.0
    %966 = vmatprep.subr.mxu0 0.0
    %967 = vmatpush2.msra.mxu0 0.0
    %968 = vmatprep.subr.mxu0 0.0
    %969 = vmatpush2.msra.mxu0 0.0
    %970 = vmatprep.subr.mxu0 0.0
    %971 = vmatpush2.msra.mxu0 0.0
    %972 = vmatprep.subr.mxu0 0.0
    %973 = vmatpush2.msra.mxu0 0.0
    %974 = vmatprep.subr.mxu0 0.0
    %975 = vmatpush2.msra.mxu0 0.0
    %976 = vmatprep.subr.mxu0 0.0
    %977 = vmatpush2.msra.mxu0 0.0
    %978 = vmatprep.subr.mxu0 0.0
    %979 = vmatpush2.msra.mxu0 0.0
    %980 = vmatprep.subr.mxu0 0.0
    %981 = vmatpush2.msra.mxu0 0.0
    %982 = vmatprep.subr.mxu0 0.0
    %983 = vmatpush2.msra.mxu0 0.0
    %984 = vmatprep.subr.mxu0 0.0
    %985 = vmatpush2.msra.mxu0 0.0
    %986 = vmatprep.subr.mxu0 0.0
    %987 = vmatpush2.msra.mxu0 0.0
    %988 = vmatprep.subr.mxu0 0.0
    %989 = vmatpush2.msra.mxu0 0.0
    %990 = vmatprep.subr.mxu0 0.0
    %991 = vmatpush2.msra.mxu0 0.0
    %992 = vmatprep.subr.mxu0 0.0
    %993 = vmatpush2.msra.mxu0 0.0
    %994 = vmatprep.mubr.f32.mxu0 0.0
    %995 = vmatmul.mubr.f32.gmra.mxu0 %v857
    %v996 = vpop.f32.mrf.mxu0
    %v997 = vadd.f32 %v340, %v996
    %v998 = vpop.f32.mrf.mxu0
    %999 = vdwg.mxu0
    %v1002 = vrot.slane %v926, 2
    %v1003 = vrot.slane %v928, 2
    %v1006 = vadd.f32 %v243, %v1002
    %v1007 = vadd.f32 %v245, %v1003
    %v1008 = vxor.u32 %v1006, 2147483648
    %v1009 = vxor.u32 %v1007, 2147483648
    %v1010 = vmul.f32 %v1008, 1.442695
    %v1011 = vpow.pop %v1010
    %v1012 = vmul.f32 %v1009, 1.442695
    %v1013 = vpow.pop %v1012
    %v1014 = vadd.f32 %v1011, 1.0
    %v1015 = vadd.f32 %v1013, 1.0
    %v1016 = vrcp.pop %v1014
    %v1017 = vmul.f32 1.0, %v1016
    %v1018 = vrcp.pop %v1015
    %v1019 = vmul.f32 1.0, %v1018
    %v1021 = vrot.slane %v997, 2
    %v1023 = vmul.f32 %v1017, %v1021
    %v1024 = vadd.f32 %v320, %v1023
    %v1025 = vtanh.pop %v1024
    %v1026 = vsub.f32 1.0, %v1019
    %v1027 = vmul.f32 %v1026, %v1025
    %v1028 = vrot.slane %v855, 6
    %v1030 = vmul.f32 %v1019, %v1028
    %v1031 = vadd.f32 %v1027, %v1030
    %v1033 = vrot.slane %v1031, 6
    %1035 = vmatprep.subr.mxu0 %v155
    %1036 = vmatpush1.msra.mxu0 %v154
    %1037 = vmatprep.subr.mxu0 %v152
    %1038 = vmatpush1.msra.mxu0 %v151
    %1039 = vmatprep.subr.mxu0 %v149
    %1040 = vmatpush1.msra.mxu0 %v148
    %1041 = vmatprep.subr.mxu0 %v146
    %1042 = vmatpush1.msra.mxu0 %v145
    %1043 = vmatprep.subr.mxu0 %v143
    %1044 = vmatpush1.msra.mxu0 %v142
    %1045 = vmatprep.subr.mxu0 %v140
    %1046 = vmatpush1.msra.mxu0 %v139
    %1047 = vmatprep.subr.mxu0 %v137
    %1048 = vmatpush1.msra.mxu0 %v136
    %1049 = vmatprep.subr.mxu0 %v134
    %1050 = vmatpush1.msra.mxu0 %v133
    %1051 = vmatprep.subr.mxu0 %v131
    %1052 = vmatpush1.msra.mxu0 %v130
    %1053 = vmatprep.subr.mxu0 %v128
    %1054 = vmatpush1.msra.mxu0 %v127
    %1055 = vmatprep.subr.mxu0 %v125
    %1056 = vmatpush1.msra.mxu0 %v124
    %1057 = vmatprep.subr.mxu0 %v122
    %1058 = vmatpush1.msra.mxu0 %v121
    %1059 = vmatprep.subr.mxu0 %v119
    %1060 = vmatpush1.msra.mxu0 %v118
    %1061 = vmatprep.subr.mxu0 %v116
    %1062 = vmatpush1.msra.mxu0 %v115
    %1063 = vmatprep.subr.mxu0 %v113
    %1064 = vmatpush1.msra.mxu0 %v112
    %1065 = vmatprep.subr.mxu0 %v110
    %1066 = vmatpush1.msra.mxu0 %v109
    %1067 = vmatprep.subr.mxu0 0.0
    %1068 = vmatpush2.msra.mxu0 0.0
    %1069 = vmatprep.subr.mxu0 0.0
    %1070 = vmatpush2.msra.mxu0 0.0
    %1071 = vmatprep.subr.mxu0 0.0
    %1072 = vmatpush2.msra.mxu0 0.0
    %1073 = vmatprep.subr.mxu0 0.0
    %1074 = vmatpush2.msra.mxu0 0.0
    %1075 = vmatprep.subr.mxu0 0.0
    %1076 = vmatpush2.msra.mxu0 0.0
    %1077 = vmatprep.subr.mxu0 0.0
    %1078 = vmatpush2.msra.mxu0 0.0
    %1079 = vmatprep.subr.mxu0 0.0
    %1080 = vmatpush2.msra.mxu0 0.0
    %1081 = vmatprep.subr.mxu0 0.0
    %1082 = vmatpush2.msra.mxu0 0.0
    %1083 = vmatprep.subr.mxu0 0.0
    %1084 = vmatpush2.msra.mxu0 0.0
    %1085 = vmatprep.subr.mxu0 0.0
    %1086 = vmatpush2.msra.mxu0 0.0
    %1087 = vmatprep.subr.mxu0 0.0
    %1088 = vmatpush2.msra.mxu0 0.0
    %1089 = vmatprep.subr.mxu0 0.0
    %1090 = vmatpush2.msra.mxu0 0.0
    %1091 = vmatprep.subr.mxu0 0.0
    %1092 = vmatpush2.msra.mxu0 0.0
    %1093 = vmatprep.subr.mxu0 0.0
    %1094 = vmatpush2.msra.mxu0 0.0
    %1095 = vmatprep.subr.mxu0 0.0
    %1096 = vmatpush2.msra.mxu0 0.0
    %1097 = vmatprep.subr.mxu0 0.0
    %1098 = vmatpush2.msra.mxu0 0.0
    %1099 = vmatprep.mubr.f32.mxu0 0.0
    %1100 = vmatmul.mubr.f32.gmra.mxu0 %v1033
    %v1101 = vpop.f32.mrf.mxu0
    %v1102 = vadd.f32 %v332, %v1101
    %v1103 = vpop.f32.mrf.mxu0
    %v1104 = vadd.f32 %v336, %v1103
    %1105 = vdwg.mxu0
    %1106 = vmatprep.subr.mxu0 0.0
    %1107 = vmatpush1.msra.mxu0 %v156
    %1108 = vmatprep.subr.mxu0 0.0
    %1109 = vmatpush1.msra.mxu0 %v153
    %1110 = vmatprep.subr.mxu0 0.0
    %1111 = vmatpush1.msra.mxu0 %v150
    %1112 = vmatprep.subr.mxu0 0.0
    %1113 = vmatpush1.msra.mxu0 %v147
    %1114 = vmatprep.subr.mxu0 0.0
    %1115 = vmatpush1.msra.mxu0 %v144
    %1116 = vmatprep.subr.mxu0 0.0
    %1117 = vmatpush1.msra.mxu0 %v141
    %1118 = vmatprep.subr.mxu0 0.0
    %1119 = vmatpush1.msra.mxu0 %v138
    %1120 = vmatprep.subr.mxu0 0.0
    %1121 = vmatpush1.msra.mxu0 %v135
    %1122 = vmatprep.subr.mxu0 0.0
    %1123 = vmatpush1.msra.mxu0 %v132
    %1124 = vmatprep.subr.mxu0 0.0
    %1125 = vmatpush1.msra.mxu0 %v129
    %1126 = vmatprep.subr.mxu0 0.0
    %1127 = vmatpush1.msra.mxu0 %v126
    %1128 = vmatprep.subr.mxu0 0.0
    %1129 = vmatpush1.msra.mxu0 %v123
    %1130 = vmatprep.subr.mxu0 0.0
    %1131 = vmatpush1.msra.mxu0 %v120
    %1132 = vmatprep.subr.mxu0 0.0
    %1133 = vmatpush1.msra.mxu0 %v117
    %1134 = vmatprep.subr.mxu0 0.0
    %1135 = vmatpush1.msra.mxu0 %v114
    %1136 = vmatprep.subr.mxu0 0.0
    %1137 = vmatpush1.msra.mxu0 %v111
    %1138 = vmatprep.subr.mxu0 0.0
    %1139 = vmatpush2.msra.mxu0 0.0
    %1140 = vmatprep.subr.mxu0 0.0
    %1141 = vmatpush2.msra.mxu0 0.0
    %1142 = vmatprep.subr.mxu0 0.0
    %1143 = vmatpush2.msra.mxu0 0.0
    %1144 = vmatprep.subr.mxu0 0.0
    %1145 = vmatpush2.msra.mxu0 0.0
    %1146 = vmatprep.subr.mxu0 0.0
    %1147 = vmatpush2.msra.mxu0 0.0
    %1148 = vmatprep.subr.mxu0 0.0
    %1149 = vmatpush2.msra.mxu0 0.0
    %1150 = vmatprep.subr.mxu0 0.0
    %1151 = vmatpush2.msra.mxu0 0.0
    %1152 = vmatprep.subr.mxu0 0.0
    %1153 = vmatpush2.msra.mxu0 0.0
    %1154 = vmatprep.subr.mxu0 0.0
    %1155 = vmatpush2.msra.mxu0 0.0
    %1156 = vmatprep.subr.mxu0 0.0
    %1157 = vmatpush2.msra.mxu0 0.0
    %1158 = vmatprep.subr.mxu0 0.0
    %1159 = vmatpush2.msra.mxu0 0.0
    %1160 = vmatprep.subr.mxu0 0.0
    %1161 = vmatpush2.msra.mxu0 0.0
    %1162 = vmatprep.subr.mxu0 0.0
    %1163 = vmatpush2.msra.mxu0 0.0
    %1164 = vmatprep.subr.mxu0 0.0
    %1165 = vmatpush2.msra.mxu0 0.0
    %1166 = vmatprep.subr.mxu0 0.0
    %1167 = vmatpush2.msra.mxu0 0.0
    %1168 = vmatprep.subr.mxu0 0.0
    %1169 = vmatpush2.msra.mxu0 0.0
    %1170 = vmatprep.mubr.f32.mxu0 0.0
    %1171 = vmatmul.mubr.f32.gmra.mxu0 %v1033
    %v1172 = vpop.f32.mrf.mxu0
    %v1173 = vadd.f32 %v340, %v1172
    %v1174 = vpop.f32.mrf.mxu0
    %1175 = vdwg.mxu0
    %v1176 = vadd.f32 %v249, %v1102
    %v1177 = vadd.f32 %v251, %v1104
    %v1178 = vxor.u32 %v1176, 2147483648
    %v1179 = vxor.u32 %v1177, 2147483648
    %v1180 = vmul.f32 %v1178, 1.442695
    %v1181 = vpow.pop %v1180
    %v1182 = vmul.f32 %v1179, 1.442695
    %v1183 = vpow.pop %v1182
    %v1184 = vadd.f32 %v1181, 1.0
    %v1185 = vadd.f32 %v1183, 1.0
    %v1186 = vrcp.pop %v1184
    %v1187 = vmul.f32 1.0, %v1186
    %v1188 = vrcp.pop %v1185
    %v1189 = vmul.f32 1.0, %v1188
    %v1190 = vmul.f32 %v1187, %v1173
    %v1191 = vadd.f32 %v325, %v1190
    %v1192 = vtanh.pop %v1191
    %v1193 = vsub.f32 1.0, %v1189
    %v1194 = vmul.f32 %v1193, %v1192
    %v1195 = vmul.f32 %v1189, %v1033
    %v1196 = vadd.f32 %v1194, %v1195
    %1197 = vmatprep.subr.mxu0 %v155
    %1198 = vmatpush1.msra.mxu0 %v154
    %1199 = vmatprep.subr.mxu0 %v152
    %1200 = vmatpush1.msra.mxu0 %v151
    %1201 = vmatprep.subr.mxu0 %v149
    %1202 = vmatpush1.msra.mxu0 %v148
    %1203 = vmatprep.subr.mxu0 %v146
    %1204 = vmatpush1.msra.mxu0 %v145
    %1205 = vmatprep.subr.mxu0 %v143
    %1206 = vmatpush1.msra.mxu0 %v142
    %1207 = vmatprep.subr.mxu0 %v140
    %1208 = vmatpush1.msra.mxu0 %v139
    %1209 = vmatprep.subr.mxu0 %v137
    %1210 = vmatpush1.msra.mxu0 %v136
    %1211 = vmatprep.subr.mxu0 %v134
    %1212 = vmatpush1.msra.mxu0 %v133
    %1213 = vmatprep.subr.mxu0 %v131
    %1214 = vmatpush1.msra.mxu0 %v130
    %1215 = vmatprep.subr.mxu0 %v128
    %1216 = vmatpush1.msra.mxu0 %v127
    %1217 = vmatprep.subr.mxu0 %v125
    %1218 = vmatpush1.msra.mxu0 %v124
    %1219 = vmatprep.subr.mxu0 %v122
    %1220 = vmatpush1.msra.mxu0 %v121
    %1221 = vmatprep.subr.mxu0 %v119
    %1222 = vmatpush1.msra.mxu0 %v118
    %1223 = vmatprep.subr.mxu0 %v116
    %1224 = vmatpush1.msra.mxu0 %v115
    %1225 = vmatprep.subr.mxu0 %v113
    %1226 = vmatpush1.msra.mxu0 %v112
    %1227 = vmatprep.subr.mxu0 %v110
    %1228 = vmatpush1.msra.mxu0 %v109
    %1229 = vmatprep.subr.mxu0 0.0
    %1230 = vmatpush2.msra.mxu0 0.0
    %1231 = vmatprep.subr.mxu0 0.0
    %1232 = vmatpush2.msra.mxu0 0.0
    %1233 = vmatprep.subr.mxu0 0.0
    %1234 = vmatpush2.msra.mxu0 0.0
    %1235 = vmatprep.subr.mxu0 0.0
    %1236 = vmatpush2.msra.mxu0 0.0
    %1237 = vmatprep.subr.mxu0 0.0
    %1238 = vmatpush2.msra.mxu0 0.0
    %1239 = vmatprep.subr.mxu0 0.0
    %1240 = vmatpush2.msra.mxu0 0.0
    %1241 = vmatprep.subr.mxu0 0.0
    %1242 = vmatpush2.msra.mxu0 0.0
    %1243 = vmatprep.subr.mxu0 0.0
    %1244 = vmatpush2.msra.mxu0 0.0
    %1245 = vmatprep.subr.mxu0 0.0
    %1246 = vmatpush2.msra.mxu0 0.0
    %1247 = vmatprep.subr.mxu0 0.0
    %1248 = vmatpush2.msra.mxu0 0.0
    %1249 = vmatprep.subr.mxu0 0.0
    %1250 = vmatpush2.msra.mxu0 0.0
    %1251 = vmatprep.subr.mxu0 0.0
    %1252 = vmatpush2.msra.mxu0 0.0
    %1253 = vmatprep.subr.mxu0 0.0
    %1254 = vmatpush2.msra.mxu0 0.0
    %1255 = vmatprep.subr.mxu0 0.0
    %1256 = vmatpush2.msra.mxu0 0.0
    %1257 = vmatprep.subr.mxu0 0.0
    %1258 = vmatpush2.msra.mxu0 0.0
    %1259 = vmatprep.subr.mxu0 0.0
    %1260 = vmatpush2.msra.mxu0 0.0
    %1261 = vmatprep.mubr.f32.mxu0 0.0
    %1262 = vmatmul.mubr.f32.gmra.mxu0 %v1196
    %v1263 = vpop.f32.mrf.mxu0
    %v1264 = vadd.f32 %v332, %v1263
    %v1265 = vpop.f32.mrf.mxu0
    %v1266 = vadd.f32 %v336, %v1265
    %1267 = vdwg.mxu0
    %1268 = vmatprep.subr.mxu0 0.0
    %1269 = vmatpush1.msra.mxu0 %v156
    %1270 = vmatprep.subr.mxu0 0.0
    %1271 = vmatpush1.msra.mxu0 %v153
    %1272 = vmatprep.subr.mxu0 0.0
    %1273 = vmatpush1.msra.mxu0 %v150
    %1274 = vmatprep.subr.mxu0 0.0
    %1275 = vmatpush1.msra.mxu0 %v147
    %1276 = vmatprep.subr.mxu0 0.0
    %1277 = vmatpush1.msra.mxu0 %v144
    %1278 = vmatprep.subr.mxu0 0.0
    %1279 = vmatpush1.msra.mxu0 %v141
    %1280 = vmatprep.subr.mxu0 0.0
    %1281 = vmatpush1.msra.mxu0 %v138
    %1282 = vmatprep.subr.mxu0 0.0
    %1283 = vmatpush1.msra.mxu0 %v135
    %1284 = vmatprep.subr.mxu0 0.0
    %1285 = vmatpush1.msra.mxu0 %v132
    %1286 = vmatprep.subr.mxu0 0.0
    %1287 = vmatpush1.msra.mxu0 %v129
    %1288 = vmatprep.subr.mxu0 0.0
    %1289 = vmatpush1.msra.mxu0 %v126
    %1290 = vmatprep.subr.mxu0 0.0
    %1291 = vmatpush1.msra.mxu0 %v123
    %1292 = vmatprep.subr.mxu0 0.0
    %1293 = vmatpush1.msra.mxu0 %v120
    %1294 = vmatprep.subr.mxu0 0.0
    %1295 = vmatpush1.msra.mxu0 %v117
    %1296 = vmatprep.subr.mxu0 0.0
    %1297 = vmatpush1.msra.mxu0 %v114
    %1298 = vmatprep.subr.mxu0 0.0
    %1299 = vmatpush1.msra.mxu0 %v111
    %1300 = vmatprep.subr.mxu0 0.0
    %1301 = vmatpush2.msra.mxu0 0.0
    %1302 = vmatprep.subr.mxu0 0.0
    %1303 = vmatpush2.msra.mxu0 0.0
    %1304 = vmatprep.subr.mxu0 0.0
    %1305 = vmatpush2.msra.mxu0 0.0
    %1306 = vmatprep.subr.mxu0 0.0
    %1307 = vmatpush2.msra.mxu0 0.0
    %1308 = vmatprep.subr.mxu0 0.0
    %1309 = vmatpush2.msra.mxu0 0.0
    %1310 = vmatprep.subr.mxu0 0.0
    %1311 = vmatpush2.msra.mxu0 0.0
    %1312 = vmatprep.subr.mxu0 0.0
    %1313 = vmatpush2.msra.mxu0 0.0
    %1314 = vmatprep.subr.mxu0 0.0
    %1315 = vmatpush2.msra.mxu0 0.0
    %1316 = vmatprep.subr.mxu0 0.0
    %1317 = vmatpush2.msra.mxu0 0.0
    %1318 = vmatprep.subr.mxu0 0.0
    %1319 = vmatpush2.msra.mxu0 0.0
    %1320 = vmatprep.subr.mxu0 0.0
    %1321 = vmatpush2.msra.mxu0 0.0
    %1322 = vmatprep.subr.mxu0 0.0
    %1323 = vmatpush2.msra.mxu0 0.0
    %1324 = vmatprep.subr.mxu0 0.0
    %1325 = vmatpush2.msra.mxu0 0.0
    %1326 = vmatprep.subr.mxu0 0.0
    %1327 = vmatpush2.msra.mxu0 0.0
    %1328 = vmatprep.subr.mxu0 0.0
    %1329 = vmatpush2.msra.mxu0 0.0
    %1330 = vmatprep.subr.mxu0 0.0
    %1331 = vmatpush2.msra.mxu0 0.0
    %1332 = vmatprep.mubr.f32.mxu0 0.0
    %1333 = vmatmul.mubr.f32.gmra.mxu0 %v1196
    %v1334 = vpop.f32.mrf.mxu0
    %v1335 = vadd.f32 %v340, %v1334
    %v1336 = vpop.f32.mrf.mxu0
    %1337 = vdwg.mxu0
    %v1340 = vrot.slane %v1264, 6
    %v1341 = vrot.slane %v1266, 6
    %v1344 = vadd.f32 %v249, %v1340
    %v1345 = vadd.f32 %v251, %v1341
    %v1346 = vxor.u32 %v1344, 2147483648
    %v1347 = vxor.u32 %v1345, 2147483648
    %v1348 = vmul.f32 %v1346, 1.442695
    %v1349 = vpow.pop %v1348
    %v1350 = vmul.f32 %v1347, 1.442695
    %v1351 = vpow.pop %v1350
    %v1352 = vadd.f32 %v1349, 1.0
    %v1353 = vadd.f32 %v1351, 1.0
    %v1354 = vrcp.pop %v1352
    %v1355 = vmul.f32 1.0, %v1354
    %v1356 = vrcp.pop %v1353
    %v1357 = vmul.f32 1.0, %v1356
    %v1359 = vrot.slane %v1335, 6
    %v1361 = vmul.f32 %v1355, %v1359
    %v1362 = vadd.f32 %v325, %v1361
    %v1363 = vtanh.pop %v1362
    %v1364 = vsub.f32 1.0, %v1357
    %v1365 = vmul.f32 %v1364, %v1363
    %v1367 = vrot.slane %v1196, 6
    %v1369 = vmul.f32 %v1357, %v1367
    %v1370 = vadd.f32 %v1365, %v1369
    %v1372 = vrot.slane %v1370, 2
    %1374 = vmatprep.subr.mxu0 %v155
    %1375 = vmatpush1.msra.mxu0 %v154
    %1376 = vmatprep.subr.mxu0 %v152
    %1377 = vmatpush1.msra.mxu0 %v151
    %1378 = vmatprep.subr.mxu0 %v149
    %1379 = vmatpush1.msra.mxu0 %v148
    %1380 = vmatprep.subr.mxu0 %v146
    %1381 = vmatpush1.msra.mxu0 %v145
    %1382 = vmatprep.subr.mxu0 %v143
    %1383 = vmatpush1.msra.mxu0 %v142
    %1384 = vmatprep.subr.mxu0 %v140
    %1385 = vmatpush1.msra.mxu0 %v139
    %1386 = vmatprep.subr.mxu0 %v137
    %1387 = vmatpush1.msra.mxu0 %v136
    %1388 = vmatprep.subr.mxu0 %v134
    %1389 = vmatpush1.msra.mxu0 %v133
    %1390 = vmatprep.subr.mxu0 %v131
    %1391 = vmatpush1.msra.mxu0 %v130
    %1392 = vmatprep.subr.mxu0 %v128
    %1393 = vmatpush1.msra.mxu0 %v127
    %1394 = vmatprep.subr.mxu0 %v125
    %1395 = vmatpush1.msra.mxu0 %v124
    %1396 = vmatprep.subr.mxu0 %v122
    %1397 = vmatpush1.msra.mxu0 %v121
    %1398 = vmatprep.subr.mxu0 %v119
    %1399 = vmatpush1.msra.mxu0 %v118
    %1400 = vmatprep.subr.mxu0 %v116
    %1401 = vmatpush1.msra.mxu0 %v115
    %1402 = vmatprep.subr.mxu0 %v113
    %1403 = vmatpush1.msra.mxu0 %v112
    %1404 = vmatprep.subr.mxu0 %v110
    %1405 = vmatpush1.msra.mxu0 %v109
    %1406 = vmatprep.subr.mxu0 0.0
    %1407 = vmatpush2.msra.mxu0 0.0
    %1408 = vmatprep.subr.mxu0 0.0
    %1409 = vmatpush2.msra.mxu0 0.0
    %1410 = vmatprep.subr.mxu0 0.0
    %1411 = vmatpush2.msra.mxu0 0.0
    %1412 = vmatprep.subr.mxu0 0.0
    %1413 = vmatpush2.msra.mxu0 0.0
    %1414 = vmatprep.subr.mxu0 0.0
    %1415 = vmatpush2.msra.mxu0 0.0
    %1416 = vmatprep.subr.mxu0 0.0
    %1417 = vmatpush2.msra.mxu0 0.0
    %1418 = vmatprep.subr.mxu0 0.0
    %1419 = vmatpush2.msra.mxu0 0.0
    %1420 = vmatprep.subr.mxu0 0.0
    %1421 = vmatpush2.msra.mxu0 0.0
    %1422 = vmatprep.subr.mxu0 0.0
    %1423 = vmatpush2.msra.mxu0 0.0
    %1424 = vmatprep.subr.mxu0 0.0
    %1425 = vmatpush2.msra.mxu0 0.0
    %1426 = vmatprep.subr.mxu0 0.0
    %1427 = vmatpush2.msra.mxu0 0.0
    %1428 = vmatprep.subr.mxu0 0.0
    %1429 = vmatpush2.msra.mxu0 0.0
    %1430 = vmatprep.subr.mxu0 0.0
    %1431 = vmatpush2.msra.mxu0 0.0
    %1432 = vmatprep.subr.mxu0 0.0
    %1433 = vmatpush2.msra.mxu0 0.0
    %1434 = vmatprep.subr.mxu0 0.0
    %1435 = vmatpush2.msra.mxu0 0.0
    %1436 = vmatprep.subr.mxu0 0.0
    %1437 = vmatpush2.msra.mxu0 0.0
    %1438 = vmatprep.mubr.f32.mxu0 0.0
    %1439 = vmatmul.mubr.f32.gmra.mxu0 %v1372
    %v1440 = vpop.f32.mrf.mxu0
    %v1441 = vadd.f32 %v332, %v1440
    %v1442 = vpop.f32.mrf.mxu0
    %v1443 = vadd.f32 %v336, %v1442
    %1444 = vdwg.mxu0
    %1445 = vmatprep.subr.mxu0 0.0
    %1446 = vmatpush1.msra.mxu0 %v156
    %1447 = vmatprep.subr.mxu0 0.0
    %1448 = vmatpush1.msra.mxu0 %v153
    %1449 = vmatprep.subr.mxu0 0.0
    %1450 = vmatpush1.msra.mxu0 %v150
    %1451 = vmatprep.subr.mxu0 0.0
    %1452 = vmatpush1.msra.mxu0 %v147
    %1453 = vmatprep.subr.mxu0 0.0
    %1454 = vmatpush1.msra.mxu0 %v144
    %1455 = vmatprep.subr.mxu0 0.0
    %1456 = vmatpush1.msra.mxu0 %v141
    %1457 = vmatprep.subr.mxu0 0.0
    %1458 = vmatpush1.msra.mxu0 %v138
    %1459 = vmatprep.subr.mxu0 0.0
    %1460 = vmatpush1.msra.mxu0 %v135
    %1461 = vmatprep.subr.mxu0 0.0
    %1462 = vmatpush1.msra.mxu0 %v132
    %1463 = vmatprep.subr.mxu0 0.0
    %1464 = vmatpush1.msra.mxu0 %v129
    %1465 = vmatprep.subr.mxu0 0.0
    %1466 = vmatpush1.msra.mxu0 %v126
    %1467 = vmatprep.subr.mxu0 0.0
    %1468 = vmatpush1.msra.mxu0 %v123
    %1469 = vmatprep.subr.mxu0 0.0
    %1470 = vmatpush1.msra.mxu0 %v120
    %1471 = vmatprep.subr.mxu0 0.0
    %1472 = vmatpush1.msra.mxu0 %v117
    %1473 = vmatprep.subr.mxu0 0.0
    %1474 = vmatpush1.msra.mxu0 %v114
    %1475 = vmatprep.subr.mxu0 0.0
    %1476 = vmatpush1.msra.mxu0 %v111
    %1477 = vmatprep.subr.mxu0 0.0
    %1478 = vmatpush2.msra.mxu0 0.0
    %1479 = vmatprep.subr.mxu0 0.0
    %1480 = vmatpush2.msra.mxu0 0.0
    %1481 = vmatprep.subr.mxu0 0.0
    %1482 = vmatpush2.msra.mxu0 0.0
    %1483 = vmatprep.subr.mxu0 0.0
    %1484 = vmatpush2.msra.mxu0 0.0
    %1485 = vmatprep.subr.mxu0 0.0
    %1486 = vmatpush2.msra.mxu0 0.0
    %1487 = vmatprep.subr.mxu0 0.0
    %1488 = vmatpush2.msra.mxu0 0.0
    %1489 = vmatprep.subr.mxu0 0.0
    %1490 = vmatpush2.msra.mxu0 0.0
    %1491 = vmatprep.subr.mxu0 0.0
    %1492 = vmatpush2.msra.mxu0 0.0
    %1493 = vmatprep.subr.mxu0 0.0
    %1494 = vmatpush2.msra.mxu0 0.0
    %1495 = vmatprep.subr.mxu0 0.0
    %1496 = vmatpush2.msra.mxu0 0.0
    %1497 = vmatprep.subr.mxu0 0.0
    %1498 = vmatpush2.msra.mxu0 0.0
    %1499 = vmatprep.subr.mxu0 0.0
    %1500 = vmatpush2.msra.mxu0 0.0
    %1501 = vmatprep.subr.mxu0 0.0
    %1502 = vmatpush2.msra.mxu0 0.0
    %1503 = vmatprep.subr.mxu0 0.0
    %1504 = vmatpush2.msra.mxu0 0.0
    %1505 = vmatprep.subr.mxu0 0.0
    %1506 = vmatpush2.msra.mxu0 0.0
    %1507 = vmatprep.subr.mxu0 0.0
    %1508 = vmatpush2.msra.mxu0 0.0
    %1509 = vmatprep.mubr.f32.mxu0 0.0
    %1510 = vmatmul.mubr.f32.gmra.mxu0 %v1372
    %v1511 = vpop.f32.mrf.mxu0
    %v1512 = vadd.f32 %v340, %v1511
    %v1513 = vpop.f32.mrf.mxu0
    %1514 = vdwg.mxu0
    %v1517 = vrot.slane %v1441, 4
    %v1518 = vrot.slane %v1443, 4
    %v1521 = vadd.f32 %v249, %v1517
    %v1522 = vadd.f32 %v251, %v1518
    %v1523 = vxor.u32 %v1521, 2147483648
    %v1524 = vxor.u32 %v1522, 2147483648
    %v1525 = vmul.f32 %v1523, 1.442695
    %v1526 = vpow.pop %v1525
    %v1527 = vmul.f32 %v1524, 1.442695
    %v1528 = vpow.pop %v1527
    %v1529 = vadd.f32 %v1526, 1.0
    %v1530 = vadd.f32 %v1528, 1.0
    %v1531 = vrcp.pop %v1529
    %v1532 = vmul.f32 1.0, %v1531
    %v1533 = vrcp.pop %v1530
    %v1534 = vmul.f32 1.0, %v1533
    %v1536 = vrot.slane %v1512, 4
    %v1538 = vmul.f32 %v1532, %v1536
    %v1539 = vadd.f32 %v325, %v1538
    %v1540 = vtanh.pop %v1539
    %v1541 = vsub.f32 1.0, %v1534
    %v1542 = vmul.f32 %v1541, %v1540
    %v1543 = vrot.slane %v1370, 6
    %v1545 = vmul.f32 %v1534, %v1543
    %v1546 = vadd.f32 %v1542, %v1545
    %v1548 = vrot.slane %v1546, 4
    %1550 = vmatprep.subr.mxu0 %v155
    %1551 = vmatpush1.msra.mxu0 %v154
    %1552 = vmatprep.subr.mxu0 %v152
    %1553 = vmatpush1.msra.mxu0 %v151
    %1554 = vmatprep.subr.mxu0 %v149
    %1555 = vmatpush1.msra.mxu0 %v148
    %1556 = vmatprep.subr.mxu0 %v146
    %1557 = vmatpush1.msra.mxu0 %v145
    %1558 = vmatprep.subr.mxu0 %v143
    %1559 = vmatpush1.msra.mxu0 %v142
    %1560 = vmatprep.subr.mxu0 %v140
    %1561 = vmatpush1.msra.mxu0 %v139
    %1562 = vmatprep.subr.mxu0 %v137
    %1563 = vmatpush1.msra.mxu0 %v136
    %1564 = vmatprep.subr.mxu0 %v134
    %1565 = vmatpush1.msra.mxu0 %v133
    %1566 = vmatprep.subr.mxu0 %v131
    %1567 = vmatpush1.msra.mxu0 %v130
    %1568 = vmatprep.subr.mxu0 %v128
    %1569 = vmatpush1.msra.mxu0 %v127
    %1570 = vmatprep.subr.mxu0 %v125
    %1571 = vmatpush1.msra.mxu0 %v124
    %1572 = vmatprep.subr.mxu0 %v122
    %1573 = vmatpush1.msra.mxu0 %v121
    %1574 = vmatprep.subr.mxu0 %v119
    %1575 = vmatpush1.msra.mxu0 %v118
    %1576 = vmatprep.subr.mxu0 %v116
    %1577 = vmatpush1.msra.mxu0 %v115
    %1578 = vmatprep.subr.mxu0 %v113
    %1579 = vmatpush1.msra.mxu0 %v112
    %1580 = vmatprep.subr.mxu0 %v110
    %1581 = vmatpush1.msra.mxu0 %v109
    %1582 = vmatprep.subr.mxu0 0.0
    %1583 = vmatpush2.msra.mxu0 0.0
    %1584 = vmatprep.subr.mxu0 0.0
    %1585 = vmatpush2.msra.mxu0 0.0
    %1586 = vmatprep.subr.mxu0 0.0
    %1587 = vmatpush2.msra.mxu0 0.0
    %1588 = vmatprep.subr.mxu0 0.0
    %1589 = vmatpush2.msra.mxu0 0.0
    %1590 = vmatprep.subr.mxu0 0.0
    %1591 = vmatpush2.msra.mxu0 0.0
    %1592 = vmatprep.subr.mxu0 0.0
    %1593 = vmatpush2.msra.mxu0 0.0
    %1594 = vmatprep.subr.mxu0 0.0
    %1595 = vmatpush2.msra.mxu0 0.0
    %1596 = vmatprep.subr.mxu0 0.0
    %1597 = vmatpush2.msra.mxu0 0.0
    %1598 = vmatprep.subr.mxu0 0.0
    %1599 = vmatpush2.msra.mxu0 0.0
    %1600 = vmatprep.subr.mxu0 0.0
    %1601 = vmatpush2.msra.mxu0 0.0
    %1602 = vmatprep.subr.mxu0 0.0
    %1603 = vmatpush2.msra.mxu0 0.0
    %1604 = vmatprep.subr.mxu0 0.0
    %1605 = vmatpush2.msra.mxu0 0.0
    %1606 = vmatprep.subr.mxu0 0.0
    %1607 = vmatpush2.msra.mxu0 0.0
    %1608 = vmatprep.subr.mxu0 0.0
    %1609 = vmatpush2.msra.mxu0 0.0
    %1610 = vmatprep.subr.mxu0 0.0
    %1611 = vmatpush2.msra.mxu0 0.0
    %1612 = vmatprep.subr.mxu0 0.0
    %1613 = vmatpush2.msra.mxu0 0.0
    %1614 = vmatprep.mubr.f32.mxu0 0.0
    %1615 = vmatmul.mubr.f32.gmra.mxu0 %v1548
    %v1616 = vpop.f32.mrf.mxu0
    %v1617 = vadd.f32 %v332, %v1616
    %v1618 = vpop.f32.mrf.mxu0
    %v1619 = vadd.f32 %v336, %v1618
    %1620 = vdwg.mxu0
    %1621 = vmatprep.subr.mxu0 0.0
    %1622 = vmatpush1.msra.mxu0 %v156
    %1623 = vmatprep.subr.mxu0 0.0
    %1624 = vmatpush1.msra.mxu0 %v153
    %1625 = vmatprep.subr.mxu0 0.0
    %1626 = vmatpush1.msra.mxu0 %v150
    %1627 = vmatprep.subr.mxu0 0.0
    %1628 = vmatpush1.msra.mxu0 %v147
    %1629 = vmatprep.subr.mxu0 0.0
    %1630 = vmatpush1.msra.mxu0 %v144
    %1631 = vmatprep.subr.mxu0 0.0
    %1632 = vmatpush1.msra.mxu0 %v141
    %1633 = vmatprep.subr.mxu0 0.0
    %1634 = vmatpush1.msra.mxu0 %v138
    %1635 = vmatprep.subr.mxu0 0.0
    %1636 = vmatpush1.msra.mxu0 %v135
    %1637 = vmatprep.subr.mxu0 0.0
    %1638 = vmatpush1.msra.mxu0 %v132
    %1639 = vmatprep.subr.mxu0 0.0
    %1640 = vmatpush1.msra.mxu0 %v129
    %1641 = vmatprep.subr.mxu0 0.0
    %1642 = vmatpush1.msra.mxu0 %v126
    %1643 = vmatprep.subr.mxu0 0.0
    %1644 = vmatpush1.msra.mxu0 %v123
    %1645 = vmatprep.subr.mxu0 0.0
    %1646 = vmatpush1.msra.mxu0 %v120
    %1647 = vmatprep.subr.mxu0 0.0
    %1648 = vmatpush1.msra.mxu0 %v117
    %1649 = vmatprep.subr.mxu0 0.0
    %1650 = vmatpush1.msra.mxu0 %v114
    %1651 = vmatprep.subr.mxu0 0.0
    %1652 = vmatpush1.msra.mxu0 %v111
    %1653 = vmatprep.subr.mxu0 0.0
    %1654 = vmatpush2.msra.mxu0 0.0
    %1655 = vmatprep.subr.mxu0 0.0
    %1656 = vmatpush2.msra.mxu0 0.0
    %1657 = vmatprep.subr.mxu0 0.0
    %1658 = vmatpush2.msra.mxu0 0.0
    %1659 = vmatprep.subr.mxu0 0.0
    %1660 = vmatpush2.msra.mxu0 0.0
    %1661 = vmatprep.subr.mxu0 0.0
    %1662 = vmatpush2.msra.mxu0 0.0
    %1663 = vmatprep.subr.mxu0 0.0
    %1664 = vmatpush2.msra.mxu0 0.0
    %1665 = vmatprep.subr.mxu0 0.0
    %1666 = vmatpush2.msra.mxu0 0.0
    %1667 = vmatprep.subr.mxu0 0.0
    %1668 = vmatpush2.msra.mxu0 0.0
    %1669 = vmatprep.subr.mxu0 0.0
    %1670 = vmatpush2.msra.mxu0 0.0
    %1671 = vmatprep.subr.mxu0 0.0
    %1672 = vmatpush2.msra.mxu0 0.0
    %1673 = vmatprep.subr.mxu0 0.0
    %1674 = vmatpush2.msra.mxu0 0.0
    %1675 = vmatprep.subr.mxu0 0.0
    %1676 = vmatpush2.msra.mxu0 0.0
    %1677 = vmatprep.subr.mxu0 0.0
    %1678 = vmatpush2.msra.mxu0 0.0
    %1679 = vmatprep.subr.mxu0 0.0
    %1680 = vmatpush2.msra.mxu0 0.0
    %1681 = vmatprep.subr.mxu0 0.0
    %1682 = vmatpush2.msra.mxu0 0.0
    %1683 = vmatprep.subr.mxu0 0.0
    %1684 = vmatpush2.msra.mxu0 0.0
    %1685 = vmatprep.mubr.f32.mxu0 0.0
    %1686 = vmatmul.mubr.f32.gmra.mxu0 %v1548
    %v1687 = vpop.f32.mrf.mxu0
    %v1688 = vadd.f32 %v340, %v1687
    %v1689 = vpop.f32.mrf.mxu0
    %1690 = vdwg.mxu0
    %v1693 = vrot.slane %v1617, 2
    %v1694 = vrot.slane %v1619, 2
    %v1697 = vadd.f32 %v249, %v1693
    %v1698 = vadd.f32 %v251, %v1694
    %v1699 = vxor.u32 %v1697, 2147483648
    %v1700 = vxor.u32 %v1698, 2147483648
    %v1701 = vmul.f32 %v1699, 1.442695
    %v1702 = vpow.pop %v1701
    %v1703 = vmul.f32 %v1700, 1.442695
    %v1704 = vpow.pop %v1703
    %v1705 = vadd.f32 %v1702, 1.0
    %v1706 = vadd.f32 %v1704, 1.0
    %v1707 = vrcp.pop %v1705
    %v1708 = vmul.f32 1.0, %v1707
    %v1709 = vrcp.pop %v1706
    %v1710 = vmul.f32 1.0, %v1709
    %v1712 = vrot.slane %v1688, 2
    %v1714 = vmul.f32 %v1708, %v1712
    %v1715 = vadd.f32 %v325, %v1714
    %v1716 = vtanh.pop %v1715
    %v1717 = vsub.f32 1.0, %v1710
    %v1718 = vmul.f32 %v1717, %v1716
    %v1719 = vrot.slane %v1546, 6
    %v1721 = vmul.f32 %v1710, %v1719
    %v1722 = vadd.f32 %v1718, %v1721
    %vm1723 = vcmask 1041408
    %v1724 = vsel %vm1723, %v505, %v679
    %vm1725 = vcmask 1043456
    %v1726 = vsel %vm1725, %v1724, %v855
    %vm1727 = vcmask 1045504
    %v1728 = vsel %vm1727, %v1726, %v1031
    %v1729 = vsel %vm1723, %v1196, %v1370
    %v1730 = vsel %vm1725, %v1729, %v1546
    %v1731 = vsel %vm1727, %v1730, %v1722
    %s1732 = scalar_lea.vmem [#allocation2], 768
    %v1733 = vld [vmem:[%s1732] sm:$0xff]
    %v1734 = vld [vmem:[%s1732 + $0x8] sm:$0xff]
    %v1735 = vld [vmem:[%s1732 + $0x10] sm:$0xff]
    %v1736 = vld [vmem:[%s1732 + $0x18] sm:$0xff]
    %v1737 = vld [vmem:[%s1732 + $0x20] sm:$0xff]
    %v1738 = vld [vmem:[%s1732 + $0x28] sm:$0xff]
    %v1739 = vld [vmem:[%s1732 + $0x30] sm:$0xff]
    %v1740 = vld [vmem:[%s1732 + $0x38] sm:$0xff]
    %v1741 = vld [vmem:[%s1732 + $0x40] sm:$0xff]
    %v1742 = vld [vmem:[%s1732 + $0x48] sm:$0xff]
    %v1743 = vld [vmem:[%s1732 + $0x50] sm:$0xff]
    %v1744 = vld [vmem:[%s1732 + $0x58] sm:$0xff]
    %v1745 = vld [vmem:[%s1732 + $0x60] sm:$0xff]
    %v1746 = vld [vmem:[%s1732 + $0x68] sm:$0xff]
    %v1747 = vld [vmem:[%s1732 + $0x70] sm:$0xff]
    %v1748 = vld [vmem:[%s1732 + $0x78] sm:$0xff]
    %v1749 = vld [vmem:[%s1732 + $0x80] sm:$0xff]
    %v1750 = vld [vmem:[%s1732 + $0x88] sm:$0xff]
    %v1751 = vld [vmem:[%s1732 + $0x90] sm:$0xff]
    %v1752 = vld [vmem:[%s1732 + $0x98] sm:$0xff]
    %v1753 = vld [vmem:[%s1732 + $0xa0] sm:$0xff]
    %v1754 = vld [vmem:[%s1732 + $0xa8] sm:$0xff]
    %v1755 = vld [vmem:[%s1732 + $0xb0] sm:$0xff]
    %v1756 = vld [vmem:[%s1732 + $0xb8] sm:$0xff]
    %v1757 = vld [vmem:[%s1732 + $0xc0] sm:$0xff]
    %v1758 = vld [vmem:[%s1732 + $0xc8] sm:$0xff]
    %v1759 = vld [vmem:[%s1732 + $0xd0] sm:$0xff]
    %v1760 = vld [vmem:[%s1732 + $0xd8] sm:$0xff]
    %v1761 = vld [vmem:[%s1732 + $0xe0] sm:$0xff]
    %v1762 = vld [vmem:[%s1732 + $0xe8] sm:$0xff]
    %v1763 = vld [vmem:[%s1732 + $0xf0] sm:$0xff]
    %v1764 = vld [vmem:[%s1732 + $0xf8] sm:$0xff]
    %v1765 = vld [vmem:[%s1732 + $0x100] sm:$0xff]
    %v1766 = vld [vmem:[%s1732 + $0x108] sm:$0xff]
    %v1767 = vld [vmem:[%s1732 + $0x110] sm:$0xff]
    %v1768 = vld [vmem:[%s1732 + $0x118] sm:$0xff]
    %v1769 = vld [vmem:[%s1732 + $0x120] sm:$0xff]
    %v1770 = vld [vmem:[%s1732 + $0x128] sm:$0xff]
    %v1771 = vld [vmem:[%s1732 + $0x130] sm:$0xff]
    %v1772 = vld [vmem:[%s1732 + $0x138] sm:$0xff]
    %v1773 = vld [vmem:[%s1732 + $0x140] sm:$0xff]
    %v1774 = vld [vmem:[%s1732 + $0x148] sm:$0xff]
    %v1775 = vld [vmem:[%s1732 + $0x150] sm:$0xff]
    %v1776 = vld [vmem:[%s1732 + $0x158] sm:$0xff]
    %v1777 = vld [vmem:[%s1732 + $0x160] sm:$0xff]
    %v1778 = vld [vmem:[%s1732 + $0x168] sm:$0xff]
    %v1779 = vld [vmem:[%s1732 + $0x170] sm:$0xff]
    %v1780 = vld [vmem:[%s1732 + $0x178] sm:$0xff]
    %s1781 = scalar_lea.vmem [#allocation2], 1152
    %v1782 = vld [vmem:[%s1781] sm:$0xff]
    %v1783 = vld [vmem:[%s1781 + $0x8] sm:$0xff]
    %v1784 = vld [vmem:[%s1781 + $0x10] sm:$0xff]
    %v1785 = vld [vmem:[%s1781 + $0x18] sm:$0xff]
    %v1786 = vld [vmem:[%s1781 + $0x20] sm:$0xff]
    %v1787 = vld [vmem:[%s1781 + $0x28] sm:$0xff]
    %v1788 = vld [vmem:[%s1781 + $0x30] sm:$0xff]
    %v1789 = vld [vmem:[%s1781 + $0x38] sm:$0xff]
    %v1790 = vld [vmem:[%s1781 + $0x40] sm:$0xff]
    %v1791 = vld [vmem:[%s1781 + $0x48] sm:$0xff]
    %v1792 = vld [vmem:[%s1781 + $0x50] sm:$0xff]
    %v1793 = vld [vmem:[%s1781 + $0x58] sm:$0xff]
    %v1794 = vld [vmem:[%s1781 + $0x60] sm:$0xff]
    %v1795 = vld [vmem:[%s1781 + $0x68] sm:$0xff]
    %v1796 = vld [vmem:[%s1781 + $0x70] sm:$0xff]
    %v1797 = vld [vmem:[%s1781 + $0x78] sm:$0xff]
    %v1798 = vld [vmem:[%s1781 + $0x80] sm:$0xff]
    %v1799 = vld [vmem:[%s1781 + $0x88] sm:$0xff]
    %v1800 = vld [vmem:[%s1781 + $0x90] sm:$0xff]
    %v1801 = vld [vmem:[%s1781 + $0x98] sm:$0xff]
    %v1802 = vld [vmem:[%s1781 + $0xa0] sm:$0xff]
    %v1803 = vld [vmem:[%s1781 + $0xa8] sm:$0xff]
    %v1804 = vld [vmem:[%s1781 + $0xb0] sm:$0xff]
    %v1805 = vld [vmem:[%s1781 + $0xb8] sm:$0xff]
    %v1806 = vld [vmem:[%s1781 + $0xc0] sm:$0xff]
    %v1807 = vld [vmem:[%s1781 + $0xc8] sm:$0xff]
    %v1808 = vld [vmem:[%s1781 + $0xd0] sm:$0xff]
    %v1809 = vld [vmem:[%s1781 + $0xd8] sm:$0xff]
    %v1810 = vld [vmem:[%s1781 + $0xe0] sm:$0xff]
    %v1811 = vld [vmem:[%s1781 + $0xe8] sm:$0xff]
    %v1812 = vld [vmem:[%s1781 + $0xf0] sm:$0xff]
    %v1813 = vld [vmem:[%s1781 + $0xf8] sm:$0xff]
    %v1814 = vld [vmem:[%s1781 + $0x100] sm:$0xff]
    %v1815 = vld [vmem:[%s1781 + $0x108] sm:$0xff]
    %v1816 = vld [vmem:[%s1781 + $0x110] sm:$0xff]
    %v1817 = vld [vmem:[%s1781 + $0x118] sm:$0xff]
    %v1818 = vld [vmem:[%s1781 + $0x120] sm:$0xff]
    %v1819 = vld [vmem:[%s1781 + $0x128] sm:$0xff]
    %v1820 = vld [vmem:[%s1781 + $0x130] sm:$0xff]
    %v1821 = vld [vmem:[%s1781 + $0x138] sm:$0xff]
    %v1822 = vld [vmem:[%s1781 + $0x140] sm:$0xff]
    %v1823 = vld [vmem:[%s1781 + $0x148] sm:$0xff]
    %v1824 = vld [vmem:[%s1781 + $0x150] sm:$0xff]
    %v1825 = vld [vmem:[%s1781 + $0x158] sm:$0xff]
    %v1826 = vld [vmem:[%s1781 + $0x160] sm:$0xff]
    %v1827 = vld [vmem:[%s1781 + $0x168] sm:$0xff]
    %v1828 = vld [vmem:[%s1781 + $0x170] sm:$0xff]
    %v1829 = vld [vmem:[%s1781 + $0x178] sm:$0xff]
    %s1830 = scalar_lea.vmem [#allocation4], 6
    %v1831 = vld [vmem:[%s1830] sm:$0x7]
    %s1832 = scalar_lea.vmem [#allocation4], 9
    %v1833 = vld [vmem:[%s1832] sm:$0x7]
    %v1835 = vlaneseq
    %v1836 = vshrl.u32 %v1835, 7
    %v1837 = vsub.s32 0, %v1836
    %v1838 = vrot.slane %v1831, %v1837
    %v1839 = vlaneseq
    %v1840 = vshrl.u32 %v1839, 7
    %v1841 = vsub.s32 1, %v1840
    %v1842 = vrot.slane %v1831, %v1841
    %v1843 = vlaneseq
    %v1844 = vshrl.u32 %v1843, 7
    %v1845 = vsub.s32 2, %v1844
    %v1846 = vrot.slane %v1831, %v1845
    %1850 = vmatprep.subr.mxu0 %v1779
    %1851 = vmatpush1.msra.mxu0 %v1778
    %1852 = vmatprep.subr.mxu0 %v1776
    %1853 = vmatpush1.msra.mxu0 %v1775
    %1854 = vmatprep.subr.mxu0 %v1773
    %1855 = vmatpush1.msra.mxu0 %v1772
    %1856 = vmatprep.subr.mxu0 %v1770
    %1857 = vmatpush1.msra.mxu0 %v1769
    %1858 = vmatprep.subr.mxu0 %v1767
    %1859 = vmatpush1.msra.mxu0 %v1766
    %1860 = vmatprep.subr.mxu0 %v1764
    %1861 = vmatpush1.msra.mxu0 %v1763
    %1862 = vmatprep.subr.mxu0 %v1761
    %1863 = vmatpush1.msra.mxu0 %v1760
    %1864 = vmatprep.subr.mxu0 %v1758
    %1865 = vmatpush1.msra.mxu0 %v1757
    %1866 = vmatprep.subr.mxu0 %v1755
    %1867 = vmatpush1.msra.mxu0 %v1754
    %1868 = vmatprep.subr.mxu0 %v1752
    %1869 = vmatpush1.msra.mxu0 %v1751
    %1870 = vmatprep.subr.mxu0 %v1749
    %1871 = vmatpush1.msra.mxu0 %v1748
    %1872 = vmatprep.subr.mxu0 %v1746
    %1873 = vmatpush1.msra.mxu0 %v1745
    %1874 = vmatprep.subr.mxu0 %v1743
    %1875 = vmatpush1.msra.mxu0 %v1742
    %1876 = vmatprep.subr.mxu0 %v1740
    %1877 = vmatpush1.msra.mxu0 %v1739
    %1878 = vmatprep.subr.mxu0 %v1737
    %1879 = vmatpush1.msra.mxu0 %v1736
    %1880 = vmatprep.subr.mxu0 %v1734
    %1881 = vmatpush1.msra.mxu0 %v1733
    %1882 = vmatprep.subr.mxu0 0.0
    %1883 = vmatpush2.msra.mxu0 0.0
    %1884 = vmatprep.subr.mxu0 0.0
    %1885 = vmatpush2.msra.mxu0 0.0
    %1886 = vmatprep.subr.mxu0 0.0
    %1887 = vmatpush2.msra.mxu0 0.0
    %1888 = vmatprep.subr.mxu0 0.0
    %1889 = vmatpush2.msra.mxu0 0.0
    %1890 = vmatprep.subr.mxu0 0.0
    %1891 = vmatpush2.msra.mxu0 0.0
    %1892 = vmatprep.subr.mxu0 0.0
    %1893 = vmatpush2.msra.mxu0 0.0
    %1894 = vmatprep.subr.mxu0 0.0
    %1895 = vmatpush2.msra.mxu0 0.0
    %1896 = vmatprep.subr.mxu0 0.0
    %1897 = vmatpush2.msra.mxu0 0.0
    %1898 = vmatprep.subr.mxu0 0.0
    %1899 = vmatpush2.msra.mxu0 0.0
    %1900 = vmatprep.subr.mxu0 0.0
    %1901 = vmatpush2.msra.mxu0 0.0
    %1902 = vmatprep.subr.mxu0 0.0
    %1903 = vmatpush2.msra.mxu0 0.0
    %1904 = vmatprep.subr.mxu0 0.0
    %1905 = vmatpush2.msra.mxu0 0.0
    %1906 = vmatprep.subr.mxu0 0.0
    %1907 = vmatpush2.msra.mxu0 0.0
    %1908 = vmatprep.subr.mxu0 0.0
    %1909 = vmatpush2.msra.mxu0 0.0
    %1910 = vmatprep.subr.mxu0 0.0
    %1911 = vmatpush2.msra.mxu0 0.0
    %1912 = vmatprep.subr.mxu0 0.0
    %1913 = vmatpush2.msra.mxu0 0.0
    %1914 = vmatprep.mubr.f32.mxu0 0.0
    %1915 = vmatmul.mubr.f32.gmra.mxu0 %v1728
    %v1916 = vpop.f32.mrf.mxu0
    %v1917 = vadd.f32 %v1838, %v1916
    %v1918 = vpop.f32.mrf.mxu0
    %v1919 = vadd.f32 %v1842, %v1918
    %1920 = vmatprep.mubr.f32.mxu0 0.0
    %1921 = vmatmul.mubr.f32.gmra.mxu0 %v1731
    %v1922 = vpop.f32.mrf.mxu0
    %v1923 = vadd.f32 %v1838, %v1922
    %v1924 = vpop.f32.mrf.mxu0
    %v1925 = vadd.f32 %v1842, %v1924
    %1926 = vdwg.mxu0
    %1927 = vmatprep.subr.mxu0 0.0
    %1928 = vmatpush1.msra.mxu0 %v1780
    %1929 = vmatprep.subr.mxu0 0.0
    %1930 = vmatpush1.msra.mxu0 %v1777
    %1931 = vmatprep.subr.mxu0 0.0
    %1932 = vmatpush1.msra.mxu0 %v1774
    %1933 = vmatprep.subr.mxu0 0.0
    %1934 = vmatpush1.msra.mxu0 %v1771
    %1935 = vmatprep.subr.mxu0 0.0
    %1936 = vmatpush1.msra.mxu0 %v1768
    %1937 = vmatprep.subr.mxu0 0.0
    %1938 = vmatpush1.msra.mxu0 %v1765
    %1939 = vmatprep.subr.mxu0 0.0
    %1940 = vmatpush1.msra.mxu0 %v1762
    %1941 = vmatprep.subr.mxu0 0.0
    %1942 = vmatpush1.msra.mxu0 %v1759
    %1943 = vmatprep.subr.mxu0 0.0
    %1944 = vmatpush1.msra.mxu0 %v1756
    %1945 = vmatprep.subr.mxu0 0.0
    %1946 = vmatpush1.msra.mxu0 %v1753
    %1947 = vmatprep.subr.mxu0 0.0
    %1948 = vmatpush1.msra.mxu0 %v1750
    %1949 = vmatprep.subr.mxu0 0.0
    %1950 = vmatpush1.msra.mxu0 %v1747
    %1951 = vmatprep.subr.mxu0 0.0
    %1952 = vmatpush1.msra.mxu0 %v1744
    %1953 = vmatprep.subr.mxu0 0.0
    %1954 = vmatpush1.msra.mxu0 %v1741
    %1955 = vmatprep.subr.mxu0 0.0
    %1956 = vmatpush1.msra.mxu0 %v1738
    %1957 = vmatprep.subr.mxu0 0.0
    %1958 = vmatpush1.msra.mxu0 %v1735
    %1959 = vmatprep.subr.mxu0 0.0
    %1960 = vmatpush2.msra.mxu0 0.0
    %1961 = vmatprep.subr.mxu0 0.0
    %1962 = vmatpush2.msra.mxu0 0.0
    %1963 = vmatprep.subr.mxu0 0.0
    %1964 = vmatpush2.msra.mxu0 0.0
    %1965 = vmatprep.subr.mxu0 0.0
    %1966 = vmatpush2.msra.mxu0 0.0
    %1967 = vmatprep.subr.mxu0 0.0
    %1968 = vmatpush2.msra.mxu0 0.0
    %1969 = vmatprep.subr.mxu0 0.0
    %1970 = vmatpush2.msra.mxu0 0.0
    %1971 = vmatprep.subr.mxu0 0.0
    %1972 = vmatpush2.msra.mxu0 0.0
    %1973 = vmatprep.subr.mxu0 0.0
    %1974 = vmatpush2.msra.mxu0 0.0
    %1975 = vmatprep.subr.mxu0 0.0
    %1976 = vmatpush2.msra.mxu0 0.0
    %1977 = vmatprep.subr.mxu0 0.0
    %1978 = vmatpush2.msra.mxu0 0.0
    %1979 = vmatprep.subr.mxu0 0.0
    %1980 = vmatpush2.msra.mxu0 0.0
    %1981 = vmatprep.subr.mxu0 0.0
    %1982 = vmatpush2.msra.mxu0 0.0
    %1983 = vmatprep.subr.mxu0 0.0
    %1984 = vmatpush2.msra.mxu0 0.0
    %1985 = vmatprep.subr.mxu0 0.0
    %1986 = vmatpush2.msra.mxu0 0.0
    %1987 = vmatprep.subr.mxu0 0.0
    %1988 = vmatpush2.msra.mxu0 0.0
    %1989 = vmatprep.subr.mxu0 0.0
    %1990 = vmatpush2.msra.mxu0 0.0
    %1991 = vmatprep.mubr.f32.mxu0 0.0
    %1992 = vmatmul.mubr.f32.gmra.mxu0 %v1728
    %v1993 = vpop.f32.mrf.mxu0
    %v1994 = vadd.f32 %v1846, %v1993
    %v1995 = vpop.f32.mrf.mxu0
    %1996 = vmatprep.mubr.f32.mxu0 0.0
    %1997 = vmatmul.mubr.f32.gmra.mxu0 %v1731
    %v1998 = vpop.f32.mrf.mxu0
    %v1999 = vadd.f32 %v1846, %v1998
    %v2000 = vpop.f32.mrf.mxu0
    %2001 = vdwg.mxu0
    %v2003 = vlaneseq
    %v2004 = vshrl.u32 %v2003, 7
    %v2005 = vsub.s32 0, %v2004
    %v2006 = vrot.slane %v1833, %v2005
    %v2007 = vlaneseq
    %v2008 = vshrl.u32 %v2007, 7
    %v2009 = vsub.s32 1, %v2008
    %v2010 = vrot.slane %v1833, %v2009
    %v2011 = vlaneseq
    %v2012 = vshrl.u32 %v2011, 7
    %v2013 = vsub.s32 2, %v2012
    %v2014 = vrot.slane %v1833, %v2013
    %2018 = vmatprep.subr.mxu0 %v1828
    %2019 = vmatpush1.msra.mxu0 %v1827
    %2020 = vmatprep.subr.mxu0 %v1825
    %2021 = vmatpush1.msra.mxu0 %v1824
    %2022 = vmatprep.subr.mxu0 %v1822
    %2023 = vmatpush1.msra.mxu0 %v1821
    %2024 = vmatprep.subr.mxu0 %v1819
    %2025 = vmatpush1.msra.mxu0 %v1818
    %2026 = vmatprep.subr.mxu0 %v1816
    %2027 = vmatpush1.msra.mxu0 %v1815
    %2028 = vmatprep.subr.mxu0 %v1813
    %2029 = vmatpush1.msra.mxu0 %v1812
    %2030 = vmatprep.subr.mxu0 %v1810
    %2031 = vmatpush1.msra.mxu0 %v1809
    %2032 = vmatprep.subr.mxu0 %v1807
    %2033 = vmatpush1.msra.mxu0 %v1806
    %2034 = vmatprep.subr.mxu0 %v1804
    %2035 = vmatpush1.msra.mxu0 %v1803
    %2036 = vmatprep.subr.mxu0 %v1801
    %2037 = vmatpush1.msra.mxu0 %v1800
    %2038 = vmatprep.subr.mxu0 %v1798
    %2039 = vmatpush1.msra.mxu0 %v1797
    %2040 = vmatprep.subr.mxu0 %v1795
    %2041 = vmatpush1.msra.mxu0 %v1794
    %2042 = vmatprep.subr.mxu0 %v1792
    %2043 = vmatpush1.msra.mxu0 %v1791
    %2044 = vmatprep.subr.mxu0 %v1789
    %2045 = vmatpush1.msra.mxu0 %v1788
    %2046 = vmatprep.subr.mxu0 %v1786
    %2047 = vmatpush1.msra.mxu0 %v1785
    %2048 = vmatprep.subr.mxu0 %v1783
    %2049 = vmatpush1.msra.mxu0 %v1782
    %2050 = vmatprep.subr.mxu0 0.0
    %2051 = vmatpush2.msra.mxu0 0.0
    %2052 = vmatprep.subr.mxu0 0.0
    %2053 = vmatpush2.msra.mxu0 0.0
    %2054 = vmatprep.subr.mxu0 0.0
    %2055 = vmatpush2.msra.mxu0 0.0
    %2056 = vmatprep.subr.mxu0 0.0
    %2057 = vmatpush2.msra.mxu0 0.0
    %2058 = vmatprep.subr.mxu0 0.0
    %2059 = vmatpush2.msra.mxu0 0.0
    %2060 = vmatprep.subr.mxu0 0.0
    %2061 = vmatpush2.msra.mxu0 0.0
    %2062 = vmatprep.subr.mxu0 0.0
    %2063 = vmatpush2.msra.mxu0 0.0
    %2064 = vmatprep.subr.mxu0 0.0
    %2065 = vmatpush2.msra.mxu0 0.0
    %2066 = vmatprep.subr.mxu0 0.0
    %2067 = vmatpush2.msra.mxu0 0.0
    %2068 = vmatprep.subr.mxu0 0.0
    %2069 = vmatpush2.msra.mxu0 0.0
    %2070 = vmatprep.subr.mxu0 0.0
    %2071 = vmatpush2.msra.mxu0 0.0
    %2072 = vmatprep.subr.mxu0 0.0
    %2073 = vmatpush2.msra.mxu0 0.0
    %2074 = vmatprep.subr.mxu0 0.0
    %2075 = vmatpush2.msra.mxu0 0.0
    %2076 = vmatprep.subr.mxu0 0.0
    %2077 = vmatpush2.msra.mxu0 0.0
    %2078 = vmatprep.subr.mxu0 0.0
    %2079 = vmatpush2.msra.mxu0 0.0
    %2080 = vmatprep.subr.mxu0 0.0
    %2081 = vmatpush2.msra.mxu0 0.0
    %2082 = vmatprep.mubr.f32.mxu0 0.0
    %2083 = vmatmul.mubr.f32.gmra.mxu0 0.0
    %v2084 = vpop.f32.mrf.mxu0
    %v2085 = vadd.f32 %v2006, %v2084
    %v2086 = vpop.f32.mrf.mxu0
    %v2087 = vadd.f32 %v2010, %v2086
    %2088 = vdwg.mxu0
    %2089 = vmatprep.subr.mxu0 0.0
    %2090 = vmatpush1.msra.mxu0 %v1829
    %2091 = vmatprep.subr.mxu0 0.0
    %2092 = vmatpush1.msra.mxu0 %v1826
    %2093 = vmatprep.subr.mxu0 0.0
    %2094 = vmatpush1.msra.mxu0 %v1823
    %2095 = vmatprep.subr.mxu0 0.0
    %2096 = vmatpush1.msra.mxu0 %v1820
    %2097 = vmatprep.subr.mxu0 0.0
    %2098 = vmatpush1.msra.mxu0 %v1817
    %2099 = vmatprep.subr.mxu0 0.0
    %2100 = vmatpush1.msra.mxu0 %v1814
    %2101 = vmatprep.subr.mxu0 0.0
    %2102 = vmatpush1.msra.mxu0 %v1811
    %2103 = vmatprep.subr.mxu0 0.0
    %2104 = vmatpush1.msra.mxu0 %v1808
    %2105 = vmatprep.subr.mxu0 0.0
    %2106 = vmatpush1.msra.mxu0 %v1805
    %2107 = vmatprep.subr.mxu0 0.0
    %2108 = vmatpush1.msra.mxu0 %v1802
    %2109 = vmatprep.subr.mxu0 0.0
    %2110 = vmatpush1.msra.mxu0 %v1799
    %2111 = vmatprep.subr.mxu0 0.0
    %2112 = vmatpush1.msra.mxu0 %v1796
    %2113 = vmatprep.subr.mxu0 0.0
    %2114 = vmatpush1.msra.mxu0 %v1793
    %2115 = vmatprep.subr.mxu0 0.0
    %2116 = vmatpush1.msra.mxu0 %v1790
    %2117 = vmatprep.subr.mxu0 0.0
    %2118 = vmatpush1.msra.mxu0 %v1787
    %2119 = vmatprep.subr.mxu0 0.0
    %2120 = vmatpush1.msra.mxu0 %v1784
    %2121 = vmatprep.subr.mxu0 0.0
    %2122 = vmatpush2.msra.mxu0 0.0
    %2123 = vmatprep.subr.mxu0 0.0
    %2124 = vmatpush2.msra.mxu0 0.0
    %2125 = vmatprep.subr.mxu0 0.0
    %2126 = vmatpush2.msra.mxu0 0.0
    %2127 = vmatprep.subr.mxu0 0.0
    %2128 = vmatpush2.msra.mxu0 0.0
    %2129 = vmatprep.subr.mxu0 0.0
    %2130 = vmatpush2.msra.mxu0 0.0
    %2131 = vmatprep.subr.mxu0 0.0
    %2132 = vmatpush2.msra.mxu0 0.0
    %2133 = vmatprep.subr.mxu0 0.0
    %2134 = vmatpush2.msra.mxu0 0.0
    %2135 = vmatprep.subr.mxu0 0.0
    %2136 = vmatpush2.msra.mxu0 0.0
    %2137 = vmatprep.subr.mxu0 0.0
    %2138 = vmatpush2.msra.mxu0 0.0
    %2139 = vmatprep.subr.mxu0 0.0
    %2140 = vmatpush2.msra.mxu0 0.0
    %2141 = vmatprep.subr.mxu0 0.0
    %2142 = vmatpush2.msra.mxu0 0.0
    %2143 = vmatprep.subr.mxu0 0.0
    %2144 = vmatpush2.msra.mxu0 0.0
    %2145 = vmatprep.subr.mxu0 0.0
    %2146 = vmatpush2.msra.mxu0 0.0
    %2147 = vmatprep.subr.mxu0 0.0
    %2148 = vmatpush2.msra.mxu0 0.0
    %2149 = vmatprep.subr.mxu0 0.0
    %2150 = vmatpush2.msra.mxu0 0.0
    %2151 = vmatprep.subr.mxu0 0.0
    %2152 = vmatpush2.msra.mxu0 0.0
    %2153 = vmatprep.mubr.f32.mxu0 0.0
    %2154 = vmatmul.mubr.f32.gmra.mxu0 0.0
    %v2155 = vpop.f32.mrf.mxu0
    %v2156 = vadd.f32 %v2014, %v2155
    %v2157 = vpop.f32.mrf.mxu0
    %2158 = vdwg.mxu0
    %v2159 = vadd.f32 %v1917, %v2085
    %v2160 = vadd.f32 %v1919, %v2087
    %v2161 = vxor.u32 %v2159, 2147483648
    %v2162 = vxor.u32 %v2160, 2147483648
    %v2163 = vmul.f32 %v2161, 1.442695
    %v2164 = vpow.pop %v2163
    %v2165 = vmul.f32 %v2162, 1.442695
    %v2166 = vpow.pop %v2165
    %v2167 = vadd.f32 %v2164, 1.0
    %v2168 = vadd.f32 %v2166, 1.0
    %v2169 = vrcp.pop %v2167
    %v2170 = vmul.f32 1.0, %v2169
    %v2171 = vrcp.pop %v2168
    %v2172 = vmul.f32 1.0, %v2171
    %v2173 = vmul.f32 %v2170, %v2156
    %v2174 = vadd.f32 %v1994, %v2173
    %v2175 = vtanh.pop %v2174
    %v2176 = vsub.f32 1.0, %v2172
    %v2177 = vmul.f32 %v2176, %v2175
    %v2178 = vmul.f32 %v2172, 0.0
    %v2179 = vadd.f32 %v2177, %v2178
    %2180 = vmatprep.subr.mxu0 %v1828
    %2181 = vmatpush1.msra.mxu0 %v1827
    %2182 = vmatprep.subr.mxu0 %v1825
    %2183 = vmatpush1.msra.mxu0 %v1824
    %2184 = vmatprep.subr.mxu0 %v1822
    %2185 = vmatpush1.msra.mxu0 %v1821
    %2186 = vmatprep.subr.mxu0 %v1819
    %2187 = vmatpush1.msra.mxu0 %v1818
    %2188 = vmatprep.subr.mxu0 %v1816
    %2189 = vmatpush1.msra.mxu0 %v1815
    %2190 = vmatprep.subr.mxu0 %v1813
    %2191 = vmatpush1.msra.mxu0 %v1812
    %2192 = vmatprep.subr.mxu0 %v1810
    %2193 = vmatpush1.msra.mxu0 %v1809
    %2194 = vmatprep.subr.mxu0 %v1807
    %2195 = vmatpush1.msra.mxu0 %v1806
    %2196 = vmatprep.subr.mxu0 %v1804
    %2197 = vmatpush1.msra.mxu0 %v1803
    %2198 = vmatprep.subr.mxu0 %v1801
    %2199 = vmatpush1.msra.mxu0 %v1800
    %2200 = vmatprep.subr.mxu0 %v1798
    %2201 = vmatpush1.msra.mxu0 %v1797
    %2202 = vmatprep.subr.mxu0 %v1795
    %2203 = vmatpush1.msra.mxu0 %v1794
    %2204 = vmatprep.subr.mxu0 %v1792
    %2205 = vmatpush1.msra.mxu0 %v1791
    %2206 = vmatprep.subr.mxu0 %v1789
    %2207 = vmatpush1.msra.mxu0 %v1788
    %2208 = vmatprep.subr.mxu0 %v1786
    %2209 = vmatpush1.msra.mxu0 %v1785
    %2210 = vmatprep.subr.mxu0 %v1783
    %2211 = vmatpush1.msra.mxu0 %v1782
    %2212 = vmatprep.subr.mxu0 0.0
    %2213 = vmatpush2.msra.mxu0 0.0
    %2214 = vmatprep.subr.mxu0 0.0
    %2215 = vmatpush2.msra.mxu0 0.0
    %2216 = vmatprep.subr.mxu0 0.0
    %2217 = vmatpush2.msra.mxu0 0.0
    %2218 = vmatprep.subr.mxu0 0.0
    %2219 = vmatpush2.msra.mxu0 0.0
    %2220 = vmatprep.subr.mxu0 0.0
    %2221 = vmatpush2.msra.mxu0 0.0
    %2222 = vmatprep.subr.mxu0 0.0
    %2223 = vmatpush2.msra.mxu0 0.0
    %2224 = vmatprep.subr.mxu0 0.0
    %2225 = vmatpush2.msra.mxu0 0.0
    %2226 = vmatprep.subr.mxu0 0.0
    %2227 = vmatpush2.msra.mxu0 0.0
    %2228 = vmatprep.subr.mxu0 0.0
    %2229 = vmatpush2.msra.mxu0 0.0
    %2230 = vmatprep.subr.mxu0 0.0
    %2231 = vmatpush2.msra.mxu0 0.0
    %2232 = vmatprep.subr.mxu0 0.0
    %2233 = vmatpush2.msra.mxu0 0.0
    %2234 = vmatprep.subr.mxu0 0.0
    %2235 = vmatpush2.msra.mxu0 0.0
    %2236 = vmatprep.subr.mxu0 0.0
    %2237 = vmatpush2.msra.mxu0 0.0
    %2238 = vmatprep.subr.mxu0 0.0
    %2239 = vmatpush2.msra.mxu0 0.0
    %2240 = vmatprep.subr.mxu0 0.0
    %2241 = vmatpush2.msra.mxu0 0.0
    %2242 = vmatprep.subr.mxu0 0.0
    %2243 = vmatpush2.msra.mxu0 0.0
    %2244 = vmatprep.mubr.f32.mxu0 0.0
    %2245 = vmatmul.mubr.f32.gmra.mxu0 %v2179
    %v2246 = vpop.f32.mrf.mxu0
    %v2247 = vadd.f32 %v2006, %v2246
    %v2248 = vpop.f32.mrf.mxu0
    %v2249 = vadd.f32 %v2010, %v2248
    %2250 = vdwg.mxu0
    %2251 = vmatprep.subr.mxu0 0.0
    %2252 = vmatpush1.msra.mxu0 %v1829
    %2253 = vmatprep.subr.mxu0 0.0
    %2254 = vmatpush1.msra.mxu0 %v1826
    %2255 = vmatprep.subr.mxu0 0.0
    %2256 = vmatpush1.msra.mxu0 %v1823
    %2257 = vmatprep.subr.mxu0 0.0
    %2258 = vmatpush1.msra.mxu0 %v1820
    %2259 = vmatprep.subr.mxu0 0.0
    %2260 = vmatpush1.msra.mxu0 %v1817
    %2261 = vmatprep.subr.mxu0 0.0
    %2262 = vmatpush1.msra.mxu0 %v1814
    %2263 = vmatprep.subr.mxu0 0.0
    %2264 = vmatpush1.msra.mxu0 %v1811
    %2265 = vmatprep.subr.mxu0 0.0
    %2266 = vmatpush1.msra.mxu0 %v1808
    %2267 = vmatprep.subr.mxu0 0.0
    %2268 = vmatpush1.msra.mxu0 %v1805
    %2269 = vmatprep.subr.mxu0 0.0
    %2270 = vmatpush1.msra.mxu0 %v1802
    %2271 = vmatprep.subr.mxu0 0.0
    %2272 = vmatpush1.msra.mxu0 %v1799
    %2273 = vmatprep.subr.mxu0 0.0
    %2274 = vmatpush1.msra.mxu0 %v1796
    %2275 = vmatprep.subr.mxu0 0.0
    %2276 = vmatpush1.msra.mxu0 %v1793
    %2277 = vmatprep.subr.mxu0 0.0
    %2278 = vmatpush1.msra.mxu0 %v1790
    %2279 = vmatprep.subr.mxu0 0.0
    %2280 = vmatpush1.msra.mxu0 %v1787
    %2281 = vmatprep.subr.mxu0 0.0
    %2282 = vmatpush1.msra.mxu0 %v1784
    %2283 = vmatprep.subr.mxu0 0.0
    %2284 = vmatpush2.msra.mxu0 0.0
    %2285 = vmatprep.subr.mxu0 0.0
    %2286 = vmatpush2.msra.mxu0 0.0
    %2287 = vmatprep.subr.mxu0 0.0
    %2288 = vmatpush2.msra.mxu0 0.0
    %2289 = vmatprep.subr.mxu0 0.0
    %2290 = vmatpush2.msra.mxu0 0.0
    %2291 = vmatprep.subr.mxu0 0.0
    %2292 = vmatpush2.msra.mxu0 0.0
    %2293 = vmatprep.subr.mxu0 0.0
    %2294 = vmatpush2.msra.mxu0 0.0
    %2295 = vmatprep.subr.mxu0 0.0
    %2296 = vmatpush2.msra.mxu0 0.0
    %2297 = vmatprep.subr.mxu0 0.0
    %2298 = vmatpush2.msra.mxu0 0.0
    %2299 = vmatprep.subr.mxu0 0.0
    %2300 = vmatpush2.msra.mxu0 0.0
    %2301 = vmatprep.subr.mxu0 0.0
    %2302 = vmatpush2.msra.mxu0 0.0
    %2303 = vmatprep.subr.mxu0 0.0
    %2304 = vmatpush2.msra.mxu0 0.0
    %2305 = vmatprep.subr.mxu0 0.0
    %2306 = vmatpush2.msra.mxu0 0.0
    %2307 = vmatprep.subr.mxu0 0.0
    %2308 = vmatpush2.msra.mxu0 0.0
    %2309 = vmatprep.subr.mxu0 0.0
    %2310 = vmatpush2.msra.mxu0 0.0
    %2311 = vmatprep.subr.mxu0 0.0
    %2312 = vmatpush2.msra.mxu0 0.0
    %2313 = vmatprep.subr.mxu0 0.0
    %2314 = vmatpush2.msra.mxu0 0.0
    %2315 = vmatprep.mubr.f32.mxu0 0.0
    %2316 = vmatmul.mubr.f32.gmra.mxu0 %v2179
    %v2317 = vpop.f32.mrf.mxu0
    %v2318 = vadd.f32 %v2014, %v2317
    %v2319 = vpop.f32.mrf.mxu0
    %2320 = vdwg.mxu0
    %v2323 = vrot.slane %v2247, 6
    %v2324 = vrot.slane %v2249, 6
    %v2327 = vadd.f32 %v1917, %v2323
    %v2328 = vadd.f32 %v1919, %v2324
    %v2329 = vxor.u32 %v2327, 2147483648
    %v2330 = vxor.u32 %v2328, 2147483648
    %v2331 = vmul.f32 %v2329, 1.442695
    %v2332 = vpow.pop %v2331
    %v2333 = vmul.f32 %v2330, 1.442695
    %v2334 = vpow.pop %v2333
    %v2335 = vadd.f32 %v2332, 1.0
    %v2336 = vadd.f32 %v2334, 1.0
    %v2337 = vrcp.pop %v2335
    %v2338 = vmul.f32 1.0, %v2337
    %v2339 = vrcp.pop %v2336
    %v2340 = vmul.f32 1.0, %v2339
    %v2342 = vrot.slane %v2318, 6
    %v2344 = vmul.f32 %v2338, %v2342
    %v2345 = vadd.f32 %v1994, %v2344
    %v2346 = vtanh.pop %v2345
    %v2347 = vsub.f32 1.0, %v2340
    %v2348 = vmul.f32 %v2347, %v2346
    %v2350 = vrot.slane %v2179, 6
    %v2352 = vmul.f32 %v2340, %v2350
    %v2353 = vadd.f32 %v2348, %v2352
    %v2355 = vrot.slane %v2353, 2
    %2357 = vmatprep.subr.mxu0 %v1828
    %2358 = vmatpush1.msra.mxu0 %v1827
    %2359 = vmatprep.subr.mxu0 %v1825
    %2360 = vmatpush1.msra.mxu0 %v1824
    %2361 = vmatprep.subr.mxu0 %v1822
    %2362 = vmatpush1.msra.mxu0 %v1821
    %2363 = vmatprep.subr.mxu0 %v1819
    %2364 = vmatpush1.msra.mxu0 %v1818
    %2365 = vmatprep.subr.mxu0 %v1816
    %2366 = vmatpush1.msra.mxu0 %v1815
    %2367 = vmatprep.subr.mxu0 %v1813
    %2368 = vmatpush1.msra.mxu0 %v1812
    %2369 = vmatprep.subr.mxu0 %v1810
    %2370 = vmatpush1.msra.mxu0 %v1809
    %2371 = vmatprep.subr.mxu0 %v1807
    %2372 = vmatpush1.msra.mxu0 %v1806
    %2373 = vmatprep.subr.mxu0 %v1804
    %2374 = vmatpush1.msra.mxu0 %v1803
    %2375 = vmatprep.subr.mxu0 %v1801
    %2376 = vmatpush1.msra.mxu0 %v1800
    %2377 = vmatprep.subr.mxu0 %v1798
    %2378 = vmatpush1.msra.mxu0 %v1797
    %2379 = vmatprep.subr.mxu0 %v1795
    %2380 = vmatpush1.msra.mxu0 %v1794
    %2381 = vmatprep.subr.mxu0 %v1792
    %2382 = vmatpush1.msra.mxu0 %v1791
    %2383 = vmatprep.subr.mxu0 %v1789
    %2384 = vmatpush1.msra.mxu0 %v1788
    %2385 = vmatprep.subr.mxu0 %v1786
    %2386 = vmatpush1.msra.mxu0 %v1785
    %2387 = vmatprep.subr.mxu0 %v1783
    %2388 = vmatpush1.msra.mxu0 %v1782
    %2389 = vmatprep.subr.mxu0 0.0
    %2390 = vmatpush2.msra.mxu0 0.0
    %2391 = vmatprep.subr.mxu0 0.0
    %2392 = vmatpush2.msra.mxu0 0.0
    %2393 = vmatprep.subr.mxu0 0.0
    %2394 = vmatpush2.msra.mxu0 0.0
    %2395 = vmatprep.subr.mxu0 0.0
    %2396 = vmatpush2.msra.mxu0 0.0
    %2397 = vmatprep.subr.mxu0 0.0
    %2398 = vmatpush2.msra.mxu0 0.0
    %2399 = vmatprep.subr.mxu0 0.0
    %2400 = vmatpush2.msra.mxu0 0.0
    %2401 = vmatprep.subr.mxu0 0.0
    %2402 = vmatpush2.msra.mxu0 0.0
    %2403 = vmatprep.subr.mxu0 0.0
    %2404 = vmatpush2.msra.mxu0 0.0
    %2405 = vmatprep.subr.mxu0 0.0
    %2406 = vmatpush2.msra.mxu0 0.0
    %2407 = vmatprep.subr.mxu0 0.0
    %2408 = vmatpush2.msra.mxu0 0.0
    %2409 = vmatprep.subr.mxu0 0.0
    %2410 = vmatpush2.msra.mxu0 0.0
    %2411 = vmatprep.subr.mxu0 0.0
    %2412 = vmatpush2.msra.mxu0 0.0
    %2413 = vmatprep.subr.mxu0 0.0
    %2414 = vmatpush2.msra.mxu0 0.0
    %2415 = vmatprep.subr.mxu0 0.0
    %2416 = vmatpush2.msra.mxu0 0.0
    %2417 = vmatprep.subr.mxu0 0.0
    %2418 = vmatpush2.msra.mxu0 0.0
    %2419 = vmatprep.subr.mxu0 0.0
    %2420 = vmatpush2.msra.mxu0 0.0
    %2421 = vmatprep.mubr.f32.mxu0 0.0
    %2422 = vmatmul.mubr.f32.gmra.mxu0 %v2355
    %v2423 = vpop.f32.mrf.mxu0
    %v2424 = vadd.f32 %v2006, %v2423
    %v2425 = vpop.f32.mrf.mxu0
    %v2426 = vadd.f32 %v2010, %v2425
    %2427 = vdwg.mxu0
    %2428 = vmatprep.subr.mxu0 0.0
    %2429 = vmatpush1.msra.mxu0 %v1829
    %2430 = vmatprep.subr.mxu0 0.0
    %2431 = vmatpush1.msra.mxu0 %v1826
    %2432 = vmatprep.subr.mxu0 0.0
    %2433 = vmatpush1.msra.mxu0 %v1823
    %2434 = vmatprep.subr.mxu0 0.0
    %2435 = vmatpush1.msra.mxu0 %v1820
    %2436 = vmatprep.subr.mxu0 0.0
    %2437 = vmatpush1.msra.mxu0 %v1817
    %2438 = vmatprep.subr.mxu0 0.0
    %2439 = vmatpush1.msra.mxu0 %v1814
    %2440 = vmatprep.subr.mxu0 0.0
    %2441 = vmatpush1.msra.mxu0 %v1811
    %2442 = vmatprep.subr.mxu0 0.0
    %2443 = vmatpush1.msra.mxu0 %v1808
    %2444 = vmatprep.subr.mxu0 0.0
    %2445 = vmatpush1.msra.mxu0 %v1805
    %2446 = vmatprep.subr.mxu0 0.0
    %2447 = vmatpush1.msra.mxu0 %v1802
    %2448 = vmatprep.subr.mxu0 0.0
    %2449 = vmatpush1.msra.mxu0 %v1799
    %2450 = vmatprep.subr.mxu0 0.0
    %2451 = vmatpush1.msra.mxu0 %v1796
    %2452 = vmatprep.subr.mxu0 0.0
    %2453 = vmatpush1.msra.mxu0 %v1793
    %2454 = vmatprep.subr.mxu0 0.0
    %2455 = vmatpush1.msra.mxu0 %v1790
    %2456 = vmatprep.subr.mxu0 0.0
    %2457 = vmatpush1.msra.mxu0 %v1787
    %2458 = vmatprep.subr.mxu0 0.0
    %2459 = vmatpush1.msra.mxu0 %v1784
    %2460 = vmatprep.subr.mxu0 0.0
    %2461 = vmatpush2.msra.mxu0 0.0
    %2462 = vmatprep.subr.mxu0 0.0
    %2463 = vmatpush2.msra.mxu0 0.0
    %2464 = vmatprep.subr.mxu0 0.0
    %2465 = vmatpush2.msra.mxu0 0.0
    %2466 = vmatprep.subr.mxu0 0.0
    %2467 = vmatpush2.msra.mxu0 0.0
    %2468 = vmatprep.subr.mxu0 0.0
    %2469 = vmatpush2.msra.mxu0 0.0
    %2470 = vmatprep.subr.mxu0 0.0
    %2471 = vmatpush2.msra.mxu0 0.0
    %2472 = vmatprep.subr.mxu0 0.0
    %2473 = vmatpush2.msra.mxu0 0.0
    %2474 = vmatprep.subr.mxu0 0.0
    %2475 = vmatpush2.msra.mxu0 0.0
    %2476 = vmatprep.subr.mxu0 0.0
    %2477 = vmatpush2.msra.mxu0 0.0
    %2478 = vmatprep.subr.mxu0 0.0
    %2479 = vmatpush2.msra.mxu0 0.0
    %2480 = vmatprep.subr.mxu0 0.0
    %2481 = vmatpush2.msra.mxu0 0.0
    %2482 = vmatprep.subr.mxu0 0.0
    %2483 = vmatpush2.msra.mxu0 0.0
    %2484 = vmatprep.subr.mxu0 0.0
    %2485 = vmatpush2.msra.mxu0 0.0
    %2486 = vmatprep.subr.mxu0 0.0
    %2487 = vmatpush2.msra.mxu0 0.0
    %2488 = vmatprep.subr.mxu0 0.0
    %2489 = vmatpush2.msra.mxu0 0.0
    %2490 = vmatprep.subr.mxu0 0.0
    %2491 = vmatpush2.msra.mxu0 0.0
    %2492 = vmatprep.mubr.f32.mxu0 0.0
    %2493 = vmatmul.mubr.f32.gmra.mxu0 %v2355
    %v2494 = vpop.f32.mrf.mxu0
    %v2495 = vadd.f32 %v2014, %v2494
    %v2496 = vpop.f32.mrf.mxu0
    %2497 = vdwg.mxu0
    %v2500 = vrot.slane %v2424, 4
    %v2501 = vrot.slane %v2426, 4
    %v2504 = vadd.f32 %v1917, %v2500
    %v2505 = vadd.f32 %v1919, %v2501
    %v2506 = vxor.u32 %v2504, 2147483648
    %v2507 = vxor.u32 %v2505, 2147483648
    %v2508 = vmul.f32 %v2506, 1.442695
    %v2509 = vpow.pop %v2508
    %v2510 = vmul.f32 %v2507, 1.442695
    %v2511 = vpow.pop %v2510
    %v2512 = vadd.f32 %v2509, 1.0
    %v2513 = vadd.f32 %v2511, 1.0
    %v2514 = vrcp.pop %v2512
    %v2515 = vmul.f32 1.0, %v2514
    %v2516 = vrcp.pop %v2513
    %v2517 = vmul.f32 1.0, %v2516
    %v2519 = vrot.slane %v2495, 4
    %v2521 = vmul.f32 %v2515, %v2519
    %v2522 = vadd.f32 %v1994, %v2521
    %v2523 = vtanh.pop %v2522
    %v2524 = vsub.f32 1.0, %v2517
    %v2525 = vmul.f32 %v2524, %v2523
    %v2526 = vrot.slane %v2353, 6
    %v2528 = vmul.f32 %v2517, %v2526
    %v2529 = vadd.f32 %v2525, %v2528
    %v2531 = vrot.slane %v2529, 4
    %2533 = vmatprep.subr.mxu0 %v1828
    %2534 = vmatpush1.msra.mxu0 %v1827
    %2535 = vmatprep.subr.mxu0 %v1825
    %2536 = vmatpush1.msra.mxu0 %v1824
    %2537 = vmatprep.subr.mxu0 %v1822
    %2538 = vmatpush1.msra.mxu0 %v1821
    %2539 = vmatprep.subr.mxu0 %v1819
    %2540 = vmatpush1.msra.mxu0 %v1818
    %2541 = vmatprep.subr.mxu0 %v1816
    %2542 = vmatpush1.msra.mxu0 %v1815
    %2543 = vmatprep.subr.mxu0 %v1813
    %2544 = vmatpush1.msra.mxu0 %v1812
    %2545 = vmatprep.subr.mxu0 %v1810
    %2546 = vmatpush1.msra.mxu0 %v1809
    %2547 = vmatprep.subr.mxu0 %v1807
    %2548 = vmatpush1.msra.mxu0 %v1806
    %2549 = vmatprep.subr.mxu0 %v1804
    %2550 = vmatpush1.msra.mxu0 %v1803
    %2551 = vmatprep.subr.mxu0 %v1801
    %2552 = vmatpush1.msra.mxu0 %v1800
    %2553 = vmatprep.subr.mxu0 %v1798
    %2554 = vmatpush1.msra.mxu0 %v1797
    %2555 = vmatprep.subr.mxu0 %v1795
    %2556 = vmatpush1.msra.mxu0 %v1794
    %2557 = vmatprep.subr.mxu0 %v1792
    %2558 = vmatpush1.msra.mxu0 %v1791
    %2559 = vmatprep.subr.mxu0 %v1789
    %2560 = vmatpush1.msra.mxu0 %v1788
    %2561 = vmatprep.subr.mxu0 %v1786
    %2562 = vmatpush1.msra.mxu0 %v1785
    %2563 = vmatprep.subr.mxu0 %v1783
    %2564 = vmatpush1.msra.mxu0 %v1782
    %2565 = vmatprep.subr.mxu0 0.0
    %2566 = vmatpush2.msra.mxu0 0.0
    %2567 = vmatprep.subr.mxu0 0.0
    %2568 = vmatpush2.msra.mxu0 0.0
    %2569 = vmatprep.subr.mxu0 0.0
    %2570 = vmatpush2.msra.mxu0 0.0
    %2571 = vmatprep.subr.mxu0 0.0
    %2572 = vmatpush2.msra.mxu0 0.0
    %2573 = vmatprep.subr.mxu0 0.0
    %2574 = vmatpush2.msra.mxu0 0.0
    %2575 = vmatprep.subr.mxu0 0.0
    %2576 = vmatpush2.msra.mxu0 0.0
    %2577 = vmatprep.subr.mxu0 0.0
    %2578 = vmatpush2.msra.mxu0 0.0
    %2579 = vmatprep.subr.mxu0 0.0
    %2580 = vmatpush2.msra.mxu0 0.0
    %2581 = vmatprep.subr.mxu0 0.0
    %2582 = vmatpush2.msra.mxu0 0.0
    %2583 = vmatprep.subr.mxu0 0.0
    %2584 = vmatpush2.msra.mxu0 0.0
    %2585 = vmatprep.subr.mxu0 0.0
    %2586 = vmatpush2.msra.mxu0 0.0
    %2587 = vmatprep.subr.mxu0 0.0
    %2588 = vmatpush2.msra.mxu0 0.0
    %2589 = vmatprep.subr.mxu0 0.0
    %2590 = vmatpush2.msra.mxu0 0.0
    %2591 = vmatprep.subr.mxu0 0.0
    %2592 = vmatpush2.msra.mxu0 0.0
    %2593 = vmatprep.subr.mxu0 0.0
    %2594 = vmatpush2.msra.mxu0 0.0
    %2595 = vmatprep.subr.mxu0 0.0
    %2596 = vmatpush2.msra.mxu0 0.0
    %2597 = vmatprep.mubr.f32.mxu0 0.0
    %2598 = vmatmul.mubr.f32.gmra.mxu0 %v2531
    %v2599 = vpop.f32.mrf.mxu0
    %v2600 = vadd.f32 %v2006, %v2599
    %v2601 = vpop.f32.mrf.mxu0
    %v2602 = vadd.f32 %v2010, %v2601
    %2603 = vdwg.mxu0
    %2604 = vmatprep.subr.mxu0 0.0
    %2605 = vmatpush1.msra.mxu0 %v1829
    %2606 = vmatprep.subr.mxu0 0.0
    %2607 = vmatpush1.msra.mxu0 %v1826
    %2608 = vmatprep.subr.mxu0 0.0
    %2609 = vmatpush1.msra.mxu0 %v1823
    %2610 = vmatprep.subr.mxu0 0.0
    %2611 = vmatpush1.msra.mxu0 %v1820
    %2612 = vmatprep.subr.mxu0 0.0
    %2613 = vmatpush1.msra.mxu0 %v1817
    %2614 = vmatprep.subr.mxu0 0.0
    %2615 = vmatpush1.msra.mxu0 %v1814
    %2616 = vmatprep.subr.mxu0 0.0
    %2617 = vmatpush1.msra.mxu0 %v1811
    %2618 = vmatprep.subr.mxu0 0.0
    %2619 = vmatpush1.msra.mxu0 %v1808
    %2620 = vmatprep.subr.mxu0 0.0
    %2621 = vmatpush1.msra.mxu0 %v1805
    %2622 = vmatprep.subr.mxu0 0.0
    %2623 = vmatpush1.msra.mxu0 %v1802
    %2624 = vmatprep.subr.mxu0 0.0
    %2625 = vmatpush1.msra.mxu0 %v1799
    %2626 = vmatprep.subr.mxu0 0.0
    %2627 = vmatpush1.msra.mxu0 %v1796
    %2628 = vmatprep.subr.mxu0 0.0
    %2629 = vmatpush1.msra.mxu0 %v1793
    %2630 = vmatprep.subr.mxu0 0.0
    %2631 = vmatpush1.msra.mxu0 %v1790
    %2632 = vmatprep.subr.mxu0 0.0
    %2633 = vmatpush1.msra.mxu0 %v1787
    %2634 = vmatprep.subr.mxu0 0.0
    %2635 = vmatpush1.msra.mxu0 %v1784
    %2636 = vmatprep.subr.mxu0 0.0
    %2637 = vmatpush2.msra.mxu0 0.0
    %2638 = vmatprep.subr.mxu0 0.0
    %2639 = vmatpush2.msra.mxu0 0.0
    %2640 = vmatprep.subr.mxu0 0.0
    %2641 = vmatpush2.msra.mxu0 0.0
    %2642 = vmatprep.subr.mxu0 0.0
    %2643 = vmatpush2.msra.mxu0 0.0
    %2644 = vmatprep.subr.mxu0 0.0
    %2645 = vmatpush2.msra.mxu0 0.0
    %2646 = vmatprep.subr.mxu0 0.0
    %2647 = vmatpush2.msra.mxu0 0.0
    %2648 = vmatprep.subr.mxu0 0.0
    %2649 = vmatpush2.msra.mxu0 0.0
    %2650 = vmatprep.subr.mxu0 0.0
    %2651 = vmatpush2.msra.mxu0 0.0
    %2652 = vmatprep.subr.mxu0 0.0
    %2653 = vmatpush2.msra.mxu0 0.0
    %2654 = vmatprep.subr.mxu0 0.0
    %2655 = vmatpush2.msra.mxu0 0.0
    %2656 = vmatprep.subr.mxu0 0.0
    %2657 = vmatpush2.msra.mxu0 0.0
    %2658 = vmatprep.subr.mxu0 0.0
    %2659 = vmatpush2.msra.mxu0 0.0
    %2660 = vmatprep.subr.mxu0 0.0
    %2661 = vmatpush2.msra.mxu0 0.0
    %2662 = vmatprep.subr.mxu0 0.0
    %2663 = vmatpush2.msra.mxu0 0.0
    %2664 = vmatprep.subr.mxu0 0.0
    %2665 = vmatpush2.msra.mxu0 0.0
    %2666 = vmatprep.subr.mxu0 0.0
    %2667 = vmatpush2.msra.mxu0 0.0
    %2668 = vmatprep.mubr.f32.mxu0 0.0
    %2669 = vmatmul.mubr.f32.gmra.mxu0 %v2531
    %v2670 = vpop.f32.mrf.mxu0
    %v2671 = vadd.f32 %v2014, %v2670
    %v2672 = vpop.f32.mrf.mxu0
    %2673 = vdwg.mxu0
    %v2676 = vrot.slane %v2600, 2
    %v2677 = vrot.slane %v2602, 2
    %v2680 = vadd.f32 %v1917, %v2676
    %v2681 = vadd.f32 %v1919, %v2677
    %v2682 = vxor.u32 %v2680, 2147483648
    %v2683 = vxor.u32 %v2681, 2147483648
    %v2684 = vmul.f32 %v2682, 1.442695
    %v2685 = vpow.pop %v2684
    %v2686 = vmul.f32 %v2683, 1.442695
    %v2687 = vpow.pop %v2686
    %v2688 = vadd.f32 %v2685, 1.0
    %v2689 = vadd.f32 %v2687, 1.0
    %v2690 = vrcp.pop %v2688
    %v2691 = vmul.f32 1.0, %v2690
    %v2692 = vrcp.pop %v2689
    %v2693 = vmul.f32 1.0, %v2692
    %v2695 = vrot.slane %v2671, 2
    %v2697 = vmul.f32 %v2691, %v2695
    %v2698 = vadd.f32 %v1994, %v2697
    %v2699 = vtanh.pop %v2698
    %v2700 = vsub.f32 1.0, %v2693
    %v2701 = vmul.f32 %v2700, %v2699
    %v2702 = vrot.slane %v2529, 6
    %v2704 = vmul.f32 %v2693, %v2702
    %v2705 = vadd.f32 %v2701, %v2704
    %v2707 = vrot.slane %v2705, 6
    %2709 = vmatprep.subr.mxu0 %v1828
    %2710 = vmatpush1.msra.mxu0 %v1827
    %2711 = vmatprep.subr.mxu0 %v1825
    %2712 = vmatpush1.msra.mxu0 %v1824
    %2713 = vmatprep.subr.mxu0 %v1822
    %2714 = vmatpush1.msra.mxu0 %v1821
    %2715 = vmatprep.subr.mxu0 %v1819
    %2716 = vmatpush1.msra.mxu0 %v1818
    %2717 = vmatprep.subr.mxu0 %v1816
    %2718 = vmatpush1.msra.mxu0 %v1815
    %2719 = vmatprep.subr.mxu0 %v1813
    %2720 = vmatpush1.msra.mxu0 %v1812
    %2721 = vmatprep.subr.mxu0 %v1810
    %2722 = vmatpush1.msra.mxu0 %v1809
    %2723 = vmatprep.subr.mxu0 %v1807
    %2724 = vmatpush1.msra.mxu0 %v1806
    %2725 = vmatprep.subr.mxu0 %v1804
    %2726 = vmatpush1.msra.mxu0 %v1803
    %2727 = vmatprep.subr.mxu0 %v1801
    %2728 = vmatpush1.msra.mxu0 %v1800
    %2729 = vmatprep.subr.mxu0 %v1798
    %2730 = vmatpush1.msra.mxu0 %v1797
    %2731 = vmatprep.subr.mxu0 %v1795
    %2732 = vmatpush1.msra.mxu0 %v1794
    %2733 = vmatprep.subr.mxu0 %v1792
    %2734 = vmatpush1.msra.mxu0 %v1791
    %2735 = vmatprep.subr.mxu0 %v1789
    %2736 = vmatpush1.msra.mxu0 %v1788
    %2737 = vmatprep.subr.mxu0 %v1786
    %2738 = vmatpush1.msra.mxu0 %v1785
    %2739 = vmatprep.subr.mxu0 %v1783
    %2740 = vmatpush1.msra.mxu0 %v1782
    %2741 = vmatprep.subr.mxu0 0.0
    %2742 = vmatpush2.msra.mxu0 0.0
    %2743 = vmatprep.subr.mxu0 0.0
    %2744 = vmatpush2.msra.mxu0 0.0
    %2745 = vmatprep.subr.mxu0 0.0
    %2746 = vmatpush2.msra.mxu0 0.0
    %2747 = vmatprep.subr.mxu0 0.0
    %2748 = vmatpush2.msra.mxu0 0.0
    %2749 = vmatprep.subr.mxu0 0.0
    %2750 = vmatpush2.msra.mxu0 0.0
    %2751 = vmatprep.subr.mxu0 0.0
    %2752 = vmatpush2.msra.mxu0 0.0
    %2753 = vmatprep.subr.mxu0 0.0
    %2754 = vmatpush2.msra.mxu0 0.0
    %2755 = vmatprep.subr.mxu0 0.0
    %2756 = vmatpush2.msra.mxu0 0.0
    %2757 = vmatprep.subr.mxu0 0.0
    %2758 = vmatpush2.msra.mxu0 0.0
    %2759 = vmatprep.subr.mxu0 0.0
    %2760 = vmatpush2.msra.mxu0 0.0
    %2761 = vmatprep.subr.mxu0 0.0
    %2762 = vmatpush2.msra.mxu0 0.0
    %2763 = vmatprep.subr.mxu0 0.0
    %2764 = vmatpush2.msra.mxu0 0.0
    %2765 = vmatprep.subr.mxu0 0.0
    %2766 = vmatpush2.msra.mxu0 0.0
    %2767 = vmatprep.subr.mxu0 0.0
    %2768 = vmatpush2.msra.mxu0 0.0
    %2769 = vmatprep.subr.mxu0 0.0
    %2770 = vmatpush2.msra.mxu0 0.0
    %2771 = vmatprep.subr.mxu0 0.0
    %2772 = vmatpush2.msra.mxu0 0.0
    %2773 = vmatprep.mubr.f32.mxu0 0.0
    %2774 = vmatmul.mubr.f32.gmra.mxu0 %v2707
    %v2775 = vpop.f32.mrf.mxu0
    %v2776 = vadd.f32 %v2006, %v2775
    %v2777 = vpop.f32.mrf.mxu0
    %v2778 = vadd.f32 %v2010, %v2777
    %2779 = vdwg.mxu0
    %2780 = vmatprep.subr.mxu0 0.0
    %2781 = vmatpush1.msra.mxu0 %v1829
    %2782 = vmatprep.subr.mxu0 0.0
    %2783 = vmatpush1.msra.mxu0 %v1826
    %2784 = vmatprep.subr.mxu0 0.0
    %2785 = vmatpush1.msra.mxu0 %v1823
    %2786 = vmatprep.subr.mxu0 0.0
    %2787 = vmatpush1.msra.mxu0 %v1820
    %2788 = vmatprep.subr.mxu0 0.0
    %2789 = vmatpush1.msra.mxu0 %v1817
    %2790 = vmatprep.subr.mxu0 0.0
    %2791 = vmatpush1.msra.mxu0 %v1814
    %2792 = vmatprep.subr.mxu0 0.0
    %2793 = vmatpush1.msra.mxu0 %v1811
    %2794 = vmatprep.subr.mxu0 0.0
    %2795 = vmatpush1.msra.mxu0 %v1808
    %2796 = vmatprep.subr.mxu0 0.0
    %2797 = vmatpush1.msra.mxu0 %v1805
    %2798 = vmatprep.subr.mxu0 0.0
    %2799 = vmatpush1.msra.mxu0 %v1802
    %2800 = vmatprep.subr.mxu0 0.0
    %2801 = vmatpush1.msra.mxu0 %v1799
    %2802 = vmatprep.subr.mxu0 0.0
    %2803 = vmatpush1.msra.mxu0 %v1796
    %2804 = vmatprep.subr.mxu0 0.0
    %2805 = vmatpush1.msra.mxu0 %v1793
    %2806 = vmatprep.subr.mxu0 0.0
    %2807 = vmatpush1.msra.mxu0 %v1790
    %2808 = vmatprep.subr.mxu0 0.0
    %2809 = vmatpush1.msra.mxu0 %v1787
    %2810 = vmatprep.subr.mxu0 0.0
    %2811 = vmatpush1.msra.mxu0 %v1784
    %2812 = vmatprep.subr.mxu0 0.0
    %2813 = vmatpush2.msra.mxu0 0.0
    %2814 = vmatprep.subr.mxu0 0.0
    %2815 = vmatpush2.msra.mxu0 0.0
    %2816 = vmatprep.subr.mxu0 0.0
    %2817 = vmatpush2.msra.mxu0 0.0
    %2818 = vmatprep.subr.mxu0 0.0
    %2819 = vmatpush2.msra.mxu0 0.0
    %2820 = vmatprep.subr.mxu0 0.0
    %2821 = vmatpush2.msra.mxu0 0.0
    %2822 = vmatprep.subr.mxu0 0.0
    %2823 = vmatpush2.msra.mxu0 0.0
    %2824 = vmatprep.subr.mxu0 0.0
    %2825 = vmatpush2.msra.mxu0 0.0
    %2826 = vmatprep.subr.mxu0 0.0
    %2827 = vmatpush2.msra.mxu0 0.0
    %2828 = vmatprep.subr.mxu0 0.0
    %2829 = vmatpush2.msra.mxu0 0.0
    %2830 = vmatprep.subr.mxu0 0.0
    %2831 = vmatpush2.msra.mxu0 0.0
    %2832 = vmatprep.subr.mxu0 0.0
    %2833 = vmatpush2.msra.mxu0 0.0
    %2834 = vmatprep.subr.mxu0 0.0
    %2835 = vmatpush2.msra.mxu0 0.0
    %2836 = vmatprep.subr.mxu0 0.0
    %2837 = vmatpush2.msra.mxu0 0.0
    %2838 = vmatprep.subr.mxu0 0.0
    %2839 = vmatpush2.msra.mxu0 0.0
    %2840 = vmatprep.subr.mxu0 0.0
    %2841 = vmatpush2.msra.mxu0 0.0
    %2842 = vmatprep.subr.mxu0 0.0
    %2843 = vmatpush2.msra.mxu0 0.0
    %2844 = vmatprep.mubr.f32.mxu0 0.0
    %2845 = vmatmul.mubr.f32.gmra.mxu0 %v2707
    %v2846 = vpop.f32.mrf.mxu0
    %v2847 = vadd.f32 %v2014, %v2846
    %v2848 = vpop.f32.mrf.mxu0
    %2849 = vdwg.mxu0
    %v2850 = vadd.f32 %v1923, %v2776
    %v2851 = vadd.f32 %v1925, %v2778
    %v2852 = vxor.u32 %v2850, 2147483648
    %v2853 = vxor.u32 %v2851, 2147483648
    %v2854 = vmul.f32 %v2852, 1.442695
    %v2855 = vpow.pop %v2854
    %v2856 = vmul.f32 %v2853, 1.442695
    %v2857 = vpow.pop %v2856
    %v2858 = vadd.f32 %v2855, 1.0
    %v2859 = vadd.f32 %v2857, 1.0
    %v2860 = vrcp.pop %v2858
    %v2861 = vmul.f32 1.0, %v2860
    %v2862 = vrcp.pop %v2859
    %v2863 = vmul.f32 1.0, %v2862
    %v2864 = vmul.f32 %v2861, %v2847
    %v2865 = vadd.f32 %v1999, %v2864
    %v2866 = vtanh.pop %v2865
    %v2867 = vsub.f32 1.0, %v2863
    %v2868 = vmul.f32 %v2867, %v2866
    %v2869 = vmul.f32 %v2863, %v2707
    %v2870 = vadd.f32 %v2868, %v2869
    %2871 = vmatprep.subr.mxu0 %v1828
    %2872 = vmatpush1.msra.mxu0 %v1827
    %2873 = vmatprep.subr.mxu0 %v1825
    %2874 = vmatpush1.msra.mxu0 %v1824
    %2875 = vmatprep.subr.mxu0 %v1822
    %2876 = vmatpush1.msra.mxu0 %v1821
    %2877 = vmatprep.subr.mxu0 %v1819
    %2878 = vmatpush1.msra.mxu0 %v1818
    %2879 = vmatprep.subr.mxu0 %v1816
    %2880 = vmatpush1.msra.mxu0 %v1815
    %2881 = vmatprep.subr.mxu0 %v1813
    %2882 = vmatpush1.msra.mxu0 %v1812
    %2883 = vmatprep.subr.mxu0 %v1810
    %2884 = vmatpush1.msra.mxu0 %v1809
    %2885 = vmatprep.subr.mxu0 %v1807
    %2886 = vmatpush1.msra.mxu0 %v1806
    %2887 = vmatprep.subr.mxu0 %v1804
    %2888 = vmatpush1.msra.mxu0 %v1803
    %2889 = vmatprep.subr.mxu0 %v1801
    %2890 = vmatpush1.msra.mxu0 %v1800
    %2891 = vmatprep.subr.mxu0 %v1798
    %2892 = vmatpush1.msra.mxu0 %v1797
    %2893 = vmatprep.subr.mxu0 %v1795
    %2894 = vmatpush1.msra.mxu0 %v1794
    %2895 = vmatprep.subr.mxu0 %v1792
    %2896 = vmatpush1.msra.mxu0 %v1791
    %2897 = vmatprep.subr.mxu0 %v1789
    %2898 = vmatpush1.msra.mxu0 %v1788
    %2899 = vmatprep.subr.mxu0 %v1786
    %2900 = vmatpush1.msra.mxu0 %v1785
    %2901 = vmatprep.subr.mxu0 %v1783
    %2902 = vmatpush1.msra.mxu0 %v1782
    %2903 = vmatprep.subr.mxu0 0.0
    %2904 = vmatpush2.msra.mxu0 0.0
    %2905 = vmatprep.subr.mxu0 0.0
    %2906 = vmatpush2.msra.mxu0 0.0
    %2907 = vmatprep.subr.mxu0 0.0
    %2908 = vmatpush2.msra.mxu0 0.0
    %2909 = vmatprep.subr.mxu0 0.0
    %2910 = vmatpush2.msra.mxu0 0.0
    %2911 = vmatprep.subr.mxu0 0.0
    %2912 = vmatpush2.msra.mxu0 0.0
    %2913 = vmatprep.subr.mxu0 0.0
    %2914 = vmatpush2.msra.mxu0 0.0
    %2915 = vmatprep.subr.mxu0 0.0
    %2916 = vmatpush2.msra.mxu0 0.0
    %2917 = vmatprep.subr.mxu0 0.0
    %2918 = vmatpush2.msra.mxu0 0.0
    %2919 = vmatprep.subr.mxu0 0.0
    %2920 = vmatpush2.msra.mxu0 0.0
    %2921 = vmatprep.subr.mxu0 0.0
    %2922 = vmatpush2.msra.mxu0 0.0
    %2923 = vmatprep.subr.mxu0 0.0
    %2924 = vmatpush2.msra.mxu0 0.0
    %2925 = vmatprep.subr.mxu0 0.0
    %2926 = vmatpush2.msra.mxu0 0.0
    %2927 = vmatprep.subr.mxu0 0.0
    %2928 = vmatpush2.msra.mxu0 0.0
    %2929 = vmatprep.subr.mxu0 0.0
    %2930 = vmatpush2.msra.mxu0 0.0
    %2931 = vmatprep.subr.mxu0 0.0
    %2932 = vmatpush2.msra.mxu0 0.0
    %2933 = vmatprep.subr.mxu0 0.0
    %2934 = vmatpush2.msra.mxu0 0.0
    %2935 = vmatprep.mubr.f32.mxu0 0.0
    %2936 = vmatmul.mubr.f32.gmra.mxu0 %v2870
    %v2937 = vpop.f32.mrf.mxu0
    %v2938 = vadd.f32 %v2006, %v2937
    %v2939 = vpop.f32.mrf.mxu0
    %v2940 = vadd.f32 %v2010, %v2939
    %2941 = vdwg.mxu0
    %2942 = vmatprep.subr.mxu0 0.0
    %2943 = vmatpush1.msra.mxu0 %v1829
    %2944 = vmatprep.subr.mxu0 0.0
    %2945 = vmatpush1.msra.mxu0 %v1826
    %2946 = vmatprep.subr.mxu0 0.0
    %2947 = vmatpush1.msra.mxu0 %v1823
    %2948 = vmatprep.subr.mxu0 0.0
    %2949 = vmatpush1.msra.mxu0 %v1820
    %2950 = vmatprep.subr.mxu0 0.0
    %2951 = vmatpush1.msra.mxu0 %v1817
    %2952 = vmatprep.subr.mxu0 0.0
    %2953 = vmatpush1.msra.mxu0 %v1814
    %2954 = vmatprep.subr.mxu0 0.0
    %2955 = vmatpush1.msra.mxu0 %v1811
    %2956 = vmatprep.subr.mxu0 0.0
    %2957 = vmatpush1.msra.mxu0 %v1808
    %2958 = vmatprep.subr.mxu0 0.0
    %2959 = vmatpush1.msra.mxu0 %v1805
    %2960 = vmatprep.subr.mxu0 0.0
    %2961 = vmatpush1.msra.mxu0 %v1802
    %2962 = vmatprep.subr.mxu0 0.0
    %2963 = vmatpush1.msra.mxu0 %v1799
    %2964 = vmatprep.subr.mxu0 0.0
    %2965 = vmatpush1.msra.mxu0 %v1796
    %2966 = vmatprep.subr.mxu0 0.0
    %2967 = vmatpush1.msra.mxu0 %v1793
    %2968 = vmatprep.subr.mxu0 0.0
    %2969 = vmatpush1.msra.mxu0 %v1790
    %2970 = vmatprep.subr.mxu0 0.0
    %2971 = vmatpush1.msra.mxu0 %v1787
    %2972 = vmatprep.subr.mxu0 0.0
    %2973 = vmatpush1.msra.mxu0 %v1784
    %2974 = vmatprep.subr.mxu0 0.0
    %2975 = vmatpush2.msra.mxu0 0.0
    %2976 = vmatprep.subr.mxu0 0.0
    %2977 = vmatpush2.msra.mxu0 0.0
    %2978 = vmatprep.subr.mxu0 0.0
    %2979 = vmatpush2.msra.mxu0 0.0
    %2980 = vmatprep.subr.mxu0 0.0
    %2981 = vmatpush2.msra.mxu0 0.0
    %2982 = vmatprep.subr.mxu0 0.0
    %2983 = vmatpush2.msra.mxu0 0.0
    %2984 = vmatprep.subr.mxu0 0.0
    %2985 = vmatpush2.msra.mxu0 0.0
    %2986 = vmatprep.subr.mxu0 0.0
    %2987 = vmatpush2.msra.mxu0 0.0
    %2988 = vmatprep.subr.mxu0 0.0
    %2989 = vmatpush2.msra.mxu0 0.0
    %2990 = vmatprep.subr.mxu0 0.0
    %2991 = vmatpush2.msra.mxu0 0.0
    %2992 = vmatprep.subr.mxu0 0.0
    %2993 = vmatpush2.msra.mxu0 0.0
    %2994 = vmatprep.subr.mxu0 0.0
    %2995 = vmatpush2.msra.mxu0 0.0
    %2996 = vmatprep.subr.mxu0 0.0
    %2997 = vmatpush2.msra.mxu0 0.0
    %2998 = vmatprep.subr.mxu0 0.0
    %2999 = vmatpush2.msra.mxu0 0.0
    %3000 = vmatprep.subr.mxu0 0.0
    %3001 = vmatpush2.msra.mxu0 0.0
    %3002 = vmatprep.subr.mxu0 0.0
    %3003 = vmatpush2.msra.mxu0 0.0
    %3004 = vmatprep.subr.mxu0 0.0
    %3005 = vmatpush2.msra.mxu0 0.0
    %3006 = vmatprep.mubr.f32.mxu0 0.0
    %3007 = vmatmul.mubr.f32.gmra.mxu0 %v2870
    %v3008 = vpop.f32.mrf.mxu0
    %v3009 = vadd.f32 %v2014, %v3008
    %v3010 = vpop.f32.mrf.mxu0
    %3011 = vdwg.mxu0
    %v3014 = vrot.slane %v2938, 6
    %v3015 = vrot.slane %v2940, 6
    %v3018 = vadd.f32 %v1923, %v3014
    %v3019 = vadd.f32 %v1925, %v3015
    %v3020 = vxor.u32 %v3018, 2147483648
    %v3021 = vxor.u32 %v3019, 2147483648
    %v3022 = vmul.f32 %v3020, 1.442695
    %v3023 = vpow.pop %v3022
    %v3024 = vmul.f32 %v3021, 1.442695
    %v3025 = vpow.pop %v3024
    %v3026 = vadd.f32 %v3023, 1.0
    %v3027 = vadd.f32 %v3025, 1.0
    %v3028 = vrcp.pop %v3026
    %v3029 = vmul.f32 1.0, %v3028
    %v3030 = vrcp.pop %v3027
    %v3031 = vmul.f32 1.0, %v3030
    %v3033 = vrot.slane %v3009, 6
    %v3035 = vmul.f32 %v3029, %v3033
    %v3036 = vadd.f32 %v1999, %v3035
    %v3037 = vtanh.pop %v3036
    %v3038 = vsub.f32 1.0, %v3031
    %v3039 = vmul.f32 %v3038, %v3037
    %v3041 = vrot.slane %v2870, 6
    %v3043 = vmul.f32 %v3031, %v3041
    %v3044 = vadd.f32 %v3039, %v3043
    %v3046 = vrot.slane %v3044, 2
    %3048 = vmatprep.subr.mxu0 %v1828
    %3049 = vmatpush1.msra.mxu0 %v1827
    %3050 = vmatprep.subr.mxu0 %v1825
    %3051 = vmatpush1.msra.mxu0 %v1824
    %3052 = vmatprep.subr.mxu0 %v1822
    %3053 = vmatpush1.msra.mxu0 %v1821
    %3054 = vmatprep.subr.mxu0 %v1819
    %3055 = vmatpush1.msra.mxu0 %v1818
    %3056 = vmatprep.subr.mxu0 %v1816
    %3057 = vmatpush1.msra.mxu0 %v1815
    %3058 = vmatprep.subr.mxu0 %v1813
    %3059 = vmatpush1.msra.mxu0 %v1812
    %3060 = vmatprep.subr.mxu0 %v1810
    %3061 = vmatpush1.msra.mxu0 %v1809
    %3062 = vmatprep.subr.mxu0 %v1807
    %3063 = vmatpush1.msra.mxu0 %v1806
    %3064 = vmatprep.subr.mxu0 %v1804
    %3065 = vmatpush1.msra.mxu0 %v1803
    %3066 = vmatprep.subr.mxu0 %v1801
    %3067 = vmatpush1.msra.mxu0 %v1800
    %3068 = vmatprep.subr.mxu0 %v1798
    %3069 = vmatpush1.msra.mxu0 %v1797
    %3070 = vmatprep.subr.mxu0 %v1795
    %3071 = vmatpush1.msra.mxu0 %v1794
    %3072 = vmatprep.subr.mxu0 %v1792
    %3073 = vmatpush1.msra.mxu0 %v1791
    %3074 = vmatprep.subr.mxu0 %v1789
    %3075 = vmatpush1.msra.mxu0 %v1788
    %3076 = vmatprep.subr.mxu0 %v1786
    %3077 = vmatpush1.msra.mxu0 %v1785
    %3078 = vmatprep.subr.mxu0 %v1783
    %3079 = vmatpush1.msra.mxu0 %v1782
    %3080 = vmatprep.subr.mxu0 0.0
    %3081 = vmatpush2.msra.mxu0 0.0
    %3082 = vmatprep.subr.mxu0 0.0
    %3083 = vmatpush2.msra.mxu0 0.0
    %3084 = vmatprep.subr.mxu0 0.0
    %3085 = vmatpush2.msra.mxu0 0.0
    %3086 = vmatprep.subr.mxu0 0.0
    %3087 = vmatpush2.msra.mxu0 0.0
    %3088 = vmatprep.subr.mxu0 0.0
    %3089 = vmatpush2.msra.mxu0 0.0
    %3090 = vmatprep.subr.mxu0 0.0
    %3091 = vmatpush2.msra.mxu0 0.0
    %3092 = vmatprep.subr.mxu0 0.0
    %3093 = vmatpush2.msra.mxu0 0.0
    %3094 = vmatprep.subr.mxu0 0.0
    %3095 = vmatpush2.msra.mxu0 0.0
    %3096 = vmatprep.subr.mxu0 0.0
    %3097 = vmatpush2.msra.mxu0 0.0
    %3098 = vmatprep.subr.mxu0 0.0
    %3099 = vmatpush2.msra.mxu0 0.0
    %3100 = vmatprep.subr.mxu0 0.0
    %3101 = vmatpush2.msra.mxu0 0.0
    %3102 = vmatprep.subr.mxu0 0.0
    %3103 = vmatpush2.msra.mxu0 0.0
    %3104 = vmatprep.subr.mxu0 0.0
    %3105 = vmatpush2.msra.mxu0 0.0
    %3106 = vmatprep.subr.mxu0 0.0
    %3107 = vmatpush2.msra.mxu0 0.0
    %3108 = vmatprep.subr.mxu0 0.0
    %3109 = vmatpush2.msra.mxu0 0.0
    %3110 = vmatprep.subr.mxu0 0.0
    %3111 = vmatpush2.msra.mxu0 0.0
    %3112 = vmatprep.mubr.f32.mxu0 0.0
    %3113 = vmatmul.mubr.f32.gmra.mxu0 %v3046
    %v3114 = vpop.f32.mrf.mxu0
    %v3115 = vadd.f32 %v2006, %v3114
    %v3116 = vpop.f32.mrf.mxu0
    %v3117 = vadd.f32 %v2010, %v3116
    %3118 = vdwg.mxu0
    %3119 = vmatprep.subr.mxu0 0.0
    %3120 = vmatpush1.msra.mxu0 %v1829
    %3121 = vmatprep.subr.mxu0 0.0
    %3122 = vmatpush1.msra.mxu0 %v1826
    %3123 = vmatprep.subr.mxu0 0.0
    %3124 = vmatpush1.msra.mxu0 %v1823
    %3125 = vmatprep.subr.mxu0 0.0
    %3126 = vmatpush1.msra.mxu0 %v1820
    %3127 = vmatprep.subr.mxu0 0.0
    %3128 = vmatpush1.msra.mxu0 %v1817
    %3129 = vmatprep.subr.mxu0 0.0
    %3130 = vmatpush1.msra.mxu0 %v1814
    %3131 = vmatprep.subr.mxu0 0.0
    %3132 = vmatpush1.msra.mxu0 %v1811
    %3133 = vmatprep.subr.mxu0 0.0
    %3134 = vmatpush1.msra.mxu0 %v1808
    %3135 = vmatprep.subr.mxu0 0.0
    %3136 = vmatpush1.msra.mxu0 %v1805
    %3137 = vmatprep.subr.mxu0 0.0
    %3138 = vmatpush1.msra.mxu0 %v1802
    %3139 = vmatprep.subr.mxu0 0.0
    %3140 = vmatpush1.msra.mxu0 %v1799
    %3141 = vmatprep.subr.mxu0 0.0
    %3142 = vmatpush1.msra.mxu0 %v1796
    %3143 = vmatprep.subr.mxu0 0.0
    %3144 = vmatpush1.msra.mxu0 %v1793
    %3145 = vmatprep.subr.mxu0 0.0
    %3146 = vmatpush1.msra.mxu0 %v1790
    %3147 = vmatprep.subr.mxu0 0.0
    %3148 = vmatpush1.msra.mxu0 %v1787
    %3149 = vmatprep.subr.mxu0 0.0
    %3150 = vmatpush1.msra.mxu0 %v1784
    %3151 = vmatprep.subr.mxu0 0.0
    %3152 = vmatpush2.msra.mxu0 0.0
    %3153 = vmatprep.subr.mxu0 0.0
    %3154 = vmatpush2.msra.mxu0 0.0
    %3155 = vmatprep.subr.mxu0 0.0
    %3156 = vmatpush2.msra.mxu0 0.0
    %3157 = vmatprep.subr.mxu0 0.0
    %3158 = vmatpush2.msra.mxu0 0.0
    %3159 = vmatprep.subr.mxu0 0.0
    %3160 = vmatpush2.msra.mxu0 0.0
    %3161 = vmatprep.subr.mxu0 0.0
    %3162 = vmatpush2.msra.mxu0 0.0
    %3163 = vmatprep.subr.mxu0 0.0
    %3164 = vmatpush2.msra.mxu0 0.0
    %3165 = vmatprep.subr.mxu0 0.0
    %3166 = vmatpush2.msra.mxu0 0.0
    %3167 = vmatprep.subr.mxu0 0.0
    %3168 = vmatpush2.msra.mxu0 0.0
    %3169 = vmatprep.subr.mxu0 0.0
    %3170 = vmatpush2.msra.mxu0 0.0
    %3171 = vmatprep.subr.mxu0 0.0
    %3172 = vmatpush2.msra.mxu0 0.0
    %3173 = vmatprep.subr.mxu0 0.0
    %3174 = vmatpush2.msra.mxu0 0.0
    %3175 = vmatprep.subr.mxu0 0.0
    %3176 = vmatpush2.msra.mxu0 0.0
    %3177 = vmatprep.subr.mxu0 0.0
    %3178 = vmatpush2.msra.mxu0 0.0
    %3179 = vmatprep.subr.mxu0 0.0
    %3180 = vmatpush2.msra.mxu0 0.0
    %3181 = vmatprep.subr.mxu0 0.0
    %3182 = vmatpush2.msra.mxu0 0.0
    %3183 = vmatprep.mubr.f32.mxu0 0.0
    %3184 = vmatmul.mubr.f32.gmra.mxu0 %v3046
    %v3185 = vpop.f32.mrf.mxu0
    %v3186 = vadd.f32 %v2014, %v3185
    %v3187 = vpop.f32.mrf.mxu0
    %3188 = vdwg.mxu0
    %v3191 = vrot.slane %v3115, 4
    %v3192 = vrot.slane %v3117, 4
    %v3195 = vadd.f32 %v1923, %v3191
    %v3196 = vadd.f32 %v1925, %v3192
    %v3197 = vxor.u32 %v3195, 2147483648
    %v3198 = vxor.u32 %v3196, 2147483648
    %v3199 = vmul.f32 %v3197, 1.442695
    %v3200 = vpow.pop %v3199
    %v3201 = vmul.f32 %v3198, 1.442695
    %v3202 = vpow.pop %v3201
    %v3203 = vadd.f32 %v3200, 1.0
    %v3204 = vadd.f32 %v3202, 1.0
    %v3205 = vrcp.pop %v3203
    %v3206 = vmul.f32 1.0, %v3205
    %v3207 = vrcp.pop %v3204
    %v3208 = vmul.f32 1.0, %v3207
    %v3210 = vrot.slane %v3186, 4
    %v3212 = vmul.f32 %v3206, %v3210
    %v3213 = vadd.f32 %v1999, %v3212
    %v3214 = vtanh.pop %v3213
    %v3215 = vsub.f32 1.0, %v3208
    %v3216 = vmul.f32 %v3215, %v3214
    %v3217 = vrot.slane %v3044, 6
    %v3219 = vmul.f32 %v3208, %v3217
    %v3220 = vadd.f32 %v3216, %v3219
    %v3222 = vrot.slane %v3220, 4
    %3224 = vmatprep.subr.mxu0 %v1828
    %3225 = vmatpush1.msra.mxu0 %v1827
    %3226 = vmatprep.subr.mxu0 %v1825
    %3227 = vmatpush1.msra.mxu0 %v1824
    %3228 = vmatprep.subr.mxu0 %v1822
    %3229 = vmatpush1.msra.mxu0 %v1821
    %3230 = vmatprep.subr.mxu0 %v1819
    %3231 = vmatpush1.msra.mxu0 %v1818
    %3232 = vmatprep.subr.mxu0 %v1816
    %3233 = vmatpush1.msra.mxu0 %v1815
    %3234 = vmatprep.subr.mxu0 %v1813
    %3235 = vmatpush1.msra.mxu0 %v1812
    %3236 = vmatprep.subr.mxu0 %v1810
    %3237 = vmatpush1.msra.mxu0 %v1809
    %3238 = vmatprep.subr.mxu0 %v1807
    %3239 = vmatpush1.msra.mxu0 %v1806
    %3240 = vmatprep.subr.mxu0 %v1804
    %3241 = vmatpush1.msra.mxu0 %v1803
    %3242 = vmatprep.subr.mxu0 %v1801
    %3243 = vmatpush1.msra.mxu0 %v1800
    %3244 = vmatprep.subr.mxu0 %v1798
    %3245 = vmatpush1.msra.mxu0 %v1797
    %3246 = vmatprep.subr.mxu0 %v1795
    %3247 = vmatpush1.msra.mxu0 %v1794
    %3248 = vmatprep.subr.mxu0 %v1792
    %3249 = vmatpush1.msra.mxu0 %v1791
    %3250 = vmatprep.subr.mxu0 %v1789
    %3251 = vmatpush1.msra.mxu0 %v1788
    %3252 = vmatprep.subr.mxu0 %v1786
    %3253 = vmatpush1.msra.mxu0 %v1785
    %3254 = vmatprep.subr.mxu0 %v1783
    %3255 = vmatpush1.msra.mxu0 %v1782
    %3256 = vmatprep.subr.mxu0 0.0
    %3257 = vmatpush2.msra.mxu0 0.0
    %3258 = vmatprep.subr.mxu0 0.0
    %3259 = vmatpush2.msra.mxu0 0.0
    %3260 = vmatprep.subr.mxu0 0.0
    %3261 = vmatpush2.msra.mxu0 0.0
    %3262 = vmatprep.subr.mxu0 0.0
    %3263 = vmatpush2.msra.mxu0 0.0
    %3264 = vmatprep.subr.mxu0 0.0
    %3265 = vmatpush2.msra.mxu0 0.0
    %3266 = vmatprep.subr.mxu0 0.0
    %3267 = vmatpush2.msra.mxu0 0.0
    %3268 = vmatprep.subr.mxu0 0.0
    %3269 = vmatpush2.msra.mxu0 0.0
    %3270 = vmatprep.subr.mxu0 0.0
    %3271 = vmatpush2.msra.mxu0 0.0
    %3272 = vmatprep.subr.mxu0 0.0
    %3273 = vmatpush2.msra.mxu0 0.0
    %3274 = vmatprep.subr.mxu0 0.0
    %3275 = vmatpush2.msra.mxu0 0.0
    %3276 = vmatprep.subr.mxu0 0.0
    %3277 = vmatpush2.msra.mxu0 0.0
    %3278 = vmatprep.subr.mxu0 0.0
    %3279 = vmatpush2.msra.mxu0 0.0
    %3280 = vmatprep.subr.mxu0 0.0
    %3281 = vmatpush2.msra.mxu0 0.0
    %3282 = vmatprep.subr.mxu0 0.0
    %3283 = vmatpush2.msra.mxu0 0.0
    %3284 = vmatprep.subr.mxu0 0.0
    %3285 = vmatpush2.msra.mxu0 0.0
    %3286 = vmatprep.subr.mxu0 0.0
    %3287 = vmatpush2.msra.mxu0 0.0
    %3288 = vmatprep.mubr.f32.mxu0 0.0
    %3289 = vmatmul.mubr.f32.gmra.mxu0 %v3222
    %v3290 = vpop.f32.mrf.mxu0
    %v3291 = vadd.f32 %v2006, %v3290
    %v3292 = vpop.f32.mrf.mxu0
    %v3293 = vadd.f32 %v2010, %v3292
    %3294 = vdwg.mxu0
    %3295 = vmatprep.subr.mxu0 0.0
    %3296 = vmatpush1.msra.mxu0 %v1829
    %3297 = vmatprep.subr.mxu0 0.0
    %3298 = vmatpush1.msra.mxu0 %v1826
    %3299 = vmatprep.subr.mxu0 0.0
    %3300 = vmatpush1.msra.mxu0 %v1823
    %3301 = vmatprep.subr.mxu0 0.0
    %3302 = vmatpush1.msra.mxu0 %v1820
    %3303 = vmatprep.subr.mxu0 0.0
    %3304 = vmatpush1.msra.mxu0 %v1817
    %3305 = vmatprep.subr.mxu0 0.0
    %3306 = vmatpush1.msra.mxu0 %v1814
    %3307 = vmatprep.subr.mxu0 0.0
    %3308 = vmatpush1.msra.mxu0 %v1811
    %3309 = vmatprep.subr.mxu0 0.0
    %3310 = vmatpush1.msra.mxu0 %v1808
    %3311 = vmatprep.subr.mxu0 0.0
    %3312 = vmatpush1.msra.mxu0 %v1805
    %3313 = vmatprep.subr.mxu0 0.0
    %3314 = vmatpush1.msra.mxu0 %v1802
    %3315 = vmatprep.subr.mxu0 0.0
    %3316 = vmatpush1.msra.mxu0 %v1799
    %3317 = vmatprep.subr.mxu0 0.0
    %3318 = vmatpush1.msra.mxu0 %v1796
    %3319 = vmatprep.subr.mxu0 0.0
    %3320 = vmatpush1.msra.mxu0 %v1793
    %3321 = vmatprep.subr.mxu0 0.0
    %3322 = vmatpush1.msra.mxu0 %v1790
    %3323 = vmatprep.subr.mxu0 0.0
    %3324 = vmatpush1.msra.mxu0 %v1787
    %3325 = vmatprep.subr.mxu0 0.0
    %3326 = vmatpush1.msra.mxu0 %v1784
    %3327 = vmatprep.subr.mxu0 0.0
    %3328 = vmatpush2.msra.mxu0 0.0
    %3329 = vmatprep.subr.mxu0 0.0
    %3330 = vmatpush2.msra.mxu0 0.0
    %3331 = vmatprep.subr.mxu0 0.0
    %3332 = vmatpush2.msra.mxu0 0.0
    %3333 = vmatprep.subr.mxu0 0.0
    %3334 = vmatpush2.msra.mxu0 0.0
    %3335 = vmatprep.subr.mxu0 0.0
    %3336 = vmatpush2.msra.mxu0 0.0
    %3337 = vmatprep.subr.mxu0 0.0
    %3338 = vmatpush2.msra.mxu0 0.0
    %3339 = vmatprep.subr.mxu0 0.0
    %3340 = vmatpush2.msra.mxu0 0.0
    %3341 = vmatprep.subr.mxu0 0.0
    %3342 = vmatpush2.msra.mxu0 0.0
    %3343 = vmatprep.subr.mxu0 0.0
    %3344 = vmatpush2.msra.mxu0 0.0
    %3345 = vmatprep.subr.mxu0 0.0
    %3346 = vmatpush2.msra.mxu0 0.0
    %3347 = vmatprep.subr.mxu0 0.0
    %3348 = vmatpush2.msra.mxu0 0.0
    %3349 = vmatprep.subr.mxu0 0.0
    %3350 = vmatpush2.msra.mxu0 0.0
    %3351 = vmatprep.subr.mxu0 0.0
    %3352 = vmatpush2.msra.mxu0 0.0
    %3353 = vmatprep.subr.mxu0 0.0
    %3354 = vmatpush2.msra.mxu0 0.0
    %3355 = vmatprep.subr.mxu0 0.0
    %3356 = vmatpush2.msra.mxu0 0.0
    %3357 = vmatprep.subr.mxu0 0.0
    %3358 = vmatpush2.msra.mxu0 0.0
    %3359 = vmatprep.mubr.f32.mxu0 0.0
    %3360 = vmatmul.mubr.f32.gmra.mxu0 %v3222
    %v3361 = vpop.f32.mrf.mxu0
    %v3362 = vadd.f32 %v2014, %v3361
    %v3363 = vpop.f32.mrf.mxu0
    %3364 = vdwg.mxu0
    %v3367 = vrot.slane %v3291, 2
    %v3368 = vrot.slane %v3293, 2
    %v3371 = vadd.f32 %v1923, %v3367
    %v3372 = vadd.f32 %v1925, %v3368
    %v3373 = vxor.u32 %v3371, 2147483648
    %v3374 = vxor.u32 %v3372, 2147483648
    %v3375 = vmul.f32 %v3373, 1.442695
    %v3376 = vpow.pop %v3375
    %v3377 = vmul.f32 %v3374, 1.442695
    %v3378 = vpow.pop %v3377
    %v3379 = vadd.f32 %v3376, 1.0
    %v3380 = vadd.f32 %v3378, 1.0
    %v3381 = vrcp.pop %v3379
    %v3382 = vmul.f32 1.0, %v3381
    %v3383 = vrcp.pop %v3380
    %v3384 = vmul.f32 1.0, %v3383
    %v3386 = vrot.slane %v3362, 2
    %v3388 = vmul.f32 %v3382, %v3386
    %v3389 = vadd.f32 %v1999, %v3388
    %v3390 = vtanh.pop %v3389
    %v3391 = vsub.f32 1.0, %v3384
    %v3392 = vmul.f32 %v3391, %v3390
    %v3393 = vrot.slane %v3220, 6
    %v3395 = vmul.f32 %v3384, %v3393
    %v3396 = vadd.f32 %v3392, %v3395
    %v3397 = vsel %vm1723, %v2179, %v2353
    %v3398 = vsel %vm1725, %v3397, %v2529
    %v3399 = vsel %vm1727, %v3398, %v2705
    %v3400 = vsel %vm1723, %v2870, %v3044
    %v3401 = vsel %vm1725, %v3400, %v3220
    %v3402 = vsel %vm1727, %v3401, %v3396
    %s3403 = scalar_lea.vmem [#allocation2], 1536
    %v3404 = vld [vmem:[%s3403] sm:$0xff]
    %v3405 = vld [vmem:[%s3403 + $0x8] sm:$0xff]
    %v3406 = vld [vmem:[%s3403 + $0x10] sm:$0xff]
    %v3407 = vld [vmem:[%s3403 + $0x18] sm:$0xff]
    %v3408 = vld [vmem:[%s3403 + $0x20] sm:$0xff]
    %v3409 = vld [vmem:[%s3403 + $0x28] sm:$0xff]
    %v3410 = vld [vmem:[%s3403 + $0x30] sm:$0xff]
    %v3411 = vld [vmem:[%s3403 + $0x38] sm:$0xff]
    %v3412 = vld [vmem:[%s3403 + $0x40] sm:$0xff]
    %v3413 = vld [vmem:[%s3403 + $0x48] sm:$0xff]
    %v3414 = vld [vmem:[%s3403 + $0x50] sm:$0xff]
    %v3415 = vld [vmem:[%s3403 + $0x58] sm:$0xff]
    %v3416 = vld [vmem:[%s3403 + $0x60] sm:$0xff]
    %v3417 = vld [vmem:[%s3403 + $0x68] sm:$0xff]
    %v3418 = vld [vmem:[%s3403 + $0x70] sm:$0xff]
    %v3419 = vld [vmem:[%s3403 + $0x78] sm:$0xff]
    %v3420 = vld [vmem:[%s3403 + $0x80] sm:$0xff]
    %v3421 = vld [vmem:[%s3403 + $0x88] sm:$0xff]
    %v3422 = vld [vmem:[%s3403 + $0x90] sm:$0xff]
    %v3423 = vld [vmem:[%s3403 + $0x98] sm:$0xff]
    %v3424 = vld [vmem:[%s3403 + $0xa0] sm:$0xff]
    %v3425 = vld [vmem:[%s3403 + $0xa8] sm:$0xff]
    %v3426 = vld [vmem:[%s3403 + $0xb0] sm:$0xff]
    %v3427 = vld [vmem:[%s3403 + $0xb8] sm:$0xff]
    %v3428 = vld [vmem:[%s3403 + $0xc0] sm:$0xff]
    %v3429 = vld [vmem:[%s3403 + $0xc8] sm:$0xff]
    %v3430 = vld [vmem:[%s3403 + $0xd0] sm:$0xff]
    %v3431 = vld [vmem:[%s3403 + $0xd8] sm:$0xff]
    %v3432 = vld [vmem:[%s3403 + $0xe0] sm:$0xff]
    %v3433 = vld [vmem:[%s3403 + $0xe8] sm:$0xff]
    %v3434 = vld [vmem:[%s3403 + $0xf0] sm:$0xff]
    %v3435 = vld [vmem:[%s3403 + $0xf8] sm:$0xff]
    %v3436 = vld [vmem:[%s3403 + $0x100] sm:$0xff]
    %v3437 = vld [vmem:[%s3403 + $0x108] sm:$0xff]
    %v3438 = vld [vmem:[%s3403 + $0x110] sm:$0xff]
    %v3439 = vld [vmem:[%s3403 + $0x118] sm:$0xff]
    %v3440 = vld [vmem:[%s3403 + $0x120] sm:$0xff]
    %v3441 = vld [vmem:[%s3403 + $0x128] sm:$0xff]
    %v3442 = vld [vmem:[%s3403 + $0x130] sm:$0xff]
    %v3443 = vld [vmem:[%s3403 + $0x138] sm:$0xff]
    %v3444 = vld [vmem:[%s3403 + $0x140] sm:$0xff]
    %v3445 = vld [vmem:[%s3403 + $0x148] sm:$0xff]
    %v3446 = vld [vmem:[%s3403 + $0x150] sm:$0xff]
    %v3447 = vld [vmem:[%s3403 + $0x158] sm:$0xff]
    %v3448 = vld [vmem:[%s3403 + $0x160] sm:$0xff]
    %v3449 = vld [vmem:[%s3403 + $0x168] sm:$0xff]
    %v3450 = vld [vmem:[%s3403 + $0x170] sm:$0xff]
    %v3451 = vld [vmem:[%s3403 + $0x178] sm:$0xff]
    %s3452 = scalar_lea.vmem [#allocation2], 1920
    %v3453 = vld [vmem:[%s3452] sm:$0xff]
    %v3454 = vld [vmem:[%s3452 + $0x8] sm:$0xff]
    %v3455 = vld [vmem:[%s3452 + $0x10] sm:$0xff]
    %v3456 = vld [vmem:[%s3452 + $0x18] sm:$0xff]
    %v3457 = vld [vmem:[%s3452 + $0x20] sm:$0xff]
    %v3458 = vld [vmem:[%s3452 + $0x28] sm:$0xff]
    %v3459 = vld [vmem:[%s3452 + $0x30] sm:$0xff]
    %v3460 = vld [vmem:[%s3452 + $0x38] sm:$0xff]
    %v3461 = vld [vmem:[%s3452 + $0x40] sm:$0xff]
    %v3462 = vld [vmem:[%s3452 + $0x48] sm:$0xff]
    %v3463 = vld [vmem:[%s3452 + $0x50] sm:$0xff]
    %v3464 = vld [vmem:[%s3452 + $0x58] sm:$0xff]
    %v3465 = vld [vmem:[%s3452 + $0x60] sm:$0xff]
    %v3466 = vld [vmem:[%s3452 + $0x68] sm:$0xff]
    %v3467 = vld [vmem:[%s3452 + $0x70] sm:$0xff]
    %v3468 = vld [vmem:[%s3452 + $0x78] sm:$0xff]
    %v3469 = vld [vmem:[%s3452 + $0x80] sm:$0xff]
    %v3470 = vld [vmem:[%s3452 + $0x88] sm:$0xff]
    %v3471 = vld [vmem:[%s3452 + $0x90] sm:$0xff]
    %v3472 = vld [vmem:[%s3452 + $0x98] sm:$0xff]
    %v3473 = vld [vmem:[%s3452 + $0xa0] sm:$0xff]
    %v3474 = vld [vmem:[%s3452 + $0xa8] sm:$0xff]
    %v3475 = vld [vmem:[%s3452 + $0xb0] sm:$0xff]
    %v3476 = vld [vmem:[%s3452 + $0xb8] sm:$0xff]
    %v3477 = vld [vmem:[%s3452 + $0xc0] sm:$0xff]
    %v3478 = vld [vmem:[%s3452 + $0xc8] sm:$0xff]
    %v3479 = vld [vmem:[%s3452 + $0xd0] sm:$0xff]
    %v3480 = vld [vmem:[%s3452 + $0xd8] sm:$0xff]
    %v3481 = vld [vmem:[%s3452 + $0xe0] sm:$0xff]
    %v3482 = vld [vmem:[%s3452 + $0xe8] sm:$0xff]
    %v3483 = vld [vmem:[%s3452 + $0xf0] sm:$0xff]
    %v3484 = vld [vmem:[%s3452 + $0xf8] sm:$0xff]
    %v3485 = vld [vmem:[%s3452 + $0x100] sm:$0xff]
    %v3486 = vld [vmem:[%s3452 + $0x108] sm:$0xff]
    %v3487 = vld [vmem:[%s3452 + $0x110] sm:$0xff]
    %v3488 = vld [vmem:[%s3452 + $0x118] sm:$0xff]
    %v3489 = vld [vmem:[%s3452 + $0x120] sm:$0xff]
    %v3490 = vld [vmem:[%s3452 + $0x128] sm:$0xff]
    %v3491 = vld [vmem:[%s3452 + $0x130] sm:$0xff]
    %v3492 = vld [vmem:[%s3452 + $0x138] sm:$0xff]
    %v3493 = vld [vmem:[%s3452 + $0x140] sm:$0xff]
    %v3494 = vld [vmem:[%s3452 + $0x148] sm:$0xff]
    %v3495 = vld [vmem:[%s3452 + $0x150] sm:$0xff]
    %v3496 = vld [vmem:[%s3452 + $0x158] sm:$0xff]
    %v3497 = vld [vmem:[%s3452 + $0x160] sm:$0xff]
    %v3498 = vld [vmem:[%s3452 + $0x168] sm:$0xff]
    %v3499 = vld [vmem:[%s3452 + $0x170] sm:$0xff]
    %v3500 = vld [vmem:[%s3452 + $0x178] sm:$0xff]
    %s3501 = scalar_lea.vmem [#allocation4], 12
    %v3502 = vld [vmem:[%s3501] sm:$0x7]
    %s3503 = scalar_lea.vmem [#allocation4], 15
    %v3504 = vld [vmem:[%s3503] sm:$0x7]
    %v3506 = vlaneseq
    %v3507 = vshrl.u32 %v3506, 7
    %v3508 = vsub.s32 0, %v3507
    %v3509 = vrot.slane %v3502, %v3508
    %v3510 = vlaneseq
    %v3511 = vshrl.u32 %v3510, 7
    %v3512 = vsub.s32 1, %v3511
    %v3513 = vrot.slane %v3502, %v3512
    %v3514 = vlaneseq
    %v3515 = vshrl.u32 %v3514, 7
    %v3516 = vsub.s32 2, %v3515
    %v3517 = vrot.slane %v3502, %v3516
    %3521 = vmatprep.subr.mxu0 %v3450
    %3522 = vmatpush1.msra.mxu0 %v3449
    %3523 = vmatprep.subr.mxu0 %v3447
    %3524 = vmatpush1.msra.mxu0 %v3446
    %3525 = vmatprep.subr.mxu0 %v3444
    %3526 = vmatpush1.msra.mxu0 %v3443
    %3527 = vmatprep.subr.mxu0 %v3441
    %3528 = vmatpush1.msra.mxu0 %v3440
    %3529 = vmatprep.subr.mxu0 %v3438
    %3530 = vmatpush1.msra.mxu0 %v3437
    %3531 = vmatprep.subr.mxu0 %v3435
    %3532 = vmatpush1.msra.mxu0 %v3434
    %3533 = vmatprep.subr.mxu0 %v3432
    %3534 = vmatpush1.msra.mxu0 %v3431
    %3535 = vmatprep.subr.mxu0 %v3429
    %3536 = vmatpush1.msra.mxu0 %v3428
    %3537 = vmatprep.subr.mxu0 %v3426
    %3538 = vmatpush1.msra.mxu0 %v3425
    %3539 = vmatprep.subr.mxu0 %v3423
    %3540 = vmatpush1.msra.mxu0 %v3422
    %3541 = vmatprep.subr.mxu0 %v3420
    %3542 = vmatpush1.msra.mxu0 %v3419
    %3543 = vmatprep.subr.mxu0 %v3417
    %3544 = vmatpush1.msra.mxu0 %v3416
    %3545 = vmatprep.subr.mxu0 %v3414
    %3546 = vmatpush1.msra.mxu0 %v3413
    %3547 = vmatprep.subr.mxu0 %v3411
    %3548 = vmatpush1.msra.mxu0 %v3410
    %3549 = vmatprep.subr.mxu0 %v3408
    %3550 = vmatpush1.msra.mxu0 %v3407
    %3551 = vmatprep.subr.mxu0 %v3405
    %3552 = vmatpush1.msra.mxu0 %v3404
    %3553 = vmatprep.subr.mxu0 0.0
    %3554 = vmatpush2.msra.mxu0 0.0
    %3555 = vmatprep.subr.mxu0 0.0
    %3556 = vmatpush2.msra.mxu0 0.0
    %3557 = vmatprep.subr.mxu0 0.0
    %3558 = vmatpush2.msra.mxu0 0.0
    %3559 = vmatprep.subr.mxu0 0.0
    %3560 = vmatpush2.msra.mxu0 0.0
    %3561 = vmatprep.subr.mxu0 0.0
    %3562 = vmatpush2.msra.mxu0 0.0
    %3563 = vmatprep.subr.mxu0 0.0
    %3564 = vmatpush2.msra.mxu0 0.0
    %3565 = vmatprep.subr.mxu0 0.0
    %3566 = vmatpush2.msra.mxu0 0.0
    %3567 = vmatprep.subr.mxu0 0.0
    %3568 = vmatpush2.msra.mxu0 0.0
    %3569 = vmatprep.subr.mxu0 0.0
    %3570 = vmatpush2.msra.mxu0 0.0
    %3571 = vmatprep.subr.mxu0 0.0
    %3572 = vmatpush2.msra.mxu0 0.0
    %3573 = vmatprep.subr.mxu0 0.0
    %3574 = vmatpush2.msra.mxu0 0.0
    %3575 = vmatprep.subr.mxu0 0.0
    %3576 = vmatpush2.msra.mxu0 0.0
    %3577 = vmatprep.subr.mxu0 0.0
    %3578 = vmatpush2.msra.mxu0 0.0
    %3579 = vmatprep.subr.mxu0 0.0
    %3580 = vmatpush2.msra.mxu0 0.0
    %3581 = vmatprep.subr.mxu0 0.0
    %3582 = vmatpush2.msra.mxu0 0.0
    %3583 = vmatprep.subr.mxu0 0.0
    %3584 = vmatpush2.msra.mxu0 0.0
    %3585 = vmatprep.mubr.f32.mxu0 0.0
    %3586 = vmatmul.mubr.f32.gmra.mxu0 %v3399
    %v3587 = vpop.f32.mrf.mxu0
    %v3588 = vadd.f32 %v3509, %v3587
    %v3589 = vpop.f32.mrf.mxu0
    %v3590 = vadd.f32 %v3513, %v3589
    %3591 = vmatprep.mubr.f32.mxu0 0.0
    %3592 = vmatmul.mubr.f32.gmra.mxu0 %v3402
    %v3593 = vpop.f32.mrf.mxu0
    %v3594 = vadd.f32 %v3509, %v3593
    %v3595 = vpop.f32.mrf.mxu0
    %v3596 = vadd.f32 %v3513, %v3595
    %3597 = vdwg.mxu0
    %3598 = vmatprep.subr.mxu0 0.0
    %3599 = vmatpush1.msra.mxu0 %v3451
    %3600 = vmatprep.subr.mxu0 0.0
    %3601 = vmatpush1.msra.mxu0 %v3448
    %3602 = vmatprep.subr.mxu0 0.0
    %3603 = vmatpush1.msra.mxu0 %v3445
    %3604 = vmatprep.subr.mxu0 0.0
    %3605 = vmatpush1.msra.mxu0 %v3442
    %3606 = vmatprep.subr.mxu0 0.0
    %3607 = vmatpush1.msra.mxu0 %v3439
    %3608 = vmatprep.subr.mxu0 0.0
    %3609 = vmatpush1.msra.mxu0 %v3436
    %3610 = vmatprep.subr.mxu0 0.0
    %3611 = vmatpush1.msra.mxu0 %v3433
    %3612 = vmatprep.subr.mxu0 0.0
    %3613 = vmatpush1.msra.mxu0 %v3430
    %3614 = vmatprep.subr.mxu0 0.0
    %3615 = vmatpush1.msra.mxu0 %v3427
    %3616 = vmatprep.subr.mxu0 0.0
    %3617 = vmatpush1.msra.mxu0 %v3424
    %3618 = vmatprep.subr.mxu0 0.0
    %3619 = vmatpush1.msra.mxu0 %v3421
    %3620 = vmatprep.subr.mxu0 0.0
    %3621 = vmatpush1.msra.mxu0 %v3418
    %3622 = vmatprep.subr.mxu0 0.0
    %3623 = vmatpush1.msra.mxu0 %v3415
    %3624 = vmatprep.subr.mxu0 0.0
    %3625 = vmatpush1.msra.mxu0 %v3412
    %3626 = vmatprep.subr.mxu0 0.0
    %3627 = vmatpush1.msra.mxu0 %v3409
    %3628 = vmatprep.subr.mxu0 0.0
    %3629 = vmatpush1.msra.mxu0 %v3406
    %3630 = vmatprep.subr.mxu0 0.0
    %3631 = vmatpush2.msra.mxu0 0.0
    %3632 = vmatprep.subr.mxu0 0.0
    %3633 = vmatpush2.msra.mxu0 0.0
    %3634 = vmatprep.subr.mxu0 0.0
    %3635 = vmatpush2.msra.mxu0 0.0
    %3636 = vmatprep.subr.mxu0 0.0
    %3637 = vmatpush2.msra.mxu0 0.0
    %3638 = vmatprep.subr.mxu0 0.0
    %3639 = vmatpush2.msra.mxu0 0.0
    %3640 = vmatprep.subr.mxu0 0.0
    %3641 = vmatpush2.msra.mxu0 0.0
    %3642 = vmatprep.subr.mxu0 0.0
    %3643 = vmatpush2.msra.mxu0 0.0
    %3644 = vmatprep.subr.mxu0 0.0
    %3645 = vmatpush2.msra.mxu0 0.0
    %3646 = vmatprep.subr.mxu0 0.0
    %3647 = vmatpush2.msra.mxu0 0.0
    %3648 = vmatprep.subr.mxu0 0.0
    %3649 = vmatpush2.msra.mxu0 0.0
    %3650 = vmatprep.subr.mxu0 0.0
    %3651 = vmatpush2.msra.mxu0 0.0
    %3652 = vmatprep.subr.mxu0 0.0
    %3653 = vmatpush2.msra.mxu0 0.0
    %3654 = vmatprep.subr.mxu0 0.0
    %3655 = vmatpush2.msra.mxu0 0.0
    %3656 = vmatprep.subr.mxu0 0.0
    %3657 = vmatpush2.msra.mxu0 0.0
    %3658 = vmatprep.subr.mxu0 0.0
    %3659 = vmatpush2.msra.mxu0 0.0
    %3660 = vmatprep.subr.mxu0 0.0
    %3661 = vmatpush2.msra.mxu0 0.0
    %3662 = vmatprep.mubr.f32.mxu0 0.0
    %3663 = vmatmul.mubr.f32.gmra.mxu0 %v3399
    %v3664 = vpop.f32.mrf.mxu0
    %v3665 = vadd.f32 %v3517, %v3664
    %v3666 = vpop.f32.mrf.mxu0
    %3667 = vmatprep.mubr.f32.mxu0 0.0
    %3668 = vmatmul.mubr.f32.gmra.mxu0 %v3402
    %v3669 = vpop.f32.mrf.mxu0
    %v3670 = vadd.f32 %v3517, %v3669
    %v3671 = vpop.f32.mrf.mxu0
    %3672 = vdwg.mxu0
    %v3674 = vlaneseq
    %v3675 = vshrl.u32 %v3674, 7
    %v3676 = vsub.s32 0, %v3675
    %v3677 = vrot.slane %v3504, %v3676
    %v3678 = vlaneseq
    %v3679 = vshrl.u32 %v3678, 7
    %v3680 = vsub.s32 1, %v3679
    %v3681 = vrot.slane %v3504, %v3680
    %v3682 = vlaneseq
    %v3683 = vshrl.u32 %v3682, 7
    %v3684 = vsub.s32 2, %v3683
    %v3685 = vrot.slane %v3504, %v3684
    %3689 = vmatprep.subr.mxu0 %v3499
    %3690 = vmatpush1.msra.mxu0 %v3498
    %3691 = vmatprep.subr.mxu0 %v3496
    %3692 = vmatpush1.msra.mxu0 %v3495
    %3693 = vmatprep.subr.mxu0 %v3493
    %3694 = vmatpush1.msra.mxu0 %v3492
    %3695 = vmatprep.subr.mxu0 %v3490
    %3696 = vmatpush1.msra.mxu0 %v3489
    %3697 = vmatprep.subr.mxu0 %v3487
    %3698 = vmatpush1.msra.mxu0 %v3486
    %3699 = vmatprep.subr.mxu0 %v3484
    %3700 = vmatpush1.msra.mxu0 %v3483
    %3701 = vmatprep.subr.mxu0 %v3481
    %3702 = vmatpush1.msra.mxu0 %v3480
    %3703 = vmatprep.subr.mxu0 %v3478
    %3704 = vmatpush1.msra.mxu0 %v3477
    %3705 = vmatprep.subr.mxu0 %v3475
    %3706 = vmatpush1.msra.mxu0 %v3474
    %3707 = vmatprep.subr.mxu0 %v3472
    %3708 = vmatpush1.msra.mxu0 %v3471
    %3709 = vmatprep.subr.mxu0 %v3469
    %3710 = vmatpush1.msra.mxu0 %v3468
    %3711 = vmatprep.subr.mxu0 %v3466
    %3712 = vmatpush1.msra.mxu0 %v3465
    %3713 = vmatprep.subr.mxu0 %v3463
    %3714 = vmatpush1.msra.mxu0 %v3462
    %3715 = vmatprep.subr.mxu0 %v3460
    %3716 = vmatpush1.msra.mxu0 %v3459
    %3717 = vmatprep.subr.mxu0 %v3457
    %3718 = vmatpush1.msra.mxu0 %v3456
    %3719 = vmatprep.subr.mxu0 %v3454
    %3720 = vmatpush1.msra.mxu0 %v3453
    %3721 = vmatprep.subr.mxu0 0.0
    %3722 = vmatpush2.msra.mxu0 0.0
    %3723 = vmatprep.subr.mxu0 0.0
    %3724 = vmatpush2.msra.mxu0 0.0
    %3725 = vmatprep.subr.mxu0 0.0
    %3726 = vmatpush2.msra.mxu0 0.0
    %3727 = vmatprep.subr.mxu0 0.0
    %3728 = vmatpush2.msra.mxu0 0.0
    %3729 = vmatprep.subr.mxu0 0.0
    %3730 = vmatpush2.msra.mxu0 0.0
    %3731 = vmatprep.subr.mxu0 0.0
    %3732 = vmatpush2.msra.mxu0 0.0
    %3733 = vmatprep.subr.mxu0 0.0
    %3734 = vmatpush2.msra.mxu0 0.0
    %3735 = vmatprep.subr.mxu0 0.0
    %3736 = vmatpush2.msra.mxu0 0.0
    %3737 = vmatprep.subr.mxu0 0.0
    %3738 = vmatpush2.msra.mxu0 0.0
    %3739 = vmatprep.subr.mxu0 0.0
    %3740 = vmatpush2.msra.mxu0 0.0
    %3741 = vmatprep.subr.mxu0 0.0
    %3742 = vmatpush2.msra.mxu0 0.0
    %3743 = vmatprep.subr.mxu0 0.0
    %3744 = vmatpush2.msra.mxu0 0.0
    %3745 = vmatprep.subr.mxu0 0.0
    %3746 = vmatpush2.msra.mxu0 0.0
    %3747 = vmatprep.subr.mxu0 0.0
    %3748 = vmatpush2.msra.mxu0 0.0
    %3749 = vmatprep.subr.mxu0 0.0
    %3750 = vmatpush2.msra.mxu0 0.0
    %3751 = vmatprep.subr.mxu0 0.0
    %3752 = vmatpush2.msra.mxu0 0.0
    %3753 = vmatprep.mubr.f32.mxu0 0.0
    %3754 = vmatmul.mubr.f32.gmra.mxu0 0.0
    %v3755 = vpop.f32.mrf.mxu0
    %v3756 = vadd.f32 %v3677, %v3755
    %v3757 = vpop.f32.mrf.mxu0
    %v3758 = vadd.f32 %v3681, %v3757
    %3759 = vdwg.mxu0
    %3760 = vmatprep.subr.mxu0 0.0
    %3761 = vmatpush1.msra.mxu0 %v3500
    %3762 = vmatprep.subr.mxu0 0.0
    %3763 = vmatpush1.msra.mxu0 %v3497
    %3764 = vmatprep.subr.mxu0 0.0
    %3765 = vmatpush1.msra.mxu0 %v3494
    %3766 = vmatprep.subr.mxu0 0.0
    %3767 = vmatpush1.msra.mxu0 %v3491
    %3768 = vmatprep.subr.mxu0 0.0
    %3769 = vmatpush1.msra.mxu0 %v3488
    %3770 = vmatprep.subr.mxu0 0.0
    %3771 = vmatpush1.msra.mxu0 %v3485
    %3772 = vmatprep.subr.mxu0 0.0
    %3773 = vmatpush1.msra.mxu0 %v3482
    %3774 = vmatprep.subr.mxu0 0.0
    %3775 = vmatpush1.msra.mxu0 %v3479
    %3776 = vmatprep.subr.mxu0 0.0
    %3777 = vmatpush1.msra.mxu0 %v3476
    %3778 = vmatprep.subr.mxu0 0.0
    %3779 = vmatpush1.msra.mxu0 %v3473
    %3780 = vmatprep.subr.mxu0 0.0
    %3781 = vmatpush1.msra.mxu0 %v3470
    %3782 = vmatprep.subr.mxu0 0.0
    %3783 = vmatpush1.msra.mxu0 %v3467
    %3784 = vmatprep.subr.mxu0 0.0
    %3785 = vmatpush1.msra.mxu0 %v3464
    %3786 = vmatprep.subr.mxu0 0.0
    %3787 = vmatpush1.msra.mxu0 %v3461
    %3788 = vmatprep.subr.mxu0 0.0
    %3789 = vmatpush1.msra.mxu0 %v3458
    %3790 = vmatprep.subr.mxu0 0.0
    %3791 = vmatpush1.msra.mxu0 %v3455
    %3792 = vmatprep.subr.mxu0 0.0
    %3793 = vmatpush2.msra.mxu0 0.0
    %3794 = vmatprep.subr.mxu0 0.0
    %3795 = vmatpush2.msra.mxu0 0.0
    %3796 = vmatprep.subr.mxu0 0.0
    %3797 = vmatpush2.msra.mxu0 0.0
    %3798 = vmatprep.subr.mxu0 0.0
    %3799 = vmatpush2.msra.mxu0 0.0
    %3800 = vmatprep.subr.mxu0 0.0
    %3801 = vmatpush2.msra.mxu0 0.0
    %3802 = vmatprep.subr.mxu0 0.0
    %3803 = vmatpush2.msra.mxu0 0.0
    %3804 = vmatprep.subr.mxu0 0.0
    %3805 = vmatpush2.msra.mxu0 0.0
    %3806 = vmatprep.subr.mxu0 0.0
    %3807 = vmatpush2.msra.mxu0 0.0
    %3808 = vmatprep.subr.mxu0 0.0
    %3809 = vmatpush2.msra.mxu0 0.0
    %3810 = vmatprep.subr.mxu0 0.0
    %3811 = vmatpush2.msra.mxu0 0.0
    %3812 = vmatprep.subr.mxu0 0.0
    %3813 = vmatpush2.msra.mxu0 0.0
    %3814 = vmatprep.subr.mxu0 0.0
    %3815 = vmatpush2.msra.mxu0 0.0
    %3816 = vmatprep.subr.mxu0 0.0
    %3817 = vmatpush2.msra.mxu0 0.0
    %3818 = vmatprep.subr.mxu0 0.0
    %3819 = vmatpush2.msra.mxu0 0.0
    %3820 = vmatprep.subr.mxu0 0.0
    %3821 = vmatpush2.msra.mxu0 0.0
    %3822 = vmatprep.subr.mxu0 0.0
    %3823 = vmatpush2.msra.mxu0 0.0
    %3824 = vmatprep.mubr.f32.mxu0 0.0
    %3825 = vmatmul.mubr.f32.gmra.mxu0 0.0
    %v3826 = vpop.f32.mrf.mxu0
    %v3827 = vadd.f32 %v3685, %v3826
    %v3828 = vpop.f32.mrf.mxu0
    %3829 = vdwg.mxu0
    %v3830 = vadd.f32 %v3588, %v3756
    %v3831 = vadd.f32 %v3590, %v3758
    %v3832 = vxor.u32 %v3830, 2147483648
    %v3833 = vxor.u32 %v3831, 2147483648
    %v3834 = vmul.f32 %v3832, 1.442695
    %v3835 = vpow.pop %v3834
    %v3836 = vmul.f32 %v3833, 1.442695
    %v3837 = vpow.pop %v3836
    %v3838 = vadd.f32 %v3835, 1.0
    %v3839 = vadd.f32 %v3837, 1.0
    %v3840 = vrcp.pop %v3838
    %v3841 = vmul.f32 1.0, %v3840
    %v3842 = vrcp.pop %v3839
    %v3843 = vmul.f32 1.0, %v3842
    %v3844 = vmul.f32 %v3841, %v3827
    %v3845 = vadd.f32 %v3665, %v3844
    %v3846 = vtanh.pop %v3845
    %v3847 = vsub.f32 1.0, %v3843
    %v3848 = vmul.f32 %v3847, %v3846
    %v3849 = vmul.f32 %v3843, 0.0
    %v3850 = vadd.f32 %v3848, %v3849
    %3851 = vmatprep.subr.mxu0 %v3499
    %3852 = vmatpush1.msra.mxu0 %v3498
    %3853 = vmatprep.subr.mxu0 %v3496
    %3854 = vmatpush1.msra.mxu0 %v3495
    %3855 = vmatprep.subr.mxu0 %v3493
    %3856 = vmatpush1.msra.mxu0 %v3492
    %3857 = vmatprep.subr.mxu0 %v3490
    %3858 = vmatpush1.msra.mxu0 %v3489
    %3859 = vmatprep.subr.mxu0 %v3487
    %3860 = vmatpush1.msra.mxu0 %v3486
    %3861 = vmatprep.subr.mxu0 %v3484
    %3862 = vmatpush1.msra.mxu0 %v3483
    %3863 = vmatprep.subr.mxu0 %v3481
    %3864 = vmatpush1.msra.mxu0 %v3480
    %3865 = vmatprep.subr.mxu0 %v3478
    %3866 = vmatpush1.msra.mxu0 %v3477
    %3867 = vmatprep.subr.mxu0 %v3475
    %3868 = vmatpush1.msra.mxu0 %v3474
    %3869 = vmatprep.subr.mxu0 %v3472
    %3870 = vmatpush1.msra.mxu0 %v3471
    %3871 = vmatprep.subr.mxu0 %v3469
    %3872 = vmatpush1.msra.mxu0 %v3468
    %3873 = vmatprep.subr.mxu0 %v3466
    %3874 = vmatpush1.msra.mxu0 %v3465
    %3875 = vmatprep.subr.mxu0 %v3463
    %3876 = vmatpush1.msra.mxu0 %v3462
    %3877 = vmatprep.subr.mxu0 %v3460
    %3878 = vmatpush1.msra.mxu0 %v3459
    %3879 = vmatprep.subr.mxu0 %v3457
    %3880 = vmatpush1.msra.mxu0 %v3456
    %3881 = vmatprep.subr.mxu0 %v3454
    %3882 = vmatpush1.msra.mxu0 %v3453
    %3883 = vmatprep.subr.mxu0 0.0
    %3884 = vmatpush2.msra.mxu0 0.0
    %3885 = vmatprep.subr.mxu0 0.0
    %3886 = vmatpush2.msra.mxu0 0.0
    %3887 = vmatprep.subr.mxu0 0.0
    %3888 = vmatpush2.msra.mxu0 0.0
    %3889 = vmatprep.subr.mxu0 0.0
    %3890 = vmatpush2.msra.mxu0 0.0
    %3891 = vmatprep.subr.mxu0 0.0
    %3892 = vmatpush2.msra.mxu0 0.0
    %3893 = vmatprep.subr.mxu0 0.0
    %3894 = vmatpush2.msra.mxu0 0.0
    %3895 = vmatprep.subr.mxu0 0.0
    %3896 = vmatpush2.msra.mxu0 0.0
    %3897 = vmatprep.subr.mxu0 0.0
    %3898 = vmatpush2.msra.mxu0 0.0
    %3899 = vmatprep.subr.mxu0 0.0
    %3900 = vmatpush2.msra.mxu0 0.0
    %3901 = vmatprep.subr.mxu0 0.0
    %3902 = vmatpush2.msra.mxu0 0.0
    %3903 = vmatprep.subr.mxu0 0.0
    %3904 = vmatpush2.msra.mxu0 0.0
    %3905 = vmatprep.subr.mxu0 0.0
    %3906 = vmatpush2.msra.mxu0 0.0
    %3907 = vmatprep.subr.mxu0 0.0
    %3908 = vmatpush2.msra.mxu0 0.0
    %3909 = vmatprep.subr.mxu0 0.0
    %3910 = vmatpush2.msra.mxu0 0.0
    %3911 = vmatprep.subr.mxu0 0.0
    %3912 = vmatpush2.msra.mxu0 0.0
    %3913 = vmatprep.subr.mxu0 0.0
    %3914 = vmatpush2.msra.mxu0 0.0
    %3915 = vmatprep.mubr.f32.mxu0 0.0
    %3916 = vmatmul.mubr.f32.gmra.mxu0 %v3850
    %v3917 = vpop.f32.mrf.mxu0
    %v3918 = vadd.f32 %v3677, %v3917
    %v3919 = vpop.f32.mrf.mxu0
    %v3920 = vadd.f32 %v3681, %v3919
    %3921 = vdwg.mxu0
    %3922 = vmatprep.subr.mxu0 0.0
    %3923 = vmatpush1.msra.mxu0 %v3500
    %3924 = vmatprep.subr.mxu0 0.0
    %3925 = vmatpush1.msra.mxu0 %v3497
    %3926 = vmatprep.subr.mxu0 0.0
    %3927 = vmatpush1.msra.mxu0 %v3494
    %3928 = vmatprep.subr.mxu0 0.0
    %3929 = vmatpush1.msra.mxu0 %v3491
    %3930 = vmatprep.subr.mxu0 0.0
    %3931 = vmatpush1.msra.mxu0 %v3488
    %3932 = vmatprep.subr.mxu0 0.0
    %3933 = vmatpush1.msra.mxu0 %v3485
    %3934 = vmatprep.subr.mxu0 0.0
    %3935 = vmatpush1.msra.mxu0 %v3482
    %3936 = vmatprep.subr.mxu0 0.0
    %3937 = vmatpush1.msra.mxu0 %v3479
    %3938 = vmatprep.subr.mxu0 0.0
    %3939 = vmatpush1.msra.mxu0 %v3476
    %3940 = vmatprep.subr.mxu0 0.0
    %3941 = vmatpush1.msra.mxu0 %v3473
    %3942 = vmatprep.subr.mxu0 0.0
    %3943 = vmatpush1.msra.mxu0 %v3470
    %3944 = vmatprep.subr.mxu0 0.0
    %3945 = vmatpush1.msra.mxu0 %v3467
    %3946 = vmatprep.subr.mxu0 0.0
    %3947 = vmatpush1.msra.mxu0 %v3464
    %3948 = vmatprep.subr.mxu0 0.0
    %3949 = vmatpush1.msra.mxu0 %v3461
    %3950 = vmatprep.subr.mxu0 0.0
    %3951 = vmatpush1.msra.mxu0 %v3458
    %3952 = vmatprep.subr.mxu0 0.0
    %3953 = vmatpush1.msra.mxu0 %v3455
    %3954 = vmatprep.subr.mxu0 0.0
    %3955 = vmatpush2.msra.mxu0 0.0
    %3956 = vmatprep.subr.mxu0 0.0
    %3957 = vmatpush2.msra.mxu0 0.0
    %3958 = vmatprep.subr.mxu0 0.0
    %3959 = vmatpush2.msra.mxu0 0.0
    %3960 = vmatprep.subr.mxu0 0.0
    %3961 = vmatpush2.msra.mxu0 0.0
    %3962 = vmatprep.subr.mxu0 0.0
    %3963 = vmatpush2.msra.mxu0 0.0
    %3964 = vmatprep.subr.mxu0 0.0
    %3965 = vmatpush2.msra.mxu0 0.0
    %3966 = vmatprep.subr.mxu0 0.0
    %3967 = vmatpush2.msra.mxu0 0.0
    %3968 = vmatprep.subr.mxu0 0.0
    %3969 = vmatpush2.msra.mxu0 0.0
    %3970 = vmatprep.subr.mxu0 0.0
    %3971 = vmatpush2.msra.mxu0 0.0
    %3972 = vmatprep.subr.mxu0 0.0
    %3973 = vmatpush2.msra.mxu0 0.0
    %3974 = vmatprep.subr.mxu0 0.0
    %3975 = vmatpush2.msra.mxu0 0.0
    %3976 = vmatprep.subr.mxu0 0.0
    %3977 = vmatpush2.msra.mxu0 0.0
    %3978 = vmatprep.subr.mxu0 0.0
    %3979 = vmatpush2.msra.mxu0 0.0
    %3980 = vmatprep.subr.mxu0 0.0
    %3981 = vmatpush2.msra.mxu0 0.0
    %3982 = vmatprep.subr.mxu0 0.0
    %3983 = vmatpush2.msra.mxu0 0.0
    %3984 = vmatprep.subr.mxu0 0.0
    %3985 = vmatpush2.msra.mxu0 0.0
    %3986 = vmatprep.mubr.f32.mxu0 0.0
    %3987 = vmatmul.mubr.f32.gmra.mxu0 %v3850
    %v3988 = vpop.f32.mrf.mxu0
    %v3989 = vadd.f32 %v3685, %v3988
    %v3990 = vpop.f32.mrf.mxu0
    %3991 = vdwg.mxu0
    %v3994 = vrot.slane %v3918, 6
    %v3995 = vrot.slane %v3920, 6
    %v3998 = vadd.f32 %v3588, %v3994
    %v3999 = vadd.f32 %v3590, %v3995
    %v4000 = vxor.u32 %v3998, 2147483648
    %v4001 = vxor.u32 %v3999, 2147483648
    %v4002 = vmul.f32 %v4000, 1.442695
    %v4003 = vpow.pop %v4002
    %v4004 = vmul.f32 %v4001, 1.442695
    %v4005 = vpow.pop %v4004
    %v4006 = vadd.f32 %v4003, 1.0
    %v4007 = vadd.f32 %v4005, 1.0
    %v4008 = vrcp.pop %v4006
    %v4009 = vmul.f32 1.0, %v4008
    %v4010 = vrcp.pop %v4007
    %v4011 = vmul.f32 1.0, %v4010
    %v4013 = vrot.slane %v3989, 6
    %v4015 = vmul.f32 %v4009, %v4013
    %v4016 = vadd.f32 %v3665, %v4015
    %v4017 = vtanh.pop %v4016
    %v4018 = vsub.f32 1.0, %v4011
    %v4019 = vmul.f32 %v4018, %v4017
    %v4021 = vrot.slane %v3850, 6
    %v4023 = vmul.f32 %v4011, %v4021
    %v4024 = vadd.f32 %v4019, %v4023
    %v4026 = vrot.slane %v4024, 2
    %4028 = vmatprep.subr.mxu0 %v3499
    %4029 = vmatpush1.msra.mxu0 %v3498
    %4030 = vmatprep.subr.mxu0 %v3496
    %4031 = vmatpush1.msra.mxu0 %v3495
    %4032 = vmatprep.subr.mxu0 %v3493
    %4033 = vmatpush1.msra.mxu0 %v3492
    %4034 = vmatprep.subr.mxu0 %v3490
    %4035 = vmatpush1.msra.mxu0 %v3489
    %4036 = vmatprep.subr.mxu0 %v3487
    %4037 = vmatpush1.msra.mxu0 %v3486
    %4038 = vmatprep.subr.mxu0 %v3484
    %4039 = vmatpush1.msra.mxu0 %v3483
    %4040 = vmatprep.subr.mxu0 %v3481
    %4041 = vmatpush1.msra.mxu0 %v3480
    %4042 = vmatprep.subr.mxu0 %v3478
    %4043 = vmatpush1.msra.mxu0 %v3477
    %4044 = vmatprep.subr.mxu0 %v3475
    %4045 = vmatpush1.msra.mxu0 %v3474
    %4046 = vmatprep.subr.mxu0 %v3472
    %4047 = vmatpush1.msra.mxu0 %v3471
    %4048 = vmatprep.subr.mxu0 %v3469
    %4049 = vmatpush1.msra.mxu0 %v3468
    %4050 = vmatprep.subr.mxu0 %v3466
    %4051 = vmatpush1.msra.mxu0 %v3465
    %4052 = vmatprep.subr.mxu0 %v3463
    %4053 = vmatpush1.msra.mxu0 %v3462
    %4054 = vmatprep.subr.mxu0 %v3460
    %4055 = vmatpush1.msra.mxu0 %v3459
    %4056 = vmatprep.subr.mxu0 %v3457
    %4057 = vmatpush1.msra.mxu0 %v3456
    %4058 = vmatprep.subr.mxu0 %v3454
    %4059 = vmatpush1.msra.mxu0 %v3453
    %4060 = vmatprep.subr.mxu0 0.0
    %4061 = vmatpush2.msra.mxu0 0.0
    %4062 = vmatprep.subr.mxu0 0.0
    %4063 = vmatpush2.msra.mxu0 0.0
    %4064 = vmatprep.subr.mxu0 0.0
    %4065 = vmatpush2.msra.mxu0 0.0
    %4066 = vmatprep.subr.mxu0 0.0
    %4067 = vmatpush2.msra.mxu0 0.0
    %4068 = vmatprep.subr.mxu0 0.0
    %4069 = vmatpush2.msra.mxu0 0.0
    %4070 = vmatprep.subr.mxu0 0.0
    %4071 = vmatpush2.msra.mxu0 0.0
    %4072 = vmatprep.subr.mxu0 0.0
    %4073 = vmatpush2.msra.mxu0 0.0
    %4074 = vmatprep.subr.mxu0 0.0
    %4075 = vmatpush2.msra.mxu0 0.0
    %4076 = vmatprep.subr.mxu0 0.0
    %4077 = vmatpush2.msra.mxu0 0.0
    %4078 = vmatprep.subr.mxu0 0.0
    %4079 = vmatpush2.msra.mxu0 0.0
    %4080 = vmatprep.subr.mxu0 0.0
    %4081 = vmatpush2.msra.mxu0 0.0
    %4082 = vmatprep.subr.mxu0 0.0
    %4083 = vmatpush2.msra.mxu0 0.0
    %4084 = vmatprep.subr.mxu0 0.0
    %4085 = vmatpush2.msra.mxu0 0.0
    %4086 = vmatprep.subr.mxu0 0.0
    %4087 = vmatpush2.msra.mxu0 0.0
    %4088 = vmatprep.subr.mxu0 0.0
    %4089 = vmatpush2.msra.mxu0 0.0
    %4090 = vmatprep.subr.mxu0 0.0
    %4091 = vmatpush2.msra.mxu0 0.0
    %4092 = vmatprep.mubr.f32.mxu0 0.0
    %4093 = vmatmul.mubr.f32.gmra.mxu0 %v4026
    %v4094 = vpop.f32.mrf.mxu0
    %v4095 = vadd.f32 %v3677, %v4094
    %v4096 = vpop.f32.mrf.mxu0
    %v4097 = vadd.f32 %v3681, %v4096
    %4098 = vdwg.mxu0
    %4099 = vmatprep.subr.mxu0 0.0
    %4100 = vmatpush1.msra.mxu0 %v3500
    %4101 = vmatprep.subr.mxu0 0.0
    %4102 = vmatpush1.msra.mxu0 %v3497
    %4103 = vmatprep.subr.mxu0 0.0
    %4104 = vmatpush1.msra.mxu0 %v3494
    %4105 = vmatprep.subr.mxu0 0.0
    %4106 = vmatpush1.msra.mxu0 %v3491
    %4107 = vmatprep.subr.mxu0 0.0
    %4108 = vmatpush1.msra.mxu0 %v3488
    %4109 = vmatprep.subr.mxu0 0.0
    %4110 = vmatpush1.msra.mxu0 %v3485
    %4111 = vmatprep.subr.mxu0 0.0
    %4112 = vmatpush1.msra.mxu0 %v3482
    %4113 = vmatprep.subr.mxu0 0.0
    %4114 = vmatpush1.msra.mxu0 %v3479
    %4115 = vmatprep.subr.mxu0 0.0
    %4116 = vmatpush1.msra.mxu0 %v3476
    %4117 = vmatprep.subr.mxu0 0.0
    %4118 = vmatpush1.msra.mxu0 %v3473
    %4119 = vmatprep.subr.mxu0 0.0
    %4120 = vmatpush1.msra.mxu0 %v3470
    %4121 = vmatprep.subr.mxu0 0.0
    %4122 = vmatpush1.msra.mxu0 %v3467
    %4123 = vmatprep.subr.mxu0 0.0
    %4124 = vmatpush1.msra.mxu0 %v3464
    %4125 = vmatprep.subr.mxu0 0.0
    %4126 = vmatpush1.msra.mxu0 %v3461
    %4127 = vmatprep.subr.mxu0 0.0
    %4128 = vmatpush1.msra.mxu0 %v3458
    %4129 = vmatprep.subr.mxu0 0.0
    %4130 = vmatpush1.msra.mxu0 %v3455
    %4131 = vmatprep.subr.mxu0 0.0
    %4132 = vmatpush2.msra.mxu0 0.0
    %4133 = vmatprep.subr.mxu0 0.0
    %4134 = vmatpush2.msra.mxu0 0.0
    %4135 = vmatprep.subr.mxu0 0.0
    %4136 = vmatpush2.msra.mxu0 0.0
    %4137 = vmatprep.subr.mxu0 0.0
    %4138 = vmatpush2.msra.mxu0 0.0
    %4139 = vmatprep.subr.mxu0 0.0
    %4140 = vmatpush2.msra.mxu0 0.0
    %4141 = vmatprep.subr.mxu0 0.0
    %4142 = vmatpush2.msra.mxu0 0.0
    %4143 = vmatprep.subr.mxu0 0.0
    %4144 = vmatpush2.msra.mxu0 0.0
    %4145 = vmatprep.subr.mxu0 0.0
    %4146 = vmatpush2.msra.mxu0 0.0
    %4147 = vmatprep.subr.mxu0 0.0
    %4148 = vmatpush2.msra.mxu0 0.0
    %4149 = vmatprep.subr.mxu0 0.0
    %4150 = vmatpush2.msra.mxu0 0.0
    %4151 = vmatprep.subr.mxu0 0.0
    %4152 = vmatpush2.msra.mxu0 0.0
    %4153 = vmatprep.subr.mxu0 0.0
    %4154 = vmatpush2.msra.mxu0 0.0
    %4155 = vmatprep.subr.mxu0 0.0
    %4156 = vmatpush2.msra.mxu0 0.0
    %4157 = vmatprep.subr.mxu0 0.0
    %4158 = vmatpush2.msra.mxu0 0.0
    %4159 = vmatprep.subr.mxu0 0.0
    %4160 = vmatpush2.msra.mxu0 0.0
    %4161 = vmatprep.subr.mxu0 0.0
    %4162 = vmatpush2.msra.mxu0 0.0
    %4163 = vmatprep.mubr.f32.mxu0 0.0
    %4164 = vmatmul.mubr.f32.gmra.mxu0 %v4026
    %v4165 = vpop.f32.mrf.mxu0
    %v4166 = vadd.f32 %v3685, %v4165
    %v4167 = vpop.f32.mrf.mxu0
    %4168 = vdwg.mxu0
    %v4171 = vrot.slane %v4095, 4
    %v4172 = vrot.slane %v4097, 4
    %v4175 = vadd.f32 %v3588, %v4171
    %v4176 = vadd.f32 %v3590, %v4172
    %v4177 = vxor.u32 %v4175, 2147483648
    %v4178 = vxor.u32 %v4176, 2147483648
    %v4179 = vmul.f32 %v4177, 1.442695
    %v4180 = vpow.pop %v4179
    %v4181 = vmul.f32 %v4178, 1.442695
    %v4182 = vpow.pop %v4181
    %v4183 = vadd.f32 %v4180, 1.0
    %v4184 = vadd.f32 %v4182, 1.0
    %v4185 = vrcp.pop %v4183
    %v4186 = vmul.f32 1.0, %v4185
    %v4187 = vrcp.pop %v4184
    %v4188 = vmul.f32 1.0, %v4187
    %v4190 = vrot.slane %v4166, 4
    %v4192 = vmul.f32 %v4186, %v4190
    %v4193 = vadd.f32 %v3665, %v4192
    %v4194 = vtanh.pop %v4193
    %v4195 = vsub.f32 1.0, %v4188
    %v4196 = vmul.f32 %v4195, %v4194
    %v4197 = vrot.slane %v4024, 6
    %v4199 = vmul.f32 %v4188, %v4197
    %v4200 = vadd.f32 %v4196, %v4199
    %v4202 = vrot.slane %v4200, 4
    %4204 = vmatprep.subr.mxu0 %v3499
    %4205 = vmatpush1.msra.mxu0 %v3498
    %4206 = vmatprep.subr.mxu0 %v3496
    %4207 = vmatpush1.msra.mxu0 %v3495
    %4208 = vmatprep.subr.mxu0 %v3493
    %4209 = vmatpush1.msra.mxu0 %v3492
    %4210 = vmatprep.subr.mxu0 %v3490
    %4211 = vmatpush1.msra.mxu0 %v3489
    %4212 = vmatprep.subr.mxu0 %v3487
    %4213 = vmatpush1.msra.mxu0 %v3486
    %4214 = vmatprep.subr.mxu0 %v3484
    %4215 = vmatpush1.msra.mxu0 %v3483
    %4216 = vmatprep.subr.mxu0 %v3481
    %4217 = vmatpush1.msra.mxu0 %v3480
    %4218 = vmatprep.subr.mxu0 %v3478
    %4219 = vmatpush1.msra.mxu0 %v3477
    %4220 = vmatprep.subr.mxu0 %v3475
    %4221 = vmatpush1.msra.mxu0 %v3474
    %4222 = vmatprep.subr.mxu0 %v3472
    %4223 = vmatpush1.msra.mxu0 %v3471
    %4224 = vmatprep.subr.mxu0 %v3469
    %4225 = vmatpush1.msra.mxu0 %v3468
    %4226 = vmatprep.subr.mxu0 %v3466
    %4227 = vmatpush1.msra.mxu0 %v3465
    %4228 = vmatprep.subr.mxu0 %v3463
    %4229 = vmatpush1.msra.mxu0 %v3462
    %4230 = vmatprep.subr.mxu0 %v3460
    %4231 = vmatpush1.msra.mxu0 %v3459
    %4232 = vmatprep.subr.mxu0 %v3457
    %4233 = vmatpush1.msra.mxu0 %v3456
    %4234 = vmatprep.subr.mxu0 %v3454
    %4235 = vmatpush1.msra.mxu0 %v3453
    %4236 = vmatprep.subr.mxu0 0.0
    %4237 = vmatpush2.msra.mxu0 0.0
    %4238 = vmatprep.subr.mxu0 0.0
    %4239 = vmatpush2.msra.mxu0 0.0
    %4240 = vmatprep.subr.mxu0 0.0
    %4241 = vmatpush2.msra.mxu0 0.0
    %4242 = vmatprep.subr.mxu0 0.0
    %4243 = vmatpush2.msra.mxu0 0.0
    %4244 = vmatprep.subr.mxu0 0.0
    %4245 = vmatpush2.msra.mxu0 0.0
    %4246 = vmatprep.subr.mxu0 0.0
    %4247 = vmatpush2.msra.mxu0 0.0
    %4248 = vmatprep.subr.mxu0 0.0
    %4249 = vmatpush2.msra.mxu0 0.0
    %4250 = vmatprep.subr.mxu0 0.0
    %4251 = vmatpush2.msra.mxu0 0.0
    %4252 = vmatprep.subr.mxu0 0.0
    %4253 = vmatpush2.msra.mxu0 0.0
    %4254 = vmatprep.subr.mxu0 0.0
    %4255 = vmatpush2.msra.mxu0 0.0
    %4256 = vmatprep.subr.mxu0 0.0
    %4257 = vmatpush2.msra.mxu0 0.0
    %4258 = vmatprep.subr.mxu0 0.0
    %4259 = vmatpush2.msra.mxu0 0.0
    %4260 = vmatprep.subr.mxu0 0.0
    %4261 = vmatpush2.msra.mxu0 0.0
    %4262 = vmatprep.subr.mxu0 0.0
    %4263 = vmatpush2.msra.mxu0 0.0
    %4264 = vmatprep.subr.mxu0 0.0
    %4265 = vmatpush2.msra.mxu0 0.0
    %4266 = vmatprep.subr.mxu0 0.0
    %4267 = vmatpush2.msra.mxu0 0.0
    %4268 = vmatprep.mubr.f32.mxu0 0.0
    %4269 = vmatmul.mubr.f32.gmra.mxu0 %v4202
    %v4270 = vpop.f32.mrf.mxu0
    %v4271 = vadd.f32 %v3677, %v4270
    %v4272 = vpop.f32.mrf.mxu0
    %v4273 = vadd.f32 %v3681, %v4272
    %4274 = vdwg.mxu0
    %4275 = vmatprep.subr.mxu0 0.0
    %4276 = vmatpush1.msra.mxu0 %v3500
    %4277 = vmatprep.subr.mxu0 0.0
    %4278 = vmatpush1.msra.mxu0 %v3497
    %4279 = vmatprep.subr.mxu0 0.0
    %4280 = vmatpush1.msra.mxu0 %v3494
    %4281 = vmatprep.subr.mxu0 0.0
    %4282 = vmatpush1.msra.mxu0 %v3491
    %4283 = vmatprep.subr.mxu0 0.0
    %4284 = vmatpush1.msra.mxu0 %v3488
    %4285 = vmatprep.subr.mxu0 0.0
    %4286 = vmatpush1.msra.mxu0 %v3485
    %4287 = vmatprep.subr.mxu0 0.0
    %4288 = vmatpush1.msra.mxu0 %v3482
    %4289 = vmatprep.subr.mxu0 0.0
    %4290 = vmatpush1.msra.mxu0 %v3479
    %4291 = vmatprep.subr.mxu0 0.0
    %4292 = vmatpush1.msra.mxu0 %v3476
    %4293 = vmatprep.subr.mxu0 0.0
    %4294 = vmatpush1.msra.mxu0 %v3473
    %4295 = vmatprep.subr.mxu0 0.0
    %4296 = vmatpush1.msra.mxu0 %v3470
    %4297 = vmatprep.subr.mxu0 0.0
    %4298 = vmatpush1.msra.mxu0 %v3467
    %4299 = vmatprep.subr.mxu0 0.0
    %4300 = vmatpush1.msra.mxu0 %v3464
    %4301 = vmatprep.subr.mxu0 0.0
    %4302 = vmatpush1.msra.mxu0 %v3461
    %4303 = vmatprep.subr.mxu0 0.0
    %4304 = vmatpush1.msra.mxu0 %v3458
    %4305 = vmatprep.subr.mxu0 0.0
    %4306 = vmatpush1.msra.mxu0 %v3455
    %4307 = vmatprep.subr.mxu0 0.0
    %4308 = vmatpush2.msra.mxu0 0.0
    %4309 = vmatprep.subr.mxu0 0.0
    %4310 = vmatpush2.msra.mxu0 0.0
    %4311 = vmatprep.subr.mxu0 0.0
    %4312 = vmatpush2.msra.mxu0 0.0
    %4313 = vmatprep.subr.mxu0 0.0
    %4314 = vmatpush2.msra.mxu0 0.0
    %4315 = vmatprep.subr.mxu0 0.0
    %4316 = vmatpush2.msra.mxu0 0.0
    %4317 = vmatprep.subr.mxu0 0.0
    %4318 = vmatpush2.msra.mxu0 0.0
    %4319 = vmatprep.subr.mxu0 0.0
    %4320 = vmatpush2.msra.mxu0 0.0
    %4321 = vmatprep.subr.mxu0 0.0
    %4322 = vmatpush2.msra.mxu0 0.0
    %4323 = vmatprep.subr.mxu0 0.0
    %4324 = vmatpush2.msra.mxu0 0.0
    %4325 = vmatprep.subr.mxu0 0.0
    %4326 = vmatpush2.msra.mxu0 0.0
    %4327 = vmatprep.subr.mxu0 0.0
    %4328 = vmatpush2.msra.mxu0 0.0
    %4329 = vmatprep.subr.mxu0 0.0
    %4330 = vmatpush2.msra.mxu0 0.0
    %4331 = vmatprep.subr.mxu0 0.0
    %4332 = vmatpush2.msra.mxu0 0.0
    %4333 = vmatprep.subr.mxu0 0.0
    %4334 = vmatpush2.msra.mxu0 0.0
    %4335 = vmatprep.subr.mxu0 0.0
    %4336 = vmatpush2.msra.mxu0 0.0
    %4337 = vmatprep.subr.mxu0 0.0
    %4338 = vmatpush2.msra.mxu0 0.0
    %4339 = vmatprep.mubr.f32.mxu0 0.0
    %4340 = vmatmul.mubr.f32.gmra.mxu0 %v4202
    %v4341 = vpop.f32.mrf.mxu0
    %v4342 = vadd.f32 %v3685, %v4341
    %v4343 = vpop.f32.mrf.mxu0
    %4344 = vdwg.mxu0
    %v4347 = vrot.slane %v4271, 2
    %v4348 = vrot.slane %v4273, 2
    %v4351 = vadd.f32 %v3588, %v4347
    %v4352 = vadd.f32 %v3590, %v4348
    %v4353 = vxor.u32 %v4351, 2147483648
    %v4354 = vxor.u32 %v4352, 2147483648
    %v4355 = vmul.f32 %v4353, 1.442695
    %v4356 = vpow.pop %v4355
    %v4357 = vmul.f32 %v4354, 1.442695
    %v4358 = vpow.pop %v4357
    %v4359 = vadd.f32 %v4356, 1.0
    %v4360 = vadd.f32 %v4358, 1.0
    %v4361 = vrcp.pop %v4359
    %v4362 = vmul.f32 1.0, %v4361
    %v4363 = vrcp.pop %v4360
    %v4364 = vmul.f32 1.0, %v4363
    %v4366 = vrot.slane %v4342, 2
    %v4368 = vmul.f32 %v4362, %v4366
    %v4369 = vadd.f32 %v3665, %v4368
    %v4370 = vtanh.pop %v4369
    %v4371 = vsub.f32 1.0, %v4364
    %v4372 = vmul.f32 %v4371, %v4370
    %v4373 = vrot.slane %v4200, 6
    %v4375 = vmul.f32 %v4364, %v4373
    %v4376 = vadd.f32 %v4372, %v4375
    %v4378 = vrot.slane %v4376, 6
    %4380 = vmatprep.subr.mxu0 %v3499
    %4381 = vmatpush1.msra.mxu0 %v3498
    %4382 = vmatprep.subr.mxu0 %v3496
    %4383 = vmatpush1.msra.mxu0 %v3495
    %4384 = vmatprep.subr.mxu0 %v3493
    %4385 = vmatpush1.msra.mxu0 %v3492
    %4386 = vmatprep.subr.mxu0 %v3490
    %4387 = vmatpush1.msra.mxu0 %v3489
    %4388 = vmatprep.subr.mxu0 %v3487
    %4389 = vmatpush1.msra.mxu0 %v3486
    %4390 = vmatprep.subr.mxu0 %v3484
    %4391 = vmatpush1.msra.mxu0 %v3483
    %4392 = vmatprep.subr.mxu0 %v3481
    %4393 = vmatpush1.msra.mxu0 %v3480
    %4394 = vmatprep.subr.mxu0 %v3478
    %4395 = vmatpush1.msra.mxu0 %v3477
    %4396 = vmatprep.subr.mxu0 %v3475
    %4397 = vmatpush1.msra.mxu0 %v3474
    %4398 = vmatprep.subr.mxu0 %v3472
    %4399 = vmatpush1.msra.mxu0 %v3471
    %4400 = vmatprep.subr.mxu0 %v3469
    %4401 = vmatpush1.msra.mxu0 %v3468
    %4402 = vmatprep.subr.mxu0 %v3466
    %4403 = vmatpush1.msra.mxu0 %v3465
    %4404 = vmatprep.subr.mxu0 %v3463
    %4405 = vmatpush1.msra.mxu0 %v3462
    %4406 = vmatprep.subr.mxu0 %v3460
    %4407 = vmatpush1.msra.mxu0 %v3459
    %4408 = vmatprep.subr.mxu0 %v3457
    %4409 = vmatpush1.msra.mxu0 %v3456
    %4410 = vmatprep.subr.mxu0 %v3454
    %4411 = vmatpush1.msra.mxu0 %v3453
    %4412 = vmatprep.subr.mxu0 0.0
    %4413 = vmatpush2.msra.mxu0 0.0
    %4414 = vmatprep.subr.mxu0 0.0
    %4415 = vmatpush2.msra.mxu0 0.0
    %4416 = vmatprep.subr.mxu0 0.0
    %4417 = vmatpush2.msra.mxu0 0.0
    %4418 = vmatprep.subr.mxu0 0.0
    %4419 = vmatpush2.msra.mxu0 0.0
    %4420 = vmatprep.subr.mxu0 0.0
    %4421 = vmatpush2.msra.mxu0 0.0
    %4422 = vmatprep.subr.mxu0 0.0
    %4423 = vmatpush2.msra.mxu0 0.0
    %4424 = vmatprep.subr.mxu0 0.0
    %4425 = vmatpush2.msra.mxu0 0.0
    %4426 = vmatprep.subr.mxu0 0.0
    %4427 = vmatpush2.msra.mxu0 0.0
    %4428 = vmatprep.subr.mxu0 0.0
    %4429 = vmatpush2.msra.mxu0 0.0
    %4430 = vmatprep.subr.mxu0 0.0
    %4431 = vmatpush2.msra.mxu0 0.0
    %4432 = vmatprep.subr.mxu0 0.0
    %4433 = vmatpush2.msra.mxu0 0.0
    %4434 = vmatprep.subr.mxu0 0.0
    %4435 = vmatpush2.msra.mxu0 0.0
    %4436 = vmatprep.subr.mxu0 0.0
    %4437 = vmatpush2.msra.mxu0 0.0
    %4438 = vmatprep.subr.mxu0 0.0
    %4439 = vmatpush2.msra.mxu0 0.0
    %4440 = vmatprep.subr.mxu0 0.0
    %4441 = vmatpush2.msra.mxu0 0.0
    %4442 = vmatprep.subr.mxu0 0.0
    %4443 = vmatpush2.msra.mxu0 0.0
    %4444 = vmatprep.mubr.f32.mxu0 0.0
    %4445 = vmatmul.mubr.f32.gmra.mxu0 %v4378
    %v4446 = vpop.f32.mrf.mxu0
    %v4447 = vadd.f32 %v3677, %v4446
    %v4448 = vpop.f32.mrf.mxu0
    %v4449 = vadd.f32 %v3681, %v4448
    %4450 = vdwg.mxu0
    %4451 = vmatprep.subr.mxu0 0.0
    %4452 = vmatpush1.msra.mxu0 %v3500
    %4453 = vmatprep.subr.mxu0 0.0
    %4454 = vmatpush1.msra.mxu0 %v3497
    %4455 = vmatprep.subr.mxu0 0.0
    %4456 = vmatpush1.msra.mxu0 %v3494
    %4457 = vmatprep.subr.mxu0 0.0
    %4458 = vmatpush1.msra.mxu0 %v3491
    %4459 = vmatprep.subr.mxu0 0.0
    %4460 = vmatpush1.msra.mxu0 %v3488
    %4461 = vmatprep.subr.mxu0 0.0
    %4462 = vmatpush1.msra.mxu0 %v3485
    %4463 = vmatprep.subr.mxu0 0.0
    %4464 = vmatpush1.msra.mxu0 %v3482
    %4465 = vmatprep.subr.mxu0 0.0
    %4466 = vmatpush1.msra.mxu0 %v3479
    %4467 = vmatprep.subr.mxu0 0.0
    %4468 = vmatpush1.msra.mxu0 %v3476
    %4469 = vmatprep.subr.mxu0 0.0
    %4470 = vmatpush1.msra.mxu0 %v3473
    %4471 = vmatprep.subr.mxu0 0.0
    %4472 = vmatpush1.msra.mxu0 %v3470
    %4473 = vmatprep.subr.mxu0 0.0
    %4474 = vmatpush1.msra.mxu0 %v3467
    %4475 = vmatprep.subr.mxu0 0.0
    %4476 = vmatpush1.msra.mxu0 %v3464
    %4477 = vmatprep.subr.mxu0 0.0
    %4478 = vmatpush1.msra.mxu0 %v3461
    %4479 = vmatprep.subr.mxu0 0.0
    %4480 = vmatpush1.msra.mxu0 %v3458
    %4481 = vmatprep.subr.mxu0 0.0
    %4482 = vmatpush1.msra.mxu0 %v3455
    %4483 = vmatprep.subr.mxu0 0.0
    %4484 = vmatpush2.msra.mxu0 0.0
    %4485 = vmatprep.subr.mxu0 0.0
    %4486 = vmatpush2.msra.mxu0 0.0
    %4487 = vmatprep.subr.mxu0 0.0
    %4488 = vmatpush2.msra.mxu0 0.0
    %4489 = vmatprep.subr.mxu0 0.0
    %4490 = vmatpush2.msra.mxu0 0.0
    %4491 = vmatprep.subr.mxu0 0.0
    %4492 = vmatpush2.msra.mxu0 0.0
    %4493 = vmatprep.subr.mxu0 0.0
    %4494 = vmatpush2.msra.mxu0 0.0
    %4495 = vmatprep.subr.mxu0 0.0
    %4496 = vmatpush2.msra.mxu0 0.0
    %4497 = vmatprep.subr.mxu0 0.0
    %4498 = vmatpush2.msra.mxu0 0.0
    %4499 = vmatprep.subr.mxu0 0.0
    %4500 = vmatpush2.msra.mxu0 0.0
    %4501 = vmatprep.subr.mxu0 0.0
    %4502 = vmatpush2.msra.mxu0 0.0
    %4503 = vmatprep.subr.mxu0 0.0
    %4504 = vmatpush2.msra.mxu0 0.0
    %4505 = vmatprep.subr.mxu0 0.0
    %4506 = vmatpush2.msra.mxu0 0.0
    %4507 = vmatprep.subr.mxu0 0.0
    %4508 = vmatpush2.msra.mxu0 0.0
    %4509 = vmatprep.subr.mxu0 0.0
    %4510 = vmatpush2.msra.mxu0 0.0
    %4511 = vmatprep.subr.mxu0 0.0
    %4512 = vmatpush2.msra.mxu0 0.0
    %4513 = vmatprep.subr.mxu0 0.0
    %4514 = vmatpush2.msra.mxu0 0.0
    %4515 = vmatprep.mubr.f32.mxu0 0.0
    %4516 = vmatmul.mubr.f32.gmra.mxu0 %v4378
    %v4517 = vpop.f32.mrf.mxu0
    %v4518 = vadd.f32 %v3685, %v4517
    %v4519 = vpop.f32.mrf.mxu0
    %4520 = vdwg.mxu0
    %v4521 = vadd.f32 %v3594, %v4447
    %v4522 = vadd.f32 %v3596, %v4449
    %v4523 = vxor.u32 %v4521, 2147483648
    %v4524 = vxor.u32 %v4522, 2147483648
    %v4525 = vmul.f32 %v4523, 1.442695
    %v4526 = vpow.pop %v4525
    %v4527 = vmul.f32 %v4524, 1.442695
    %v4528 = vpow.pop %v4527
    %v4529 = vadd.f32 %v4526, 1.0
    %v4530 = vadd.f32 %v4528, 1.0
    %v4531 = vrcp.pop %v4529
    %v4532 = vmul.f32 1.0, %v4531
    %v4533 = vrcp.pop %v4530
    %v4534 = vmul.f32 1.0, %v4533
    %v4535 = vmul.f32 %v4532, %v4518
    %v4536 = vadd.f32 %v3670, %v4535
    %v4537 = vtanh.pop %v4536
    %v4538 = vsub.f32 1.0, %v4534
    %v4539 = vmul.f32 %v4538, %v4537
    %v4540 = vmul.f32 %v4534, %v4378
    %v4541 = vadd.f32 %v4539, %v4540
    %4542 = vmatprep.subr.mxu0 %v3499
    %4543 = vmatpush1.msra.mxu0 %v3498
    %4544 = vmatprep.subr.mxu0 %v3496
    %4545 = vmatpush1.msra.mxu0 %v3495
    %4546 = vmatprep.subr.mxu0 %v3493
    %4547 = vmatpush1.msra.mxu0 %v3492
    %4548 = vmatprep.subr.mxu0 %v3490
    %4549 = vmatpush1.msra.mxu0 %v3489
    %4550 = vmatprep.subr.mxu0 %v3487
    %4551 = vmatpush1.msra.mxu0 %v3486
    %4552 = vmatprep.subr.mxu0 %v3484
    %4553 = vmatpush1.msra.mxu0 %v3483
    %4554 = vmatprep.subr.mxu0 %v3481
    %4555 = vmatpush1.msra.mxu0 %v3480
    %4556 = vmatprep.subr.mxu0 %v3478
    %4557 = vmatpush1.msra.mxu0 %v3477
    %4558 = vmatprep.subr.mxu0 %v3475
    %4559 = vmatpush1.msra.mxu0 %v3474
    %4560 = vmatprep.subr.mxu0 %v3472
    %4561 = vmatpush1.msra.mxu0 %v3471
    %4562 = vmatprep.subr.mxu0 %v3469
    %4563 = vmatpush1.msra.mxu0 %v3468
    %4564 = vmatprep.subr.mxu0 %v3466
    %4565 = vmatpush1.msra.mxu0 %v3465
    %4566 = vmatprep.subr.mxu0 %v3463
    %4567 = vmatpush1.msra.mxu0 %v3462
    %4568 = vmatprep.subr.mxu0 %v3460
    %4569 = vmatpush1.msra.mxu0 %v3459
    %4570 = vmatprep.subr.mxu0 %v3457
    %4571 = vmatpush1.msra.mxu0 %v3456
    %4572 = vmatprep.subr.mxu0 %v3454
    %4573 = vmatpush1.msra.mxu0 %v3453
    %4574 = vmatprep.subr.mxu0 0.0
    %4575 = vmatpush2.msra.mxu0 0.0
    %4576 = vmatprep.subr.mxu0 0.0
    %4577 = vmatpush2.msra.mxu0 0.0
    %4578 = vmatprep.subr.mxu0 0.0
    %4579 = vmatpush2.msra.mxu0 0.0
    %4580 = vmatprep.subr.mxu0 0.0
    %4581 = vmatpush2.msra.mxu0 0.0
    %4582 = vmatprep.subr.mxu0 0.0
    %4583 = vmatpush2.msra.mxu0 0.0
    %4584 = vmatprep.subr.mxu0 0.0
    %4585 = vmatpush2.msra.mxu0 0.0
    %4586 = vmatprep.subr.mxu0 0.0
    %4587 = vmatpush2.msra.mxu0 0.0
    %4588 = vmatprep.subr.mxu0 0.0
    %4589 = vmatpush2.msra.mxu0 0.0
    %4590 = vmatprep.subr.mxu0 0.0
    %4591 = vmatpush2.msra.mxu0 0.0
    %4592 = vmatprep.subr.mxu0 0.0
    %4593 = vmatpush2.msra.mxu0 0.0
    %4594 = vmatprep.subr.mxu0 0.0
    %4595 = vmatpush2.msra.mxu0 0.0
    %4596 = vmatprep.subr.mxu0 0.0
    %4597 = vmatpush2.msra.mxu0 0.0
    %4598 = vmatprep.subr.mxu0 0.0
    %4599 = vmatpush2.msra.mxu0 0.0
    %4600 = vmatprep.subr.mxu0 0.0
    %4601 = vmatpush2.msra.mxu0 0.0
    %4602 = vmatprep.subr.mxu0 0.0
    %4603 = vmatpush2.msra.mxu0 0.0
    %4604 = vmatprep.subr.mxu0 0.0
    %4605 = vmatpush2.msra.mxu0 0.0
    %4606 = vmatprep.mubr.f32.mxu0 0.0
    %4607 = vmatmul.mubr.f32.gmra.mxu0 %v4541
    %v4608 = vpop.f32.mrf.mxu0
    %v4609 = vadd.f32 %v3677, %v4608
    %v4610 = vpop.f32.mrf.mxu0
    %v4611 = vadd.f32 %v3681, %v4610
    %4612 = vdwg.mxu0
    %4613 = vmatprep.subr.mxu0 0.0
    %4614 = vmatpush1.msra.mxu0 %v3500
    %4615 = vmatprep.subr.mxu0 0.0
    %4616 = vmatpush1.msra.mxu0 %v3497
    %4617 = vmatprep.subr.mxu0 0.0
    %4618 = vmatpush1.msra.mxu0 %v3494
    %4619 = vmatprep.subr.mxu0 0.0
    %4620 = vmatpush1.msra.mxu0 %v3491
    %4621 = vmatprep.subr.mxu0 0.0
    %4622 = vmatpush1.msra.mxu0 %v3488
    %4623 = vmatprep.subr.mxu0 0.0
    %4624 = vmatpush1.msra.mxu0 %v3485
    %4625 = vmatprep.subr.mxu0 0.0
    %4626 = vmatpush1.msra.mxu0 %v3482
    %4627 = vmatprep.subr.mxu0 0.0
    %4628 = vmatpush1.msra.mxu0 %v3479
    %4629 = vmatprep.subr.mxu0 0.0
    %4630 = vmatpush1.msra.mxu0 %v3476
    %4631 = vmatprep.subr.mxu0 0.0
    %4632 = vmatpush1.msra.mxu0 %v3473
    %4633 = vmatprep.subr.mxu0 0.0
    %4634 = vmatpush1.msra.mxu0 %v3470
    %4635 = vmatprep.subr.mxu0 0.0
    %4636 = vmatpush1.msra.mxu0 %v3467
    %4637 = vmatprep.subr.mxu0 0.0
    %4638 = vmatpush1.msra.mxu0 %v3464
    %4639 = vmatprep.subr.mxu0 0.0
    %4640 = vmatpush1.msra.mxu0 %v3461
    %4641 = vmatprep.subr.mxu0 0.0
    %4642 = vmatpush1.msra.mxu0 %v3458
    %4643 = vmatprep.subr.mxu0 0.0
    %4644 = vmatpush1.msra.mxu0 %v3455
    %4645 = vmatprep.subr.mxu0 0.0
    %4646 = vmatpush2.msra.mxu0 0.0
    %4647 = vmatprep.subr.mxu0 0.0
    %4648 = vmatpush2.msra.mxu0 0.0
    %4649 = vmatprep.subr.mxu0 0.0
    %4650 = vmatpush2.msra.mxu0 0.0
    %4651 = vmatprep.subr.mxu0 0.0
    %4652 = vmatpush2.msra.mxu0 0.0
    %4653 = vmatprep.subr.mxu0 0.0
    %4654 = vmatpush2.msra.mxu0 0.0
    %4655 = vmatprep.subr.mxu0 0.0
    %4656 = vmatpush2.msra.mxu0 0.0
    %4657 = vmatprep.subr.mxu0 0.0
    %4658 = vmatpush2.msra.mxu0 0.0
    %4659 = vmatprep.subr.mxu0 0.0
    %4660 = vmatpush2.msra.mxu0 0.0
    %4661 = vmatprep.subr.mxu0 0.0
    %4662 = vmatpush2.msra.mxu0 0.0
    %4663 = vmatprep.subr.mxu0 0.0
    %4664 = vmatpush2.msra.mxu0 0.0
    %4665 = vmatprep.subr.mxu0 0.0
    %4666 = vmatpush2.msra.mxu0 0.0
    %4667 = vmatprep.subr.mxu0 0.0
    %4668 = vmatpush2.msra.mxu0 0.0
    %4669 = vmatprep.subr.mxu0 0.0
    %4670 = vmatpush2.msra.mxu0 0.0
    %4671 = vmatprep.subr.mxu0 0.0
    %4672 = vmatpush2.msra.mxu0 0.0
    %4673 = vmatprep.subr.mxu0 0.0
    %4674 = vmatpush2.msra.mxu0 0.0
    %4675 = vmatprep.subr.mxu0 0.0
    %4676 = vmatpush2.msra.mxu0 0.0
    %4677 = vmatprep.mubr.f32.mxu0 0.0
    %4678 = vmatmul.mubr.f32.gmra.mxu0 %v4541
    %v4679 = vpop.f32.mrf.mxu0
    %v4680 = vadd.f32 %v3685, %v4679
    %v4681 = vpop.f32.mrf.mxu0
    %4682 = vdwg.mxu0
    %v4685 = vrot.slane %v4609, 6
    %v4686 = vrot.slane %v4611, 6
    %v4689 = vadd.f32 %v3594, %v4685
    %v4690 = vadd.f32 %v3596, %v4686
    %v4691 = vxor.u32 %v4689, 2147483648
    %v4692 = vxor.u32 %v4690, 2147483648
    %v4693 = vmul.f32 %v4691, 1.442695
    %v4694 = vpow.pop %v4693
    %v4695 = vmul.f32 %v4692, 1.442695
    %v4696 = vpow.pop %v4695
    %v4697 = vadd.f32 %v4694, 1.0
    %v4698 = vadd.f32 %v4696, 1.0
    %v4699 = vrcp.pop %v4697
    %v4700 = vmul.f32 1.0, %v4699
    %v4701 = vrcp.pop %v4698
    %v4702 = vmul.f32 1.0, %v4701
    %v4704 = vrot.slane %v4680, 6
    %v4706 = vmul.f32 %v4700, %v4704
    %v4707 = vadd.f32 %v3670, %v4706
    %v4708 = vtanh.pop %v4707
    %v4709 = vsub.f32 1.0, %v4702
    %v4710 = vmul.f32 %v4709, %v4708
    %v4712 = vrot.slane %v4541, 6
    %v4714 = vmul.f32 %v4702, %v4712
    %v4715 = vadd.f32 %v4710, %v4714
    %v4717 = vrot.slane %v4715, 2
    %4719 = vmatprep.subr.mxu0 %v3499
    %4720 = vmatpush1.msra.mxu0 %v3498
    %4721 = vmatprep.subr.mxu0 %v3496
    %4722 = vmatpush1.msra.mxu0 %v3495
    %4723 = vmatprep.subr.mxu0 %v3493
    %4724 = vmatpush1.msra.mxu0 %v3492
    %4725 = vmatprep.subr.mxu0 %v3490
    %4726 = vmatpush1.msra.mxu0 %v3489
    %4727 = vmatprep.subr.mxu0 %v3487
    %4728 = vmatpush1.msra.mxu0 %v3486
    %4729 = vmatprep.subr.mxu0 %v3484
    %4730 = vmatpush1.msra.mxu0 %v3483
    %4731 = vmatprep.subr.mxu0 %v3481
    %4732 = vmatpush1.msra.mxu0 %v3480
    %4733 = vmatprep.subr.mxu0 %v3478
    %4734 = vmatpush1.msra.mxu0 %v3477
    %4735 = vmatprep.subr.mxu0 %v3475
    %4736 = vmatpush1.msra.mxu0 %v3474
    %4737 = vmatprep.subr.mxu0 %v3472
    %4738 = vmatpush1.msra.mxu0 %v3471
    %4739 = vmatprep.subr.mxu0 %v3469
    %4740 = vmatpush1.msra.mxu0 %v3468
    %4741 = vmatprep.subr.mxu0 %v3466
    %4742 = vmatpush1.msra.mxu0 %v3465
    %4743 = vmatprep.subr.mxu0 %v3463
    %4744 = vmatpush1.msra.mxu0 %v3462
    %4745 = vmatprep.subr.mxu0 %v3460
    %4746 = vmatpush1.msra.mxu0 %v3459
    %4747 = vmatprep.subr.mxu0 %v3457
    %4748 = vmatpush1.msra.mxu0 %v3456
    %4749 = vmatprep.subr.mxu0 %v3454
    %4750 = vmatpush1.msra.mxu0 %v3453
    %4751 = vmatprep.subr.mxu0 0.0
    %4752 = vmatpush2.msra.mxu0 0.0
    %4753 = vmatprep.subr.mxu0 0.0
    %4754 = vmatpush2.msra.mxu0 0.0
    %4755 = vmatprep.subr.mxu0 0.0
    %4756 = vmatpush2.msra.mxu0 0.0
    %4757 = vmatprep.subr.mxu0 0.0
    %4758 = vmatpush2.msra.mxu0 0.0
    %4759 = vmatprep.subr.mxu0 0.0
    %4760 = vmatpush2.msra.mxu0 0.0
    %4761 = vmatprep.subr.mxu0 0.0
    %4762 = vmatpush2.msra.mxu0 0.0
    %4763 = vmatprep.subr.mxu0 0.0
    %4764 = vmatpush2.msra.mxu0 0.0
    %4765 = vmatprep.subr.mxu0 0.0
    %4766 = vmatpush2.msra.mxu0 0.0
    %4767 = vmatprep.subr.mxu0 0.0
    %4768 = vmatpush2.msra.mxu0 0.0
    %4769 = vmatprep.subr.mxu0 0.0
    %4770 = vmatpush2.msra.mxu0 0.0
    %4771 = vmatprep.subr.mxu0 0.0
    %4772 = vmatpush2.msra.mxu0 0.0
    %4773 = vmatprep.subr.mxu0 0.0
    %4774 = vmatpush2.msra.mxu0 0.0
    %4775 = vmatprep.subr.mxu0 0.0
    %4776 = vmatpush2.msra.mxu0 0.0
    %4777 = vmatprep.subr.mxu0 0.0
    %4778 = vmatpush2.msra.mxu0 0.0
    %4779 = vmatprep.subr.mxu0 0.0
    %4780 = vmatpush2.msra.mxu0 0.0
    %4781 = vmatprep.subr.mxu0 0.0
    %4782 = vmatpush2.msra.mxu0 0.0
    %4783 = vmatprep.mubr.f32.mxu0 0.0
    %4784 = vmatmul.mubr.f32.gmra.mxu0 %v4717
    %v4785 = vpop.f32.mrf.mxu0
    %v4786 = vadd.f32 %v3677, %v4785
    %v4787 = vpop.f32.mrf.mxu0
    %v4788 = vadd.f32 %v3681, %v4787
    %4789 = vdwg.mxu0
    %4790 = vmatprep.subr.mxu0 0.0
    %4791 = vmatpush1.msra.mxu0 %v3500
    %4792 = vmatprep.subr.mxu0 0.0
    %4793 = vmatpush1.msra.mxu0 %v3497
    %4794 = vmatprep.subr.mxu0 0.0
    %4795 = vmatpush1.msra.mxu0 %v3494
    %4796 = vmatprep.subr.mxu0 0.0
    %4797 = vmatpush1.msra.mxu0 %v3491
    %4798 = vmatprep.subr.mxu0 0.0
    %4799 = vmatpush1.msra.mxu0 %v3488
    %4800 = vmatprep.subr.mxu0 0.0
    %4801 = vmatpush1.msra.mxu0 %v3485
    %4802 = vmatprep.subr.mxu0 0.0
    %4803 = vmatpush1.msra.mxu0 %v3482
    %4804 = vmatprep.subr.mxu0 0.0
    %4805 = vmatpush1.msra.mxu0 %v3479
    %4806 = vmatprep.subr.mxu0 0.0
    %4807 = vmatpush1.msra.mxu0 %v3476
    %4808 = vmatprep.subr.mxu0 0.0
    %4809 = vmatpush1.msra.mxu0 %v3473
    %4810 = vmatprep.subr.mxu0 0.0
    %4811 = vmatpush1.msra.mxu0 %v3470
    %4812 = vmatprep.subr.mxu0 0.0
    %4813 = vmatpush1.msra.mxu0 %v3467
    %4814 = vmatprep.subr.mxu0 0.0
    %4815 = vmatpush1.msra.mxu0 %v3464
    %4816 = vmatprep.subr.mxu0 0.0
    %4817 = vmatpush1.msra.mxu0 %v3461
    %4818 = vmatprep.subr.mxu0 0.0
    %4819 = vmatpush1.msra.mxu0 %v3458
    %4820 = vmatprep.subr.mxu0 0.0
    %4821 = vmatpush1.msra.mxu0 %v3455
    %4822 = vmatprep.subr.mxu0 0.0
    %4823 = vmatpush2.msra.mxu0 0.0
    %4824 = vmatprep.subr.mxu0 0.0
    %4825 = vmatpush2.msra.mxu0 0.0
    %4826 = vmatprep.subr.mxu0 0.0
    %4827 = vmatpush2.msra.mxu0 0.0
    %4828 = vmatprep.subr.mxu0 0.0
    %4829 = vmatpush2.msra.mxu0 0.0
    %4830 = vmatprep.subr.mxu0 0.0
    %4831 = vmatpush2.msra.mxu0 0.0
    %4832 = vmatprep.subr.mxu0 0.0
    %4833 = vmatpush2.msra.mxu0 0.0
    %4834 = vmatprep.subr.mxu0 0.0
    %4835 = vmatpush2.msra.mxu0 0.0
    %4836 = vmatprep.subr.mxu0 0.0
    %4837 = vmatpush2.msra.mxu0 0.0
    %4838 = vmatprep.subr.mxu0 0.0
    %4839 = vmatpush2.msra.mxu0 0.0
    %4840 = vmatprep.subr.mxu0 0.0
    %4841 = vmatpush2.msra.mxu0 0.0
    %4842 = vmatprep.subr.mxu0 0.0
    %4843 = vmatpush2.msra.mxu0 0.0
    %4844 = vmatprep.subr.mxu0 0.0
    %4845 = vmatpush2.msra.mxu0 0.0
    %4846 = vmatprep.subr.mxu0 0.0
    %4847 = vmatpush2.msra.mxu0 0.0
    %4848 = vmatprep.subr.mxu0 0.0
    %4849 = vmatpush2.msra.mxu0 0.0
    %4850 = vmatprep.subr.mxu0 0.0
    %4851 = vmatpush2.msra.mxu0 0.0
    %4852 = vmatprep.subr.mxu0 0.0
    %4853 = vmatpush2.msra.mxu0 0.0
    %4854 = vmatprep.mubr.f32.mxu0 0.0
    %4855 = vmatmul.mubr.f32.gmra.mxu0 %v4717
    %v4856 = vpop.f32.mrf.mxu0
    %v4857 = vadd.f32 %v3685, %v4856
    %v4858 = vpop.f32.mrf.mxu0
    %4859 = vdwg.mxu0
    %v4862 = vrot.slane %v4786, 4
    %v4863 = vrot.slane %v4788, 4
    %v4866 = vadd.f32 %v3594, %v4862
    %v4867 = vadd.f32 %v3596, %v4863
    %v4868 = vxor.u32 %v4866, 2147483648
    %v4869 = vxor.u32 %v4867, 2147483648
    %v4870 = vmul.f32 %v4868, 1.442695
    %v4871 = vpow.pop %v4870
    %v4872 = vmul.f32 %v4869, 1.442695
    %v4873 = vpow.pop %v4872
    %v4874 = vadd.f32 %v4871, 1.0
    %v4875 = vadd.f32 %v4873, 1.0
    %v4876 = vrcp.pop %v4874
    %v4877 = vmul.f32 1.0, %v4876
    %v4878 = vrcp.pop %v4875
    %v4879 = vmul.f32 1.0, %v4878
    %v4881 = vrot.slane %v4857, 4
    %v4883 = vmul.f32 %v4877, %v4881
    %v4884 = vadd.f32 %v3670, %v4883
    %v4885 = vtanh.pop %v4884
    %v4886 = vsub.f32 1.0, %v4879
    %v4887 = vmul.f32 %v4886, %v4885
    %v4888 = vrot.slane %v4715, 6
    %v4890 = vmul.f32 %v4879, %v4888
    %v4891 = vadd.f32 %v4887, %v4890
    %v4893 = vrot.slane %v4891, 4
    %4895 = vmatprep.subr.mxu0 %v3499
    %4896 = vmatpush1.msra.mxu0 %v3498
    %4897 = vmatprep.subr.mxu0 %v3496
    %4898 = vmatpush1.msra.mxu0 %v3495
    %4899 = vmatprep.subr.mxu0 %v3493
    %4900 = vmatpush1.msra.mxu0 %v3492
    %4901 = vmatprep.subr.mxu0 %v3490
    %4902 = vmatpush1.msra.mxu0 %v3489
    %4903 = vmatprep.subr.mxu0 %v3487
    %4904 = vmatpush1.msra.mxu0 %v3486
    %4905 = vmatprep.subr.mxu0 %v3484
    %4906 = vmatpush1.msra.mxu0 %v3483
    %4907 = vmatprep.subr.mxu0 %v3481
    %4908 = vmatpush1.msra.mxu0 %v3480
    %4909 = vmatprep.subr.mxu0 %v3478
    %4910 = vmatpush1.msra.mxu0 %v3477
    %4911 = vmatprep.subr.mxu0 %v3475
    %4912 = vmatpush1.msra.mxu0 %v3474
    %4913 = vmatprep.subr.mxu0 %v3472
    %4914 = vmatpush1.msra.mxu0 %v3471
    %4915 = vmatprep.subr.mxu0 %v3469
    %4916 = vmatpush1.msra.mxu0 %v3468
    %4917 = vmatprep.subr.mxu0 %v3466
    %4918 = vmatpush1.msra.mxu0 %v3465
    %4919 = vmatprep.subr.mxu0 %v3463
    %4920 = vmatpush1.msra.mxu0 %v3462
    %4921 = vmatprep.subr.mxu0 %v3460
    %4922 = vmatpush1.msra.mxu0 %v3459
    %4923 = vmatprep.subr.mxu0 %v3457
    %4924 = vmatpush1.msra.mxu0 %v3456
    %4925 = vmatprep.subr.mxu0 %v3454
    %4926 = vmatpush1.msra.mxu0 %v3453
    %4927 = vmatprep.subr.mxu0 0.0
    %4928 = vmatpush2.msra.mxu0 0.0
    %4929 = vmatprep.subr.mxu0 0.0
    %4930 = vmatpush2.msra.mxu0 0.0
    %4931 = vmatprep.subr.mxu0 0.0
    %4932 = vmatpush2.msra.mxu0 0.0
    %4933 = vmatprep.subr.mxu0 0.0
    %4934 = vmatpush2.msra.mxu0 0.0
    %4935 = vmatprep.subr.mxu0 0.0
    %4936 = vmatpush2.msra.mxu0 0.0
    %4937 = vmatprep.subr.mxu0 0.0
    %4938 = vmatpush2.msra.mxu0 0.0
    %4939 = vmatprep.subr.mxu0 0.0
    %4940 = vmatpush2.msra.mxu0 0.0
    %4941 = vmatprep.subr.mxu0 0.0
    %4942 = vmatpush2.msra.mxu0 0.0
    %4943 = vmatprep.subr.mxu0 0.0
    %4944 = vmatpush2.msra.mxu0 0.0
    %4945 = vmatprep.subr.mxu0 0.0
    %4946 = vmatpush2.msra.mxu0 0.0
    %4947 = vmatprep.subr.mxu0 0.0
    %4948 = vmatpush2.msra.mxu0 0.0
    %4949 = vmatprep.subr.mxu0 0.0
    %4950 = vmatpush2.msra.mxu0 0.0
    %4951 = vmatprep.subr.mxu0 0.0
    %4952 = vmatpush2.msra.mxu0 0.0
    %4953 = vmatprep.subr.mxu0 0.0
    %4954 = vmatpush2.msra.mxu0 0.0
    %4955 = vmatprep.subr.mxu0 0.0
    %4956 = vmatpush2.msra.mxu0 0.0
    %4957 = vmatprep.subr.mxu0 0.0
    %4958 = vmatpush2.msra.mxu0 0.0
    %4959 = vmatprep.mubr.f32.mxu0 0.0
    %4960 = vmatmul.mubr.f32.gmra.mxu0 %v4893
    %v4961 = vpop.f32.mrf.mxu0
    %v4962 = vadd.f32 %v3677, %v4961
    %v4963 = vpop.f32.mrf.mxu0
    %v4964 = vadd.f32 %v3681, %v4963
    %4965 = vdwg.mxu0
    %4966 = vmatprep.subr.mxu0 0.0
    %4967 = vmatpush1.msra.mxu0 %v3500
    %4968 = vmatprep.subr.mxu0 0.0
    %4969 = vmatpush1.msra.mxu0 %v3497
    %4970 = vmatprep.subr.mxu0 0.0
    %4971 = vmatpush1.msra.mxu0 %v3494
    %4972 = vmatprep.subr.mxu0 0.0
    %4973 = vmatpush1.msra.mxu0 %v3491
    %4974 = vmatprep.subr.mxu0 0.0
    %4975 = vmatpush1.msra.mxu0 %v3488
    %4976 = vmatprep.subr.mxu0 0.0
    %4977 = vmatpush1.msra.mxu0 %v3485
    %4978 = vmatprep.subr.mxu0 0.0
    %4979 = vmatpush1.msra.mxu0 %v3482
    %4980 = vmatprep.subr.mxu0 0.0
    %4981 = vmatpush1.msra.mxu0 %v3479
    %4982 = vmatprep.subr.mxu0 0.0
    %4983 = vmatpush1.msra.mxu0 %v3476
    %4984 = vmatprep.subr.mxu0 0.0
    %4985 = vmatpush1.msra.mxu0 %v3473
    %4986 = vmatprep.subr.mxu0 0.0
    %4987 = vmatpush1.msra.mxu0 %v3470
    %4988 = vmatprep.subr.mxu0 0.0
    %4989 = vmatpush1.msra.mxu0 %v3467
    %4990 = vmatprep.subr.mxu0 0.0
    %4991 = vmatpush1.msra.mxu0 %v3464
    %4992 = vmatprep.subr.mxu0 0.0
    %4993 = vmatpush1.msra.mxu0 %v3461
    %4994 = vmatprep.subr.mxu0 0.0
    %4995 = vmatpush1.msra.mxu0 %v3458
    %4996 = vmatprep.subr.mxu0 0.0
    %4997 = vmatpush1.msra.mxu0 %v3455
    %4998 = vmatprep.subr.mxu0 0.0
    %4999 = vmatpush2.msra.mxu0 0.0
    %5000 = vmatprep.subr.mxu0 0.0
    %5001 = vmatpush2.msra.mxu0 0.0
    %5002 = vmatprep.subr.mxu0 0.0
    %5003 = vmatpush2.msra.mxu0 0.0
    %5004 = vmatprep.subr.mxu0 0.0
    %5005 = vmatpush2.msra.mxu0 0.0
    %5006 = vmatprep.subr.mxu0 0.0
    %5007 = vmatpush2.msra.mxu0 0.0
    %5008 = vmatprep.subr.mxu0 0.0
    %5009 = vmatpush2.msra.mxu0 0.0
    %5010 = vmatprep.subr.mxu0 0.0
    %5011 = vmatpush2.msra.mxu0 0.0
    %5012 = vmatprep.subr.mxu0 0.0
    %5013 = vmatpush2.msra.mxu0 0.0
    %5014 = vmatprep.subr.mxu0 0.0
    %5015 = vmatpush2.msra.mxu0 0.0
    %5016 = vmatprep.subr.mxu0 0.0
    %5017 = vmatpush2.msra.mxu0 0.0
    %5018 = vmatprep.subr.mxu0 0.0
    %5019 = vmatpush2.msra.mxu0 0.0
    %5020 = vmatprep.subr.mxu0 0.0
    %5021 = vmatpush2.msra.mxu0 0.0
    %5022 = vmatprep.subr.mxu0 0.0
    %5023 = vmatpush2.msra.mxu0 0.0
    %5024 = vmatprep.subr.mxu0 0.0
    %5025 = vmatpush2.msra.mxu0 0.0
    %5026 = vmatprep.subr.mxu0 0.0
    %5027 = vmatpush2.msra.mxu0 0.0
    %5028 = vmatprep.subr.mxu0 0.0
    %5029 = vmatpush2.msra.mxu0 0.0
    %5030 = vmatprep.mubr.f32.mxu0 0.0
    %5031 = vmatmul.mubr.f32.gmra.mxu0 %v4893
    %v5032 = vpop.f32.mrf.mxu0
    %v5033 = vadd.f32 %v3685, %v5032
    %v5034 = vpop.f32.mrf.mxu0
    %5035 = vdwg.mxu0
    %v5038 = vrot.slane %v4962, 2
    %v5039 = vrot.slane %v4964, 2
    %v5042 = vadd.f32 %v3594, %v5038
    %v5043 = vadd.f32 %v3596, %v5039
    %v5044 = vxor.u32 %v5042, 2147483648
    %v5045 = vxor.u32 %v5043, 2147483648
    %v5046 = vmul.f32 %v5044, 1.442695
    %v5047 = vpow.pop %v5046
    %v5048 = vmul.f32 %v5045, 1.442695
    %v5049 = vpow.pop %v5048
    %v5050 = vadd.f32 %v5047, 1.0
    %v5051 = vadd.f32 %v5049, 1.0
    %v5052 = vrcp.pop %v5050
    %v5053 = vmul.f32 1.0, %v5052
    %v5054 = vrcp.pop %v5051
    %v5055 = vmul.f32 1.0, %v5054
    %v5057 = vrot.slane %v5033, 2
    %v5059 = vmul.f32 %v5053, %v5057
    %v5060 = vadd.f32 %v3670, %v5059
    %v5061 = vtanh.pop %v5060
    %v5062 = vsub.f32 1.0, %v5055
    %v5063 = vmul.f32 %v5062, %v5061
    %v5064 = vrot.slane %v4891, 6
    %v5066 = vmul.f32 %v5055, %v5064
    %v5067 = vadd.f32 %v5063, %v5066
    %v5068 = vsel %vm1723, %v3850, %v4024
    %v5069 = vsel %vm1725, %v5068, %v4200
    %v5070 = vsel %vm1727, %v5069, %v4376
    %v5071 = vsel %vm1723, %v4541, %v4715
    %v5072 = vsel %vm1725, %v5071, %v4891
    %v5073 = vsel %vm1727, %v5072, %v5067
    %v5074 = vld [vmem:[#allocation6] sm:$0xff]
    %v5075 = vld [vmem:[#allocation6 + $0x8] sm:$0xff]
    %v5076 = vld [vmem:[#allocation6 + $0x10] sm:$0xff]
    %v5077 = vld [vmem:[#allocation6 + $0x18] sm:$0xff]
    %v5078 = vld [vmem:[#allocation6 + $0x20] sm:$0xff]
    %v5079 = vld [vmem:[#allocation6 + $0x28] sm:$0xff]
    %v5080 = vld [vmem:[#allocation6 + $0x30] sm:$0xff]
    %v5081 = vld [vmem:[#allocation6 + $0x38] sm:$0xff]
    %v5082 = vld [vmem:[#allocation6 + $0x40] sm:$0xff]
    %v5083 = vld [vmem:[#allocation6 + $0x48] sm:$0xff]
    %v5084 = vld [vmem:[#allocation6 + $0x50] sm:$0xff]
    %v5085 = vld [vmem:[#allocation6 + $0x58] sm:$0xff]
    %v5086 = vld [vmem:[#allocation6 + $0x60] sm:$0xff]
    %v5087 = vld [vmem:[#allocation6 + $0x68] sm:$0xff]
    %v5088 = vld [vmem:[#allocation6 + $0x70] sm:$0xff]
    %v5089 = vld [vmem:[#allocation6 + $0x78] sm:$0xff]
    %v5090 = vld [vmem:[#allocation6 + $0x80] sm:$0x1]
    %v5091 = vlaneseq
    %v5092 = vshrl.u32 %v5091, 7
    %v5093 = vsub.s32 0, %v5092
    %v5094 = vrot.slane %v5090, %v5093
    %5095 = vmatprep.subr.mxu0 0.0
    %5096 = vmatpush1.msra.mxu0 %v5089
    %5097 = vmatprep.subr.mxu0 0.0
    %5098 = vmatpush1.msra.mxu0 %v5088
    %5099 = vmatprep.subr.mxu0 0.0
    %5100 = vmatpush1.msra.mxu0 %v5087
    %5101 = vmatprep.subr.mxu0 0.0
    %5102 = vmatpush1.msra.mxu0 %v5086
    %5103 = vmatprep.subr.mxu0 0.0
    %5104 = vmatpush1.msra.mxu0 %v5085
    %5105 = vmatprep.subr.mxu0 0.0
    %5106 = vmatpush1.msra.mxu0 %v5084
    %5107 = vmatprep.subr.mxu0 0.0
    %5108 = vmatpush1.msra.mxu0 %v5083
    %5109 = vmatprep.subr.mxu0 0.0
    %5110 = vmatpush1.msra.mxu0 %v5082
    %5111 = vmatprep.subr.mxu0 0.0
    %5112 = vmatpush1.msra.mxu0 %v5081
    %5113 = vmatprep.subr.mxu0 0.0
    %5114 = vmatpush1.msra.mxu0 %v5080
    %5115 = vmatprep.subr.mxu0 0.0
    %5116 = vmatpush1.msra.mxu0 %v5079
    %5117 = vmatprep.subr.mxu0 0.0
    %5118 = vmatpush1.msra.mxu0 %v5078
    %5119 = vmatprep.subr.mxu0 0.0
    %5120 = vmatpush1.msra.mxu0 %v5077
    %5121 = vmatprep.subr.mxu0 0.0
    %5122 = vmatpush1.msra.mxu0 %v5076
    %5123 = vmatprep.subr.mxu0 0.0
    %5124 = vmatpush1.msra.mxu0 %v5075
    %5125 = vmatprep.subr.mxu0 0.0
    %5126 = vmatpush1.msra.mxu0 %v5074
    %5127 = vmatprep.subr.mxu0 0.0
    %5128 = vmatpush2.msra.mxu0 0.0
    %5129 = vmatprep.subr.mxu0 0.0
    %5130 = vmatpush2.msra.mxu0 0.0
    %5131 = vmatprep.subr.mxu0 0.0
    %5132 = vmatpush2.msra.mxu0 0.0
    %5133 = vmatprep.subr.mxu0 0.0
    %5134 = vmatpush2.msra.mxu0 0.0
    %5135 = vmatprep.subr.mxu0 0.0
    %5136 = vmatpush2.msra.mxu0 0.0
    %5137 = vmatprep.subr.mxu0 0.0
    %5138 = vmatpush2.msra.mxu0 0.0
    %5139 = vmatprep.subr.mxu0 0.0
    %5140 = vmatpush2.msra.mxu0 0.0
    %5141 = vmatprep.subr.mxu0 0.0
    %5142 = vmatpush2.msra.mxu0 0.0
    %5143 = vmatprep.subr.mxu0 0.0
    %5144 = vmatpush2.msra.mxu0 0.0
    %5145 = vmatprep.subr.mxu0 0.0
    %5146 = vmatpush2.msra.mxu0 0.0
    %5147 = vmatprep.subr.mxu0 0.0
    %5148 = vmatpush2.msra.mxu0 0.0
    %5149 = vmatprep.subr.mxu0 0.0
    %5150 = vmatpush2.msra.mxu0 0.0
    %5151 = vmatprep.subr.mxu0 0.0
    %5152 = vmatpush2.msra.mxu0 0.0
    %5153 = vmatprep.subr.mxu0 0.0
    %5154 = vmatpush2.msra.mxu0 0.0
    %5155 = vmatprep.subr.mxu0 0.0
    %5156 = vmatpush2.msra.mxu0 0.0
    %5157 = vmatprep.subr.mxu0 0.0
    %5158 = vmatpush2.msra.mxu0 0.0
    %5159 = vmatprep.mubr.f32.mxu0 0.0
    %5160 = vmatmul.mubr.f32.gmra.mxu0 %v5070
    %v5161 = vpop.f32.mrf.mxu0
    %v5162 = vadd.f32 %v5094, %v5161
    %v5163 = vpop.f32.mrf.mxu0
    %5164 = vmatprep.mubr.f32.mxu0 0.0
    %5165 = vmatmul.mubr.f32.gmra.mxu0 %v5073
    %v5166 = vpop.f32.mrf.mxu0
    %v5167 = vadd.f32 %v5094, %v5166
    %v5168 = vpop.f32.mrf.mxu0
    %5169 = vdwg.mxu0
    %5170 = vst [vmem:[%s4] sm:$0xff] %v5162
    %5171 = vst [vmem:[%s4 + $0x8] sm:$0xff] %v5167
    // Predicated region
    $region30: #{gru_model_forward.1} parent=1 // pred_check
      _
    $region31: #{gru_model_forward.1} parent=1 // pred_check_branch
      %5173 = sbr.rel (0) target = $region33
    $region32: #{gru_model_forward.1} parent=1 // pred_region
      _
    $region33: #{gru_model_forward.1} parent=1 // pred_fallthru
      _
    // Predicated region
    $region34: #{gru_model_forward.1} parent=1 // pred_check
      _
    $region35: #{gru_model_forward.1} parent=1 // pred_check_branch
      %5175 = sbr.rel (0) target = $region37
    $region36: #{gru_model_forward.1} parent=1 // pred_region
      _
    $region37: #{gru_model_forward.1} parent=1 // pred_fallthru
      _
    %5176 = vsyncpa [#allocation3], 1
    %5177 = vsyncpa [#allocation5], 1

</llo_original>
